<compile_context>
chip_gen: v5e
topology: v5e:2x2
jax: 0.10.0
libtpu: 0.0.40
codegen_flags: <defaults>
</compile_context>

<pallas_src>
import functools

import jax
import jax.numpy as jnp
from jax import lax
from jax.experimental import pallas as pl
from jax.experimental.pallas import tpu as pltpu


# ----------------------------- Pallas kernels ------------------------------

def _stem12_kernel(p00_ref, p01_ref, p10_ref, p11_ref,
                   w1_ref, b1_ref, w2a_ref, b2a_ref, w2b_ref, b2b_ref,
                   o_ref, y1p_ref, x2p_ref, *, H1, W1):
    """stem1 + pad + stem2a + pad + stem2b + maxpool + concat (+ stem3's pad=1 border)."""
    C1 = p00_ref.shape[-1]
    Cm = w1_ref.shape[-1]
    Cm2 = w2a_ref.shape[-1]
    phases = ((p00_ref[0], p01_ref[0]), (p10_ref[0], p11_ref[0]))   # each (H1+1, W1+1, C1)

    # --- stem1: 3x3 stride-2 conv (+folded BN) + ReLU -> (H1*W1, Cm) ---
    w1 = w1_ref[...]
    acc = jnp.zeros((H1 * W1, Cm), jnp.float32)
    for ky in range(3):
        pr, dy = ky % 2, ky // 2
        for kx in range(3):
            pc, dx = kx % 2, kx // 2
            patch = phases[pr][pc][dy:dy + H1, dx:dx + W1, :].reshape(H1 * W1, C1)
            acc = acc + jnp.dot(patch, w1[ky, kx], preferred_element_type=jnp.float32)
    y1 = jnp.maximum(acc + b1_ref[...], 0.0)

    # --- F.pad([0,1,0,1]) into VMEM scratch (zero border right/bottom) ---
    y1p_ref[...] = jnp.zeros_like(y1p_ref)
    y1p_ref[0:H1, 0:W1, :] = y1.reshape(H1, W1, Cm)
    y1p = y1p_ref[...]                                              # (H1+1, W1+1, Cm)

    # --- stem2a: 2x2 conv (stride 1, pad 0) + ReLU -> (H1*W1, Cm2) ---
    w2a = w2a_ref[...]
    acc = jnp.zeros((H1 * W1, Cm2), jnp.float32)
    for ky in range(2):
        for kx in range(2):
            patch = y1p[ky:ky + H1, kx:kx + W1, :].reshape(H1 * W1, Cm)
            acc = acc + jnp.dot(patch, w2a[ky, kx], preferred_element_type=jnp.float32)
    x2 = jnp.maximum(acc + b2a_ref[...], 0.0)

    # --- F.pad([0,1,0,1]) into VMEM scratch, then stem2b: 2x2 conv + ReLU ---
    x2p_ref[...] = jnp.zeros_like(x2p_ref)
    x2p_ref[0:H1, 0:W1, :] = x2.reshape(H1, W1, Cm2)
    x2p = x2p_ref[...]
    w2b = w2b_ref[...]
    acc = jnp.zeros((H1 * W1, Cm), jnp.float32)
    for ky in range(2):
        for kx in range(2):
            patch = x2p[ky:ky + H1, kx:kx + W1, :].reshape(H1 * W1, Cm2)
            acc = acc + jnp.dot(patch, w2b[ky, kx], preferred_element_type=jnp.float32)
    x2b = jnp.maximum(acc + b2b_ref[...], 0.0).reshape(H1, W1, Cm)

    # --- maxpool 2x2, stride 1, ceil_mode (input already right/bottom zero-padded) ---
    x1 = jnp.maximum(jnp.maximum(y1p[0:H1, 0:W1, :], y1p[0:H1, 1:W1 + 1, :]),
                     jnp.maximum(y1p[1:H1 + 1, 0:W1, :], y1p[1:H1 + 1, 1:W1 + 1, :]))

    # --- concat [pool, stem2b] on channels; stem3's pad=1 zero border fused into the write ---
    o_ref[...] = jnp.zeros_like(o_ref)
    o_ref[0, 1:H1 + 1, 1:W1 + 1, 0:Cm] = x1.astype(o_ref.dtype)
    o_ref[0, 1:H1 + 1, 1:W1 + 1, Cm:2 * Cm] = x2b.astype(o_ref.dtype)


def _stem34_kernel(p00_ref, p01_ref, p10_ref, p11_ref, w3_ref, b3_ref,
                   w4_ref, b4_ref, o_ref, *, H2, W2):
    """stem3 (3x3 stride-2) + ReLU, fused with stem4 (1x1) + ReLU epilogue."""
    Cc = p00_ref.shape[-1]                                          # 2*cm
    Cm = w3_ref.shape[-1]
    C2 = w4_ref.shape[-1]
    phases = ((p00_ref[0], p01_ref[0]), (p10_ref[0], p11_ref[0]))   # each (H2+1, W2+1, Cc)
    w3 = w3_ref[...]

    acc = jnp.zeros((H2 * W2, Cm), jnp.float32)
    for ky in range(3):
        pr, dy = ky % 2, ky // 2
        for kx in range(3):
            pc, dx = kx % 2, kx // 2
            patch = phases[pr][pc][dy:dy + H2, dx:dx + W2, :].reshape(H2 * W2, Cc)
            acc = acc + jnp.dot(patch, w3[ky, kx], preferred_element_type=jnp.float32)
    y3 = jnp.maximum(acc + b3_ref[...], 0.0)

    y4 = jnp.dot(y3, w4_ref[...], preferred_element_type=jnp.float32) + b4_ref[...]
    y4 = jnp.maximum(y4, 0.0)
    o_ref[...] = y4.reshape(1, H2, W2, C2).astype(o_ref.dtype)


# ------------------------------ wrappers ------------------------------------

def _phase_split(xpad):
    """Space-to-depth of a padded NHWC tensor: plane[pr][pc][a,b] = xpad[2a+pr, 2b+pc]."""
    return (xpad[:, 0::2, 0::2, :], xpad[:, 0::2, 1::2, :],
            xpad[:, 1::2, 0::2, :], xpad[:, 1::2, 1::2, :])


def _stem12_call(phases, w1, b1, w2a, b2a, w2b, b2b, H1, W1):
    N, C1 = phases[0].shape[0], phases[0].shape[-1]
    Cm, Cm2 = w1.shape[-1], w2a.shape[-1]
    plane_spec = pl.BlockSpec((1, H1 + 1, W1 + 1, C1), lambda n: (n, 0, 0, 0))
    return pl.pallas_call(
        functools.partial(_stem12_kernel, H1=H1, W1=W1),
        out_shape=jax.ShapeDtypeStruct((N, H1 + 2, W1 + 2, 2 * Cm), phases[0].dtype),
        grid=(N,),
        in_specs=[plane_spec, plane_spec, plane_spec, plane_spec,
                  pl.BlockSpec((3, 3, C1, Cm), lambda n: (0, 0, 0, 0)),
                  pl.BlockSpec((1, Cm), lambda n: (0, 0)),
                  pl.BlockSpec((2, 2, Cm, Cm2), lambda n: (0, 0, 0, 0)),
                  pl.BlockSpec((1, Cm2), lambda n: (0, 0)),
                  pl.BlockSpec((2, 2, Cm2, Cm), lambda n: (0, 0, 0, 0)),
                  pl.BlockSpec((1, Cm), lambda n: (0, 0))],
        out_specs=pl.BlockSpec((1, H1 + 2, W1 + 2, 2 * Cm), lambda n: (n, 0, 0, 0)),
        scratch_shapes=[pltpu.VMEM((H1 + 1, W1 + 1, Cm), jnp.float32),
                        pltpu.VMEM((H1 + 1, W1 + 1, Cm2), jnp.float32)],
        compiler_params=pltpu.CompilerParams(dimension_semantics=("parallel",)),
    )(*phases, w1, b1, w2a, b2a, w2b, b2b)


def _stem34_call(phases, w3, b3, w4, b4, H2, W2):
    N, Cc = phases[0].shape[0], phases[0].shape[-1]
    Cm, C2 = w3.shape[-1], w4.shape[-1]
    plane_spec = pl.BlockSpec((1, H2 + 1, W2 + 1, Cc), lambda n: (n, 0, 0, 0))
    return pl.pallas_call(
        functools.partial(_stem34_kernel, H2=H2, W2=W2),
        out_shape=jax.ShapeDtypeStruct((N, H2, W2, C2), phases[0].dtype),
        grid=(N,),
        in_specs=[plane_spec, plane_spec, plane_spec, plane_spec,
                  pl.BlockSpec((3, 3, Cc, Cm), lambda n: (0, 0, 0, 0)),
                  pl.BlockSpec((1, Cm), lambda n: (0, 0)),
                  pl.BlockSpec((Cm, C2), lambda n: (0, 0)),
                  pl.BlockSpec((1, C2), lambda n: (0, 0))],
        out_specs=pl.BlockSpec((1, H2, W2, C2), lambda n: (n, 0, 0, 0)),
        compiler_params=pltpu.CompilerParams(dimension_semantics=("parallel",)),
    )(*phases, w3, b3, w4, b4)


# ------------------------------- forward -------------------------------------

def hgstem_forward(x, p):
    """x: (N, H, W, c1) NHWC with H, W multiples of 4 -> (N, H//4, W//4, c2)."""
    N, H, W, _ = x.shape
    assert H % 4 == 0 and W % 4 == 0, "demo wrapper assumes H, W multiples of 4"
    H1, W1 = H // 2, W // 2
    H2, W2 = H1 // 2, W1 // 2

    # Kernel A: stem1 + pad + stem2a + pad + stem2b + pool + concat (+ pad for stem3).
    xp = jnp.pad(x, ((0, 0), (1, 1), (1, 1), (0, 0)))               # stem1 pad=1 (wrapper-side)
    catp = _stem12_call(_phase_split(xp), p["w1"], p["b1"], p["w2a"], p["b2a"],
                        p["w2b"], p["b2b"], H1, W1)                 # (N, H1+2, W1+2, 2*cm)

    # Kernel B: stem3 (stride 2) + stem4 (1x1), fused.
    return _stem34_call(_phase_split(catp), p["w3"], p["b3"], p["w4"], p["b4"], H2, W2)


# --------------------------- parameter creation ------------------------------

def _conv_bn(key, wshape, cout, eps=1e-3):
    """Synthetic conv weight + BN stats, BN folded into (weight, bias)."""
    kw, kg, kb, km, kv = jax.random.split(key, 5)
    w = 0.3 * jax.random.normal(kw, wshape)
    gamma = jax.random.uniform(kg, (cout,), minval=0.5, maxval=1.5)
    beta = 0.1 * jax.random.normal(kb, (cout,))
    mean = 0.1 * jax.random.normal(km, (cout,))
    var = jax.random.uniform(kv, (cout,), minval=0.5, maxval=1.5)
    s = gamma / jnp.sqrt(var + eps)
    return (w * s).astype(jnp.float32), (beta - mean * s).reshape(1, cout).astype(jnp.float32)


def init_hgstem_params(key, c1, cm, c2):
    k1, k2a, k2b, k3, k4 = jax.random.split(key, 5)
    p = {}
    p["w1"],  p["b1"]  = _conv_bn(k1,  (3, 3, c1, cm), cm)            # stem1: 3x3 s2 p1
    p["w2a"], p["b2a"] = _conv_bn(k2a, (2, 2, cm, cm // 2), cm // 2)  # stem2a: 2x2 s1 p0
    p["w2b"], p["b2b"] = _conv_bn(k2b, (2, 2, cm // 2, cm), cm)       # stem2b: 2x2 s1 p0
    p["w3"],  p["b3"]  = _conv_bn(k3,  (3, 3, 2 * cm, cm), cm)        # stem3: 3x3 s2 p1
    p["w4"],  p["b4"]  = _conv_bn(k4,  (cm, c2), c2)                  # stem4: 1x1 s1 p0
    return p


# ------------------------------ reference ------------------------------------

def _conv_bn_relu_ref(x, w_hwio, b, stride, padding):
    y = lax.conv_general_dilated(x, w_hwio, (stride, stride), padding,
                                 dimension_numbers=("NHWC", "HWIO", "NHWC"))
    return jnp.maximum(y + b.reshape(1, 1, 1, -1), 0.0)


def hgstem_reference(x, p):
    y = _conv_bn_relu_ref(x, p["w1"], p["b1"], 2, [(1, 1), (1, 1)])
    y = jnp.pad(y, ((0, 0), (0, 1), (0, 1), (0, 0)))                # F.pad([0,1,0,1])
    x2 = _conv_bn_relu_ref(y, p["w2a"], p["b2a"], 1, "VALID")
    x2 = jnp.pad(x2, ((0, 0), (0, 1), (0, 1), (0, 0)))
    x2 = _conv_bn_relu_ref(x2, p["w2b"], p["b2b"], 1, "VALID")
    x1 = lax.reduce_window(y, -jnp.inf, lax.max, (1, 2, 2, 1), (1, 1, 1, 1), "VALID")
    cat = jnp.concatenate([x1, x2], axis=-1)
    y = _conv_bn_relu_ref(cat, p["w3"], p["b3"], 2, [(1, 1), (1, 1)])
    w4 = p["w4"].reshape(1, 1, *p["w4"].shape)
    return _conv_bn_relu_ref(y, w4, p["b4"], 1, "VALID")


# -------------------------------- main ---------------------------------------

if __name__ == "__main__":
    key = jax.random.PRNGKey(0)
    k_x, k_p = jax.random.split(key)

    N, c1, cm, c2, H, W = 2, 3, 8, 16, 16, 16
    x_nchw = jax.random.normal(k_x, (N, c1, H, W), dtype=jnp.float32)   # PyTorch-style NCHW input
    x = jnp.transpose(x_nchw, (0, 2, 3, 1))                             # -> NHWC (channels on lanes)

    params = init_hgstem_params(k_p, c1, cm, c2)

    out = jax.jit(hgstem_forward)(x, params)
    out = jax.block_until_ready(out)

    ref = hgstem_reference(x, params)
    assert out.shape == (N, H // 4, W // 4, c2) and out.dtype == jnp.float32
    assert jnp.allclose(out, ref, rtol=1e-4, atol=1e-4), "Pallas output mismatch vs reference"

    print("KERNEL_OK")
</pallas_src>

<mosaic_0001>
module attributes {stable_mosaic.version = 11 : i64} {
  func.func @_stem34_kernel(%arg0: i32, %arg1: memref<1x5x5x16xf32, #tpu.memory_space<vmem>>, %arg2: memref<1x5x5x16xf32, #tpu.memory_space<vmem>>, %arg3: memref<1x5x5x16xf32, #tpu.memory_space<vmem>>, %arg4: memref<1x5x5x16xf32, #tpu.memory_space<vmem>>, %arg5: memref<3x3x16x8xf32, #tpu.memory_space<vmem>>, %arg6: memref<1x8xf32, #tpu.memory_space<vmem>>, %arg7: memref<8x16xf32, #tpu.memory_space<vmem>>, %arg8: memref<1x16xf32, #tpu.memory_space<vmem>>, %arg9: memref<1x4x4x16xf32, #tpu.memory_space<vmem>>) attributes {dimension_semantics = [#tpu.dimension_semantics<parallel>], iteration_bounds = array<i64: 2>, scalar_prefetch = 0 : i64, scratch_operands = 0 : i64, tpu.core_type = #tpu.core_type<tc>, window_params = [{transform_indices = @transform_0, window_bounds = array<i64: 1, 5, 5, 16>}, {transform_indices = @transform_1, window_bounds = array<i64: 1, 5, 5, 16>}, {transform_indices = @transform_2, window_bounds = array<i64: 1, 5, 5, 16>}, {transform_indices = @transform_3, window_bounds = array<i64: 1, 5, 5, 16>}, {pipeline_mode = #tpu.pipeline_mode<synchronous>, transform_indices = @transform_4, window_bounds = array<i64: 3, 3, 16, 8>}, {pipeline_mode = #tpu.pipeline_mode<synchronous>, transform_indices = @transform_5, window_bounds = array<i64: 1, 8>}, {pipeline_mode = #tpu.pipeline_mode<synchronous>, transform_indices = @transform_6, window_bounds = array<i64: 8, 16>}, {pipeline_mode = #tpu.pipeline_mode<synchronous>, transform_indices = @transform_7, window_bounds = array<i64: 1, 16>}, {transform_indices = @transform_8, window_bounds = array<i64: 1, 4, 4, 16>}]} {
    %c0 = arith.constant 0 : index
    %c0_0 = arith.constant 0 : index
    %c0_1 = arith.constant 0 : index
    %c0_2 = arith.constant 0 : index
    %0 = vector.load %arg1[%c0, %c0_0, %c0_1, %c0_2] : memref<1x5x5x16xf32, #tpu.memory_space<vmem>>, vector<1x5x5x16xf32>
    %1 = vector.shape_cast %0 : vector<1x5x5x16xf32> to vector<5x5x16xf32>
    %c0_3 = arith.constant 0 : index
    %c0_4 = arith.constant 0 : index
    %c0_5 = arith.constant 0 : index
    %c0_6 = arith.constant 0 : index
    %2 = vector.load %arg2[%c0_3, %c0_4, %c0_5, %c0_6] : memref<1x5x5x16xf32, #tpu.memory_space<vmem>>, vector<1x5x5x16xf32>
    %3 = vector.shape_cast %2 : vector<1x5x5x16xf32> to vector<5x5x16xf32>
    %c0_7 = arith.constant 0 : index
    %c0_8 = arith.constant 0 : index
    %c0_9 = arith.constant 0 : index
    %c0_10 = arith.constant 0 : index
    %4 = vector.load %arg3[%c0_7, %c0_8, %c0_9, %c0_10] : memref<1x5x5x16xf32, #tpu.memory_space<vmem>>, vector<1x5x5x16xf32>
    %5 = vector.shape_cast %4 : vector<1x5x5x16xf32> to vector<5x5x16xf32>
    %c0_11 = arith.constant 0 : index
    %c0_12 = arith.constant 0 : index
    %c0_13 = arith.constant 0 : index
    %c0_14 = arith.constant 0 : index
    %6 = vector.load %arg4[%c0_11, %c0_12, %c0_13, %c0_14] : memref<1x5x5x16xf32, #tpu.memory_space<vmem>>, vector<1x5x5x16xf32>
    %7 = vector.shape_cast %6 : vector<1x5x5x16xf32> to vector<5x5x16xf32>
    %c0_15 = arith.constant 0 : index
    %c0_16 = arith.constant 0 : index
    %c0_17 = arith.constant 0 : index
    %c0_18 = arith.constant 0 : index
    %8 = vector.load %arg5[%c0_15, %c0_16, %c0_17, %c0_18] : memref<3x3x16x8xf32, #tpu.memory_space<vmem>>, vector<3x3x16x8xf32>
    %cst = arith.constant 0.000000e+00 : f32
    %9 = vector.broadcast %cst : f32 to vector<16x8xf32>
    %10 = vector.extract_strided_slice %1 {offsets = [0, 0, 0], sizes = [4, 4, 16], strides = [1, 1, 1]} : vector<5x5x16xf32> to vector<4x4x16xf32>
    %11 = vector.shape_cast %10 : vector<4x4x16xf32> to vector<16x16xf32>
    %12 = vector.extract_strided_slice %8 {offsets = [0, 0, 0, 0], sizes = [1, 1, 16, 8], strides = [1, 1, 1, 1]} : vector<3x3x16x8xf32> to vector<1x1x16x8xf32>
    %13 = vector.shape_cast %12 : vector<1x1x16x8xf32> to vector<16x8xf32>
    %cst_19 = arith.constant dense<0.000000e+00> : vector<16x8xf32>
    %14 = tpu.matmul %11, %13, %cst_19 {dimension_numbers = #tpu.dot_dimension_numbers<[1], [0], [0], [1], [0, 0, 1, 1], [], []>} : vector<16x16xf32>, vector<16x8xf32>, vector<16x8xf32> -> vector<16x8xf32>
    %15 = arith.addf %9, %14 : vector<16x8xf32>
    %16 = vector.extract_strided_slice %3 {offsets = [0, 0, 0], sizes = [4, 4, 16], strides = [1, 1, 1]} : vector<5x5x16xf32> to vector<4x4x16xf32>
    %17 = vector.shape_cast %16 : vector<4x4x16xf32> to vector<16x16xf32>
    %18 = vector.extract_strided_slice %8 {offsets = [0, 1, 0, 0], sizes = [1, 1, 16, 8], strides = [1, 1, 1, 1]} : vector<3x3x16x8xf32> to vector<1x1x16x8xf32>
    %19 = vector.shape_cast %18 : vector<1x1x16x8xf32> to vector<16x8xf32>
    %cst_20 = arith.constant dense<0.000000e+00> : vector<16x8xf32>
    %20 = tpu.matmul %17, %19, %cst_20 {dimension_numbers = #tpu.dot_dimension_numbers<[1], [0], [0], [1], [0, 0, 1, 1], [], []>} : vector<16x16xf32>, vector<16x8xf32>, vector<16x8xf32> -> vector<16x8xf32>
    %21 = arith.addf %15, %20 : vector<16x8xf32>
    %22 = vector.extract_strided_slice %1 {offsets = [0, 1, 0], sizes = [4, 4, 16], strides = [1, 1, 1]} : vector<5x5x16xf32> to vector<4x4x16xf32>
    %23 = vector.shape_cast %22 : vector<4x4x16xf32> to vector<16x16xf32>
    %24 = vector.extract_strided_slice %8 {offsets = [0, 2, 0, 0], sizes = [1, 1, 16, 8], strides = [1, 1, 1, 1]} : vector<3x3x16x8xf32> to vector<1x1x16x8xf32>
    %25 = vector.shape_cast %24 : vector<1x1x16x8xf32> to vector<16x8xf32>
    %cst_21 = arith.constant dense<0.000000e+00> : vector<16x8xf32>
    %26 = tpu.matmul %23, %25, %cst_21 {dimension_numbers = #tpu.dot_dimension_numbers<[1], [0], [0], [1], [0, 0, 1, 1], [], []>} : vector<16x16xf32>, vector<16x8xf32>, vector<16x8xf32> -> vector<16x8xf32>
    %27 = arith.addf %21, %26 : vector<16x8xf32>
    %28 = vector.extract_strided_slice %5 {offsets = [0, 0, 0], sizes = [4, 4, 16], strides = [1, 1, 1]} : vector<5x5x16xf32> to vector<4x4x16xf32>
    %29 = vector.shape_cast %28 : vector<4x4x16xf32> to vector<16x16xf32>
    %30 = vector.extract_strided_slice %8 {offsets = [1, 0, 0, 0], sizes = [1, 1, 16, 8], strides = [1, 1, 1, 1]} : vector<3x3x16x8xf32> to vector<1x1x16x8xf32>
    %31 = vector.shape_cast %30 : vector<1x1x16x8xf32> to vector<16x8xf32>
    %cst_22 = arith.constant dense<0.000000e+00> : vector<16x8xf32>
    %32 = tpu.matmul %29, %31, %cst_22 {dimension_numbers = #tpu.dot_dimension_numbers<[1], [0], [0], [1], [0, 0, 1, 1], [], []>} : vector<16x16xf32>, vector<16x8xf32>, vector<16x8xf32> -> vector<16x8xf32>
    %33 = arith.addf %27, %32 : vector<16x8xf32>
    %34 = vector.extract_strided_slice %7 {offsets = [0, 0, 0], sizes = [4, 4, 16], strides = [1, 1, 1]} : vector<5x5x16xf32> to vector<4x4x16xf32>
    %35 = vector.shape_cast %34 : vector<4x4x16xf32> to vector<16x16xf32>
    %36 = vector.extract_strided_slice %8 {offsets = [1, 1, 0, 0], sizes = [1, 1, 16, 8], strides = [1, 1, 1, 1]} : vector<3x3x16x8xf32> to vector<1x1x16x8xf32>
    %37 = vector.shape_cast %36 : vector<1x1x16x8xf32> to vector<16x8xf32>
    %cst_23 = arith.constant dense<0.000000e+00> : vector<16x8xf32>
    %38 = tpu.matmul %35, %37, %cst_23 {dimension_numbers = #tpu.dot_dimension_numbers<[1], [0], [0], [1], [0, 0, 1, 1], [], []>} : vector<16x16xf32>, vector<16x8xf32>, vector<16x8xf32> -> vector<16x8xf32>
    %39 = arith.addf %33, %38 : vector<16x8xf32>
    %40 = vector.extract_strided_slice %5 {offsets = [0, 1, 0], sizes = [4, 4, 16], strides = [1, 1, 1]} : vector<5x5x16xf32> to vector<4x4x16xf32>
    %41 = vector.shape_cast %40 : vector<4x4x16xf32> to vector<16x16xf32>
    %42 = vector.extract_strided_slice %8 {offsets = [1, 2, 0, 0], sizes = [1, 1, 16, 8], strides = [1, 1, 1, 1]} : vector<3x3x16x8xf32> to vector<1x1x16x8xf32>
    %43 = vector.shape_cast %42 : vector<1x1x16x8xf32> to vector<16x8xf32>
    %cst_24 = arith.constant dense<0.000000e+00> : vector<16x8xf32>
    %44 = tpu.matmul %41, %43, %cst_24 {dimension_numbers = #tpu.dot_dimension_numbers<[1], [0], [0], [1], [0, 0, 1, 1], [], []>} : vector<16x16xf32>, vector<16x8xf32>, vector<16x8xf32> -> vector<16x8xf32>
    %45 = arith.addf %39, %44 : vector<16x8xf32>
    %46 = vector.extract_strided_slice %1 {offsets = [1, 0, 0], sizes = [4, 4, 16], strides = [1, 1, 1]} : vector<5x5x16xf32> to vector<4x4x16xf32>
    %47 = vector.shape_cast %46 : vector<4x4x16xf32> to vector<16x16xf32>
    %48 = vector.extract_strided_slice %8 {offsets = [2, 0, 0, 0], sizes = [1, 1, 16, 8], strides = [1, 1, 1, 1]} : vector<3x3x16x8xf32> to vector<1x1x16x8xf32>
    %49 = vector.shape_cast %48 : vector<1x1x16x8xf32> to vector<16x8xf32>
    %cst_25 = arith.constant dense<0.000000e+00> : vector<16x8xf32>
    %50 = tpu.matmul %47, %49, %cst_25 {dimension_numbers = #tpu.dot_dimension_numbers<[1], [0], [0], [1], [0, 0, 1, 1], [], []>} : vector<16x16xf32>, vector<16x8xf32>, vector<16x8xf32> -> vector<16x8xf32>
    %51 = arith.addf %45, %50 : vector<16x8xf32>
    %52 = vector.extract_strided_slice %3 {offsets = [1, 0, 0], sizes = [4, 4, 16], strides = [1, 1, 1]} : vector<5x5x16xf32> to vector<4x4x16xf32>
    %53 = vector.shape_cast %52 : vector<4x4x16xf32> to vector<16x16xf32>
    %54 = vector.extract_strided_slice %8 {offsets = [2, 1, 0, 0], sizes = [1, 1, 16, 8], strides = [1, 1, 1, 1]} : vector<3x3x16x8xf32> to vector<1x1x16x8xf32>
    %55 = vector.shape_cast %54 : vector<1x1x16x8xf32> to vector<16x8xf32>
    %cst_26 = arith.constant dense<0.000000e+00> : vector<16x8xf32>
    %56 = tpu.matmul %53, %55, %cst_26 {dimension_numbers = #tpu.dot_dimension_numbers<[1], [0], [0], [1], [0, 0, 1, 1], [], []>} : vector<16x16xf32>, vector<16x8xf32>, vector<16x8xf32> -> vector<16x8xf32>
    %57 = arith.addf %51, %56 : vector<16x8xf32>
    %58 = vector.extract_strided_slice %1 {offsets = [1, 1, 0], sizes = [4, 4, 16], strides = [1, 1, 1]} : vector<5x5x16xf32> to vector<4x4x16xf32>
    %59 = vector.shape_cast %58 : vector<4x4x16xf32> to vector<16x16xf32>
    %60 = vector.extract_strided_slice %8 {offsets = [2, 2, 0, 0], sizes = [1, 1, 16, 8], strides = [1, 1, 1, 1]} : vector<3x3x16x8xf32> to vector<1x1x16x8xf32>
    %61 = vector.shape_cast %60 : vector<1x1x16x8xf32> to vector<16x8xf32>
    %cst_27 = arith.constant dense<0.000000e+00> : vector<16x8xf32>
    %62 = tpu.matmul %59, %61, %cst_27 {dimension_numbers = #tpu.dot_dimension_numbers<[1], [0], [0], [1], [0, 0, 1, 1], [], []>} : vector<16x16xf32>, vector<16x8xf32>, vector<16x8xf32> -> vector<16x8xf32>
    %63 = arith.addf %57, %62 : vector<16x8xf32>
    %c0_28 = arith.constant 0 : index
    %c0_29 = arith.constant 0 : index
    %64 = vector.load %arg6[%c0_28, %c0_29] : memref<1x8xf32, #tpu.memory_space<vmem>>, vector<1x8xf32>
    %65 = vector.broadcast %64 : vector<1x8xf32> to vector<16x8xf32>
    %66 = arith.addf %63, %65 : vector<16x8xf32>
    %cst_30 = arith.constant 0.000000e+00 : f32
    %67 = vector.broadcast %cst_30 : f32 to vector<16x8xf32>
    %68 = arith.maximumf %66, %67 : vector<16x8xf32>
    %c0_31 = arith.constant 0 : index
    %c0_32 = arith.constant 0 : index
    %69 = vector.load %arg7[%c0_31, %c0_32] : memref<8x16xf32, #tpu.memory_space<vmem>>, vector<8x16xf32>
    %cst_33 = arith.constant dense<0.000000e+00> : vector<16x16xf32>
    %70 = tpu.matmul %68, %69, %cst_33 {dimension_numbers = #tpu.dot_dimension_numbers<[1], [0], [0], [1], [0, 0, 1, 1], [], []>} : vector<16x8xf32>, vector<8x16xf32>, vector<16x16xf32> -> vector<16x16xf32>
    %c0_34 = arith.constant 0 : index
    %c0_35 = arith.constant 0 : index
    %71 = vector.load %arg8[%c0_34, %c0_35] : memref<1x16xf32, #tpu.memory_space<vmem>>, vector<1x16xf32>
    %72 = vector.broadcast %71 : vector<1x16xf32> to vector<16x16xf32>
    %73 = arith.addf %70, %72 : vector<16x16xf32>
    %cst_36 = arith.constant 0.000000e+00 : f32
    %74 = vector.broadcast %cst_36 : f32 to vector<16x16xf32>
    %75 = arith.maximumf %73, %74 : vector<16x16xf32>
    %76 = vector.shape_cast %75 : vector<16x16xf32> to vector<1x4x4x16xf32>
    %c0_37 = arith.constant 0 : index
    %c0_38 = arith.constant 0 : index
    %c0_39 = arith.constant 0 : index
    %c0_40 = arith.constant 0 : index
    %77 = vector.load %arg9[%c0_37, %c0_38, %c0_39, %c0_40] : memref<1x4x4x16xf32, #tpu.memory_space<vmem>>, vector<1x4x4x16xf32>
    tpu.vector_store %arg9[%c0_37, %c0_38, %c0_39, %c0_40], %76 {strides = array<i32>} : memref<1x4x4x16xf32, #tpu.memory_space<vmem>>, vector<1x4x4x16xf32>,
    return
  }
  func.func @transform_0(%arg0: i32) -> (i32, i32, i32, i32) {
    %c0_i32 = arith.constant 0 : i32
    %c0_i32_0 = arith.constant 0 : i32
    %c0_i32_1 = arith.constant 0 : i32
    %c0_i32_2 = arith.constant 0 : i32
    return %arg0, %c0_i32, %c0_i32_0, %c0_i32_1 : i32, i32, i32, i32
  }
  func.func @transform_1(%arg0: i32) -> (i32, i32, i32, i32) {
    %c0_i32 = arith.constant 0 : i32
    %c0_i32_0 = arith.constant 0 : i32
    %c0_i32_1 = arith.constant 0 : i32
    %c0_i32_2 = arith.constant 0 : i32
    return %arg0, %c0_i32, %c0_i32_0, %c0_i32_1 : i32, i32, i32, i32
  }
  func.func @transform_2(%arg0: i32) -> (i32, i32, i32, i32) {
    %c0_i32 = arith.constant 0 : i32
    %c0_i32_0 = arith.constant 0 : i32
    %c0_i32_1 = arith.constant 0 : i32
    %c0_i32_2 = arith.constant 0 : i32
    return %arg0, %c0_i32, %c0_i32_0, %c0_i32_1 : i32, i32, i32, i32
  }
  func.func @transform_3(%arg0: i32) -> (i32, i32, i32, i32) {
    %c0_i32 = arith.constant 0 : i32
    %c0_i32_0 = arith.constant 0 : i32
    %c0_i32_1 = arith.constant 0 : i32
    %c0_i32_2 = arith.constant 0 : i32
    return %arg0, %c0_i32, %c0_i32_0, %c0_i32_1 : i32, i32, i32, i32
  }
  func.func @transform_4(%arg0: i32) -> (i32, i32, i32, i32) {
    %c0_i32 = arith.constant 0 : i32
    %c0_i32_0 = arith.constant 0 : i32
    %c0_i32_1 = arith.constant 0 : i32
    %c0_i32_2 = arith.constant 0 : i32
    %c0_i32_3 = arith.constant 0 : i32
    return %c0_i32, %c0_i32_0, %c0_i32_1, %c0_i32_2 : i32, i32, i32, i32
  }
  func.func @transform_5(%arg0: i32) -> (i32, i32) {
    %c0_i32 = arith.constant 0 : i32
    %c0_i32_0 = arith.constant 0 : i32
    %c0_i32_1 = arith.constant 0 : i32
    return %c0_i32, %c0_i32_0 : i32, i32
  }
  func.func @transform_6(%arg0: i32) -> (i32, i32) {
    %c0_i32 = arith.constant 0 : i32
    %c0_i32_0 = arith.constant 0 : i32
    %c0_i32_1 = arith.constant 0 : i32
    return %c0_i32, %c0_i32_0 : i32, i32
  }
  func.func @transform_7(%arg0: i32) -> (i32, i32) {
    %c0_i32 = arith.constant 0 : i32
    %c0_i32_0 = arith.constant 0 : i32
    %c0_i32_1 = arith.constant 0 : i32
    return %c0_i32, %c0_i32_0 : i32, i32
  }
  func.func @transform_8(%arg0: i32) -> (i32, i32, i32, i32) {
    %c0_i32 = arith.constant 0 : i32
    %c0_i32_0 = arith.constant 0 : i32
    %c0_i32_1 = arith.constant 0 : i32
    %c0_i32_2 = arith.constant 0 : i32
    return %arg0, %c0_i32, %c0_i32_0, %c0_i32_1 : i32, i32, i32, i32
  }
}

module attributes {stable_mosaic.version = 11 : i64} {
  func.func @_stem12_kernel(%arg0: i32, %arg1: memref<1x9x9x3xf32, #tpu.memory_space<vmem>>, %arg2: memref<1x9x9x3xf32, #tpu.memory_space<vmem>>, %arg3: memref<1x9x9x3xf32, #tpu.memory_space<vmem>>, %arg4: memref<1x9x9x3xf32, #tpu.memory_space<vmem>>, %arg5: memref<3x3x3x8xf32, #tpu.memory_space<vmem>>, %arg6: memref<1x8xf32, #tpu.memory_space<vmem>>, %arg7: memref<2x2x8x4xf32, #tpu.memory_space<vmem>>, %arg8: memref<1x4xf32, #tpu.memory_space<vmem>>, %arg9: memref<2x2x4x8xf32, #tpu.memory_space<vmem>>, %arg10: memref<1x8xf32, #tpu.memory_space<vmem>>, %arg11: memref<1x10x10x16xf32, #tpu.memory_space<vmem>>, %arg12: memref<9x9x8xf32, #tpu.memory_space<vmem>>, %arg13: memref<9x9x4xf32, #tpu.memory_space<vmem>>) attributes {dimension_semantics = [#tpu.dimension_semantics<parallel>], iteration_bounds = array<i64: 2>, scalar_prefetch = 0 : i64, scratch_operands = 2 : i64, tpu.core_type = #tpu.core_type<tc>, window_params = [{transform_indices = @transform_0, window_bounds = array<i64: 1, 9, 9, 3>}, {transform_indices = @transform_1, window_bounds = array<i64: 1, 9, 9, 3>}, {transform_indices = @transform_2, window_bounds = array<i64: 1, 9, 9, 3>}, {transform_indices = @transform_3, window_bounds = array<i64: 1, 9, 9, 3>}, {pipeline_mode = #tpu.pipeline_mode<synchronous>, transform_indices = @transform_4, window_bounds = array<i64: 3, 3, 3, 8>}, {pipeline_mode = #tpu.pipeline_mode<synchronous>, transform_indices = @transform_5, window_bounds = array<i64: 1, 8>}, {pipeline_mode = #tpu.pipeline_mode<synchronous>, transform_indices = @transform_6, window_bounds = array<i64: 2, 2, 8, 4>}, {pipeline_mode = #tpu.pipeline_mode<synchronous>, transform_indices = @transform_7, window_bounds = array<i64: 1, 4>}, {pipeline_mode = #tpu.pipeline_mode<synchronous>, transform_indices = @transform_8, window_bounds = array<i64: 2, 2, 4, 8>}, {pipeline_mode = #tpu.pipeline_mode<synchronous>, transform_indices = @transform_9, window_bounds = array<i64: 1, 8>}, {transform_indices = @transform_10, window_bounds = array<i64: 1, 10, 10, 16>}]} {
    %c0 = arith.constant 0 : index
    %c0_0 = arith.constant 0 : index
    %c0_1 = arith.constant 0 : index
    %c0_2 = arith.constant 0 : index
    %0 = vector.load %arg1[%c0, %c0_0, %c0_1, %c0_2] : memref<1x9x9x3xf32, #tpu.memory_space<vmem>>, vector<1x9x9x3xf32>
    %1 = vector.shape_cast %0 : vector<1x9x9x3xf32> to vector<9x9x3xf32>
    %c0_3 = arith.constant 0 : index
    %c0_4 = arith.constant 0 : index
    %c0_5 = arith.constant 0 : index
    %c0_6 = arith.constant 0 : index
    %2 = vector.load %arg2[%c0_3, %c0_4, %c0_5, %c0_6] : memref<1x9x9x3xf32, #tpu.memory_space<vmem>>, vector<1x9x9x3xf32>
    %3 = vector.shape_cast %2 : vector<1x9x9x3xf32> to vector<9x9x3xf32>
    %c0_7 = arith.constant 0 : index
    %c0_8 = arith.constant 0 : index
    %c0_9 = arith.constant 0 : index
    %c0_10 = arith.constant 0 : index
    %4 = vector.load %arg3[%c0_7, %c0_8, %c0_9, %c0_10] : memref<1x9x9x3xf32, #tpu.memory_space<vmem>>, vector<1x9x9x3xf32>
    %5 = vector.shape_cast %4 : vector<1x9x9x3xf32> to vector<9x9x3xf32>
    %c0_11 = arith.constant 0 : index
    %c0_12 = arith.constant 0 : index
    %c0_13 = arith.constant 0 : index
    %c0_14 = arith.constant 0 : index
    %6 = vector.load %arg4[%c0_11, %c0_12, %c0_13, %c0_14] : memref<1x9x9x3xf32, #tpu.memory_space<vmem>>, vector<1x9x9x3xf32>
    %7 = vector.shape_cast %6 : vector<1x9x9x3xf32> to vector<9x9x3xf32>
    %c0_15 = arith.constant 0 : index
    %c0_16 = arith.constant 0 : index
    %c0_17 = arith.constant 0 : index
    %c0_18 = arith.constant 0 : index
    %8 = vector.load %arg5[%c0_15, %c0_16, %c0_17, %c0_18] : memref<3x3x3x8xf32, #tpu.memory_space<vmem>>, vector<3x3x3x8xf32>
    %cst = arith.constant 0.000000e+00 : f32
    %9 = vector.broadcast %cst : f32 to vector<64x8xf32>
    %10 = vector.extract_strided_slice %1 {offsets = [0, 0, 0], sizes = [8, 8, 3], strides = [1, 1, 1]} : vector<9x9x3xf32> to vector<8x8x3xf32>
    %11 = vector.shape_cast %10 : vector<8x8x3xf32> to vector<64x3xf32>
    %12 = vector.extract_strided_slice %8 {offsets = [0, 0, 0, 0], sizes = [1, 1, 3, 8], strides = [1, 1, 1, 1]} : vector<3x3x3x8xf32> to vector<1x1x3x8xf32>
    %13 = vector.shape_cast %12 : vector<1x1x3x8xf32> to vector<3x8xf32>
    %cst_19 = arith.constant dense<0.000000e+00> : vector<64x8xf32>
    %14 = tpu.matmul %11, %13, %cst_19 {dimension_numbers = #tpu.dot_dimension_numbers<[1], [0], [0], [1], [0, 0, 1, 1], [], []>} : vector<64x3xf32>, vector<3x8xf32>, vector<64x8xf32> -> vector<64x8xf32>
    %15 = arith.addf %9, %14 : vector<64x8xf32>
    %16 = vector.extract_strided_slice %3 {offsets = [0, 0, 0], sizes = [8, 8, 3], strides = [1, 1, 1]} : vector<9x9x3xf32> to vector<8x8x3xf32>
    %17 = vector.shape_cast %16 : vector<8x8x3xf32> to vector<64x3xf32>
    %18 = vector.extract_strided_slice %8 {offsets = [0, 1, 0, 0], sizes = [1, 1, 3, 8], strides = [1, 1, 1, 1]} : vector<3x3x3x8xf32> to vector<1x1x3x8xf32>
    %19 = vector.shape_cast %18 : vector<1x1x3x8xf32> to vector<3x8xf32>
    %cst_20 = arith.constant dense<0.000000e+00> : vector<64x8xf32>
    %20 = tpu.matmul %17, %19, %cst_20 {dimension_numbers = #tpu.dot_dimension_numbers<[1], [0], [0], [1], [0, 0, 1, 1], [], []>} : vector<64x3xf32>, vector<3x8xf32>, vector<64x8xf32> -> vector<64x8xf32>
    %21 = arith.addf %15, %20 : vector<64x8xf32>
    %22 = vector.extract_strided_slice %1 {offsets = [0, 1, 0], sizes = [8, 8, 3], strides = [1, 1, 1]} : vector<9x9x3xf32> to vector<8x8x3xf32>
    %23 = vector.shape_cast %22 : vector<8x8x3xf32> to vector<64x3xf32>
    %24 = vector.extract_strided_slice %8 {offsets = [0, 2, 0, 0], sizes = [1, 1, 3, 8], strides = [1, 1, 1, 1]} : vector<3x3x3x8xf32> to vector<1x1x3x8xf32>
    %25 = vector.shape_cast %24 : vector<1x1x3x8xf32> to vector<3x8xf32>
    %cst_21 = arith.constant dense<0.000000e+00> : vector<64x8xf32>
    %26 = tpu.matmul %23, %25, %cst_21 {dimension_numbers = #tpu.dot_dimension_numbers<[1], [0], [0], [1], [0, 0, 1, 1], [], []>} : vector<64x3xf32>, vector<3x8xf32>, vector<64x8xf32> -> vector<64x8xf32>
    %27 = arith.addf %21, %26 : vector<64x8xf32>
    %28 = vector.extract_strided_slice %5 {offsets = [0, 0, 0], sizes = [8, 8, 3], strides = [1, 1, 1]} : vector<9x9x3xf32> to vector<8x8x3xf32>
    %29 = vector.shape_cast %28 : vector<8x8x3xf32> to vector<64x3xf32>
    %30 = vector.extract_strided_slice %8 {offsets = [1, 0, 0, 0], sizes = [1, 1, 3, 8], strides = [1, 1, 1, 1]} : vector<3x3x3x8xf32> to vector<1x1x3x8xf32>
    %31 = vector.shape_cast %30 : vector<1x1x3x8xf32> to vector<3x8xf32>
    %cst_22 = arith.constant dense<0.000000e+00> : vector<64x8xf32>
    %32 = tpu.matmul %29, %31, %cst_22 {dimension_numbers = #tpu.dot_dimension_numbers<[1], [0], [0], [1], [0, 0, 1, 1], [], []>} : vector<64x3xf32>, vector<3x8xf32>, vector<64x8xf32> -> vector<64x8xf32>
    %33 = arith.addf %27, %32 : vector<64x8xf32>
    %34 = vector.extract_strided_slice %7 {offsets = [0, 0, 0], sizes = [8, 8, 3], strides = [1, 1, 1]} : vector<9x9x3xf32> to vector<8x8x3xf32>
    %35 = vector.shape_cast %34 : vector<8x8x3xf32> to vector<64x3xf32>
    %36 = vector.extract_strided_slice %8 {offsets = [1, 1, 0, 0], sizes = [1, 1, 3, 8], strides = [1, 1, 1, 1]} : vector<3x3x3x8xf32> to vector<1x1x3x8xf32>
    %37 = vector.shape_cast %36 : vector<1x1x3x8xf32> to vector<3x8xf32>
    %cst_23 = arith.constant dense<0.000000e+00> : vector<64x8xf32>
    %38 = tpu.matmul %35, %37, %cst_23 {dimension_numbers = #tpu.dot_dimension_numbers<[1], [0], [0], [1], [0, 0, 1, 1], [], []>} : vector<64x3xf32>, vector<3x8xf32>, vector<64x8xf32> -> vector<64x8xf32>
    %39 = arith.addf %33, %38 : vector<64x8xf32>
    %40 = vector.extract_strided_slice %5 {offsets = [0, 1, 0], sizes = [8, 8, 3], strides = [1, 1, 1]} : vector<9x9x3xf32> to vector<8x8x3xf32>
    %41 = vector.shape_cast %40 : vector<8x8x3xf32> to vector<64x3xf32>
    %42 = vector.extract_strided_slice %8 {offsets = [1, 2, 0, 0], sizes = [1, 1, 3, 8], strides = [1, 1, 1, 1]} : vector<3x3x3x8xf32> to vector<1x1x3x8xf32>
    %43 = vector.shape_cast %42 : vector<1x1x3x8xf32> to vector<3x8xf32>
    %cst_24 = arith.constant dense<0.000000e+00> : vector<64x8xf32>
    %44 = tpu.matmul %41, %43, %cst_24 {dimension_numbers = #tpu.dot_dimension_numbers<[1], [0], [0], [1], [0, 0, 1, 1], [], []>} : vector<64x3xf32>, vector<3x8xf32>, vector<64x8xf32> -> vector<64x8xf32>
    %45 = arith.addf %39, %44 : vector<64x8xf32>
    %46 = vector.extract_strided_slice %1 {offsets = [1, 0, 0], sizes = [8, 8, 3], strides = [1, 1, 1]} : vector<9x9x3xf32> to vector<8x8x3xf32>
    %47 = vector.shape_cast %46 : vector<8x8x3xf32> to vector<64x3xf32>
    %48 = vector.extract_strided_slice %8 {offsets = [2, 0, 0, 0], sizes = [1, 1, 3, 8], strides = [1, 1, 1, 1]} : vector<3x3x3x8xf32> to vector<1x1x3x8xf32>
    %49 = vector.shape_cast %48 : vector<1x1x3x8xf32> to vector<3x8xf32>
    %cst_25 = arith.constant dense<0.000000e+00> : vector<64x8xf32>
    %50 = tpu.matmul %47, %49, %cst_25 {dimension_numbers = #tpu.dot_dimension_numbers<[1], [0], [0], [1], [0, 0, 1, 1], [], []>} : vector<64x3xf32>, vector<3x8xf32>, vector<64x8xf32> -> vector<64x8xf32>
    %51 = arith.addf %45, %50 : vector<64x8xf32>
    %52 = vector.extract_strided_slice %3 {offsets = [1, 0, 0], sizes = [8, 8, 3], strides = [1, 1, 1]} : vector<9x9x3xf32> to vector<8x8x3xf32>
    %53 = vector.shape_cast %52 : vector<8x8x3xf32> to vector<64x3xf32>
    %54 = vector.extract_strided_slice %8 {offsets = [2, 1, 0, 0], sizes = [1, 1, 3, 8], strides = [1, 1, 1, 1]} : vector<3x3x3x8xf32> to vector<1x1x3x8xf32>
    %55 = vector.shape_cast %54 : vector<1x1x3x8xf32> to vector<3x8xf32>
    %cst_26 = arith.constant dense<0.000000e+00> : vector<64x8xf32>
    %56 = tpu.matmul %53, %55, %cst_26 {dimension_numbers = #tpu.dot_dimension_numbers<[1], [0], [0], [1], [0, 0, 1, 1], [], []>} : vector<64x3xf32>, vector<3x8xf32>, vector<64x8xf32> -> vector<64x8xf32>
    %57 = arith.addf %51, %56 : vector<64x8xf32>
    %58 = vector.extract_strided_slice %1 {offsets = [1, 1, 0], sizes = [8, 8, 3], strides = [1, 1, 1]} : vector<9x9x3xf32> to vector<8x8x3xf32>
    %59 = vector.shape_cast %58 : vector<8x8x3xf32> to vector<64x3xf32>
    %60 = vector.extract_strided_slice %8 {offsets = [2, 2, 0, 0], sizes = [1, 1, 3, 8], strides = [1, 1, 1, 1]} : vector<3x3x3x8xf32> to vector<1x1x3x8xf32>
    %61 = vector.shape_cast %60 : vector<1x1x3x8xf32> to vector<3x8xf32>
    %cst_27 = arith.constant dense<0.000000e+00> : vector<64x8xf32>
    %62 = tpu.matmul %59, %61, %cst_27 {dimension_numbers = #tpu.dot_dimension_numbers<[1], [0], [0], [1], [0, 0, 1, 1], [], []>} : vector<64x3xf32>, vector<3x8xf32>, vector<64x8xf32> -> vector<64x8xf32>
    %63 = arith.addf %57, %62 : vector<64x8xf32>
    %c0_28 = arith.constant 0 : index
    %c0_29 = arith.constant 0 : index
    %64 = vector.load %arg6[%c0_28, %c0_29] : memref<1x8xf32, #tpu.memory_space<vmem>>, vector<1x8xf32>
    %65 = vector.broadcast %64 : vector<1x8xf32> to vector<64x8xf32>
    %66 = arith.addf %63, %65 : vector<64x8xf32>
    %cst_30 = arith.constant 0.000000e+00 : f32
    %67 = vector.broadcast %cst_30 : f32 to vector<64x8xf32>
    %68 = arith.maximumf %66, %67 : vector<64x8xf32>
    %cst_31 = arith.constant 0.000000e+00 : f32
    %69 = vector.broadcast %cst_31 : f32 to vector<9x9x8xf32>
    %c0_32 = arith.constant 0 : index
    %c0_33 = arith.constant 0 : index
    %c0_34 = arith.constant 0 : index
    %70 = vector.load %arg12[%c0_32, %c0_33, %c0_34] : memref<9x9x8xf32, #tpu.memory_space<vmem>>, vector<9x9x8xf32>
    tpu.vector_store %arg12[%c0_32, %c0_33, %c0_34], %69 {strides = array<i32>} : memref<9x9x8xf32, #tpu.memory_space<vmem>>, vector<9x9x8xf32>,
    %71 = vector.shape_cast %68 : vector<64x8xf32> to vector<8x8x8xf32>
    %c0_35 = arith.constant 0 : index
    %c0_36 = arith.constant 0 : index
    %c0_37 = arith.constant 0 : index
    %72 = vector.load %arg12[%c0_35, %c0_36, %c0_37] : memref<9x9x8xf32, #tpu.memory_space<vmem>>, vector<8x8x8xf32>
    tpu.vector_store %arg12[%c0_35, %c0_36, %c0_37], %71 {strides = array<i32>} : memref<9x9x8xf32, #tpu.memory_space<vmem>>, vector<8x8x8xf32>,
    %c0_38 = arith.constant 0 : index
    %c0_39 = arith.constant 0 : index
    %c0_40 = arith.constant 0 : index
    %73 = vector.load %arg12[%c0_38, %c0_39, %c0_40] : memref<9x9x8xf32, #tpu.memory_space<vmem>>, vector<9x9x8xf32>
    %c0_41 = arith.constant 0 : index
    %c0_42 = arith.constant 0 : index
    %c0_43 = arith.constant 0 : index
    %c0_44 = arith.constant 0 : index
    %74 = vector.load %arg7[%c0_41, %c0_42, %c0_43, %c0_44] : memref<2x2x8x4xf32, #tpu.memory_space<vmem>>, vector<2x2x8x4xf32>
    %cst_45 = arith.constant 0.000000e+00 : f32
    %75 = vector.broadcast %cst_45 : f32 to vector<64x4xf32>
    %76 = vector.extract_strided_slice %73 {offsets = [0, 0, 0], sizes = [8, 8, 8], strides = [1, 1, 1]} : vector<9x9x8xf32> to vector<8x8x8xf32>
    %77 = vector.shape_cast %76 : vector<8x8x8xf32> to vector<64x8xf32>
    %78 = vector.extract_strided_slice %74 {offsets = [0, 0, 0, 0], sizes = [1, 1, 8, 4], strides = [1, 1, 1, 1]} : vector<2x2x8x4xf32> to vector<1x1x8x4xf32>
    %79 = vector.shape_cast %78 : vector<1x1x8x4xf32> to vector<8x4xf32>
    %cst_46 = arith.constant dense<0.000000e+00> : vector<64x4xf32>
    %80 = tpu.matmul %77, %79, %cst_46 {dimension_numbers = #tpu.dot_dimension_numbers<[1], [0], [0], [1], [0, 0, 1, 1], [], []>} : vector<64x8xf32>, vector<8x4xf32>, vector<64x4xf32> -> vector<64x4xf32>
    %81 = arith.addf %75, %80 : vector<64x4xf32>
    %82 = vector.extract_strided_slice %73 {offsets = [0, 1, 0], sizes = [8, 8, 8], strides = [1, 1, 1]} : vector<9x9x8xf32> to vector<8x8x8xf32>
    %83 = vector.shape_cast %82 : vector<8x8x8xf32> to vector<64x8xf32>
    %84 = vector.extract_strided_slice %74 {offsets = [0, 1, 0, 0], sizes = [1, 1, 8, 4], strides = [1, 1, 1, 1]} : vector<2x2x8x4xf32> to vector<1x1x8x4xf32>
    %85 = vector.shape_cast %84 : vector<1x1x8x4xf32> to vector<8x4xf32>
    %cst_47 = arith.constant dense<0.000000e+00> : vector<64x4xf32>
    %86 = tpu.matmul %83, %85, %cst_47 {dimension_numbers = #tpu.dot_dimension_numbers<[1], [0], [0], [1], [0, 0, 1, 1], [], []>} : vector<64x8xf32>, vector<8x4xf32>, vector<64x4xf32> -> vector<64x4xf32>
    %87 = arith.addf %81, %86 : vector<64x4xf32>
    %88 = vector.extract_strided_slice %73 {offsets = [1, 0, 0], sizes = [8, 8, 8], strides = [1, 1, 1]} : vector<9x9x8xf32> to vector<8x8x8xf32>
    %89 = vector.shape_cast %88 : vector<8x8x8xf32> to vector<64x8xf32>
    %90 = vector.extract_strided_slice %74 {offsets = [1, 0, 0, 0], sizes = [1, 1, 8, 4], strides = [1, 1, 1, 1]} : vector<2x2x8x4xf32> to vector<1x1x8x4xf32>
    %91 = vector.shape_cast %90 : vector<1x1x8x4xf32> to vector<8x4xf32>
    %cst_48 = arith.constant dense<0.000000e+00> : vector<64x4xf32>
    %92 = tpu.matmul %89, %91, %cst_48 {dimension_numbers = #tpu.dot_dimension_numbers<[1], [0], [0], [1], [0, 0, 1, 1], [], []>} : vector<64x8xf32>, vector<8x4xf32>, vector<64x4xf32> -> vector<64x4xf32>
    %93 = arith.addf %87, %92 : vector<64x4xf32>
    %94 = vector.extract_strided_slice %73 {offsets = [1, 1, 0], sizes = [8, 8, 8], strides = [1, 1, 1]} : vector<9x9x8xf32> to vector<8x8x8xf32>
    %95 = vector.shape_cast %94 : vector<8x8x8xf32> to vector<64x8xf32>
    %96 = vector.extract_strided_slice %74 {offsets = [1, 1, 0, 0], sizes = [1, 1, 8, 4], strides = [1, 1, 1, 1]} : vector<2x2x8x4xf32> to vector<1x1x8x4xf32>
    %97 = vector.shape_cast %96 : vector<1x1x8x4xf32> to vector<8x4xf32>
    %cst_49 = arith.constant dense<0.000000e+00> : vector<64x4xf32>
    %98 = tpu.matmul %95, %97, %cst_49 {dimension_numbers = #tpu.dot_dimension_numbers<[1], [0], [0], [1], [0, 0, 1, 1], [], []>} : vector<64x8xf32>, vector<8x4xf32>, vector<64x4xf32> -> vector<64x4xf32>
    %99 = arith.addf %93, %98 : vector<64x4xf32>
    %c0_50 = arith.constant 0 : index
    %c0_51 = arith.constant 0 : index
    %100 = vector.load %arg8[%c0_50, %c0_51] : memref<1x4xf32, #tpu.memory_space<vmem>>, vector<1x4xf32>
    %101 = vector.broadcast %100 : vector<1x4xf32> to vector<64x4xf32>
    %102 = arith.addf %99, %101 : vector<64x4xf32>
    %cst_52 = arith.constant 0.000000e+00 : f32
    %103 = vector.broadcast %cst_52 : f32 to vector<64x4xf32>
    %104 = arith.maximumf %102, %103 : vector<64x4xf32>
    %cst_53 = arith.constant 0.000000e+00 : f32
    %105 = vector.broadcast %cst_53 : f32 to vector<9x9x4xf32>
    %c0_54 = arith.constant 0 : index
    %c0_55 = arith.constant 0 : index
    %c0_56 = arith.constant 0 : index
    %106 = vector.load %arg13[%c0_54, %c0_55, %c0_56] : memref<9x9x4xf32, #tpu.memory_space<vmem>>, vector<9x9x4xf32>
    tpu.vector_store %arg13[%c0_54, %c0_55, %c0_56], %105 {strides = array<i32>} : memref<9x9x4xf32, #tpu.memory_space<vmem>>, vector<9x9x4xf32>,
    %107 = vector.shape_cast %104 : vector<64x4xf32> to vector<8x8x4xf32>
    %c0_57 = arith.constant 0 : index
    %c0_58 = arith.constant 0 : index
    %c0_59 = arith.constant 0 : index
    %108 = vector.load %arg13[%c0_57, %c0_58, %c0_59] : memref<9x9x4xf32, #tpu.memory_space<vmem>>, vector<8x8x4xf32>
    tpu.vector_store %arg13[%c0_57, %c0_58, %c0_59], %107 {strides = array<i32>} : memref<9x9x4xf32, #tpu.memory_space<vmem>>, vector<8x8x4xf32>,
    %c0_60 = arith.constant 0 : index
    %c0_61 = arith.constant 0 : index
    %c0_62 = arith.constant 0 : index
    %109 = vector.load %arg13[%c0_60, %c0_61, %c0_62] : memref<9x9x4xf32, #tpu.memory_space<vmem>>, vector<9x9x4xf32>
    %c0_63 = arith.constant 0 : index
    %c0_64 = arith.constant 0 : index
    %c0_65 = arith.constant 0 : index
    %c0_66 = arith.constant 0 : index
    %110 = vector.load %arg9[%c0_63, %c0_64, %c0_65, %c0_66] : memref<2x2x4x8xf32, #tpu.memory_space<vmem>>, vector<2x2x4x8xf32>
    %cst_67 = arith.constant 0.000000e+00 : f32
    %111 = vector.broadcast %cst_67 : f32 to vector<64x8xf32>
    %112 = vector.extract_strided_slice %109 {offsets = [0, 0, 0], sizes = [8, 8, 4], strides = [1, 1, 1]} : vector<9x9x4xf32> to vector<8x8x4xf32>
    %113 = vector.shape_cast %112 : vector<8x8x4xf32> to vector<64x4xf32>
    %114 = vector.extract_strided_slice %110 {offsets = [0, 0, 0, 0], sizes = [1, 1, 4, 8], strides = [1, 1, 1, 1]} : vector<2x2x4x8xf32> to vector<1x1x4x8xf32>
    %115 = vector.shape_cast %114 : vector<1x1x4x8xf32> to vector<4x8xf32>
    %cst_68 = arith.constant dense<0.000000e+00> : vector<64x8xf32>
    %116 = tpu.matmul %113, %115, %cst_68 {dimension_numbers = #tpu.dot_dimension_numbers<[1], [0], [0], [1], [0, 0, 1, 1], [], []>} : vector<64x4xf32>, vector<4x8xf32>, vector<64x8xf32> -> vector<64x8xf32>
    %117 = arith.addf %111, %116 : vector<64x8xf32>
    %118 = vector.extract_strided_slice %109 {offsets = [0, 1, 0], sizes = [8, 8, 4], strides = [1, 1, 1]} : vector<9x9x4xf32> to vector<8x8x4xf32>
    %119 = vector.shape_cast %118 : vector<8x8x4xf32> to vector<64x4xf32>
    %120 = vector.extract_strided_slice %110 {offsets = [0, 1, 0, 0], sizes = [1, 1, 4, 8], strides = [1, 1, 1, 1]} : vector<2x2x4x8xf32> to vector<1x1x4x8xf32>
    %121 = vector.shape_cast %120 : vector<1x1x4x8xf32> to vector<4x8xf32>
    %cst_69 = arith.constant dense<0.000000e+00> : vector<64x8xf32>
    %122 = tpu.matmul %119, %121, %cst_69 {dimension_numbers = #tpu.dot_dimension_numbers<[1], [0], [0], [1], [0, 0, 1, 1], [], []>} : vector<64x4xf32>, vector<4x8xf32>, vector<64x8xf32> -> vector<64x8xf32>
    %123 = arith.addf %117, %122 : vector<64x8xf32>
    %124 = vector.extract_strided_slice %109 {offsets = [1, 0, 0], sizes = [8, 8, 4], strides = [1, 1, 1]} : vector<9x9x4xf32> to vector<8x8x4xf32>
    %125 = vector.shape_cast %124 : vector<8x8x4xf32> to vector<64x4xf32>
    %126 = vector.extract_strided_slice %110 {offsets = [1, 0, 0, 0], sizes = [1, 1, 4, 8], strides = [1, 1, 1, 1]} : vector<2x2x4x8xf32> to vector<1x1x4x8xf32>
    %127 = vector.shape_cast %126 : vector<1x1x4x8xf32> to vector<4x8xf32>
    %cst_70 = arith.constant dense<0.000000e+00> : vector<64x8xf32>
    %128 = tpu.matmul %125, %127, %cst_70 {dimension_numbers = #tpu.dot_dimension_numbers<[1], [0], [0], [1], [0, 0, 1, 1], [], []>} : vector<64x4xf32>, vector<4x8xf32>, vector<64x8xf32> -> vector<64x8xf32>
    %129 = arith.addf %123, %128 : vector<64x8xf32>
    %130 = vector.extract_strided_slice %109 {offsets = [1, 1, 0], sizes = [8, 8, 4], strides = [1, 1, 1]} : vector<9x9x4xf32> to vector<8x8x4xf32>
    %131 = vector.shape_cast %130 : vector<8x8x4xf32> to vector<64x4xf32>
    %132 = vector.extract_strided_slice %110 {offsets = [1, 1, 0, 0], sizes = [1, 1, 4, 8], strides = [1, 1, 1, 1]} : vector<2x2x4x8xf32> to vector<1x1x4x8xf32>
    %133 = vector.shape_cast %132 : vector<1x1x4x8xf32> to vector<4x8xf32>
    %cst_71 = arith.constant dense<0.000000e+00> : vector<64x8xf32>
    %134 = tpu.matmul %131, %133, %cst_71 {dimension_numbers = #tpu.dot_dimension_numbers<[1], [0], [0], [1], [0, 0, 1, 1], [], []>} : vector<64x4xf32>, vector<4x8xf32>, vector<64x8xf32> -> vector<64x8xf32>
    %135 = arith.addf %129, %134 : vector<64x8xf32>
    %c0_72 = arith.constant 0 : index
    %c0_73 = arith.constant 0 : index
    %136 = vector.load %arg10[%c0_72, %c0_73] : memref<1x8xf32, #tpu.memory_space<vmem>>, vector<1x8xf32>
    %137 = vector.broadcast %136 : vector<1x8xf32> to vector<64x8xf32>
    %138 = arith.addf %135, %137 : vector<64x8xf32>
    %cst_74 = arith.constant 0.000000e+00 : f32
    %139 = vector.broadcast %cst_74 : f32 to vector<64x8xf32>
    %140 = arith.maximumf %138, %139 : vector<64x8xf32>
    %141 = vector.shape_cast %140 : vector<64x8xf32> to vector<8x8x8xf32>
    %142 = vector.extract_strided_slice %73 {offsets = [0, 0, 0], sizes = [8, 8, 8], strides = [1, 1, 1]} : vector<9x9x8xf32> to vector<8x8x8xf32>
    %143 = vector.extract_strided_slice %73 {offsets = [0, 1, 0], sizes = [8, 8, 8], strides = [1, 1, 1]} : vector<9x9x8xf32> to vector<8x8x8xf32>
    %144 = arith.maximumf %142, %143 : vector<8x8x8xf32>
    %145 = vector.extract_strided_slice %73 {offsets = [1, 0, 0], sizes = [8, 8, 8], strides = [1, 1, 1]} : vector<9x9x8xf32> to vector<8x8x8xf32>
    %146 = vector.extract_strided_slice %73 {offsets = [1, 1, 0], sizes = [8, 8, 8], strides = [1, 1, 1]} : vector<9x9x8xf32> to vector<8x8x8xf32>
    %147 = arith.maximumf %145, %146 : vector<8x8x8xf32>
    %148 = arith.maximumf %144, %147 : vector<8x8x8xf32>
    %cst_75 = arith.constant 0.000000e+00 : f32
    %149 = vector.broadcast %cst_75 : f32 to vector<1x10x10x16xf32>
    %c0_76 = arith.constant 0 : index
    %c0_77 = arith.constant 0 : index
    %c0_78 = arith.constant 0 : index
    %c0_79 = arith.constant 0 : index
    %150 = vector.load %arg11[%c0_76, %c0_77, %c0_78, %c0_79] : memref<1x10x10x16xf32, #tpu.memory_space<vmem>>, vector<1x10x10x16xf32>
    tpu.vector_store %arg11[%c0_76, %c0_77, %c0_78, %c0_79], %149 {strides = array<i32>} : memref<1x10x10x16xf32, #tpu.memory_space<vmem>>, vector<1x10x10x16xf32>,
    %c0_80 = arith.constant 0 : index
    %c1 = arith.constant 1 : index
    %c1_81 = arith.constant 1 : index
    %c0_82 = arith.constant 0 : index
    %151 = vector.load %arg11[%c0_80, %c1, %c1_81, %c0_82] : memref<1x10x10x16xf32, #tpu.memory_space<vmem>>, vector<1x8x8x8xf32>
    %152 = vector.shape_cast %151 : vector<1x8x8x8xf32> to vector<8x8x8xf32>
    %153 = vector.shape_cast %148 : vector<8x8x8xf32> to vector<1x8x8x8xf32>
    tpu.vector_store %arg11[%c0_80, %c1, %c1_81, %c0_82], %153 {strides = array<i32>} : memref<1x10x10x16xf32, #tpu.memory_space<vmem>>, vector<1x8x8x8xf32>,
    %c0_83 = arith.constant 0 : index
    %c1_84 = arith.constant 1 : index
    %c1_85 = arith.constant 1 : index
    %c8 = arith.constant 8 : index
    %154 = vector.load %arg11[%c0_83, %c1_84, %c1_85, %c8] : memref<1x10x10x16xf32, #tpu.memory_space<vmem>>, vector<1x8x8x8xf32>
    %155 = vector.shape_cast %154 : vector<1x8x8x8xf32> to vector<8x8x8xf32>
    %156 = vector.shape_cast %141 : vector<8x8x8xf32> to vector<1x8x8x8xf32>
    tpu.vector_store %arg11[%c0_83, %c1_84, %c1_85, %c8], %156 {strides = array<i32>} : memref<1x10x10x16xf32, #tpu.memory_space<vmem>>, vector<1x8x8x8xf32>,
    return
  }
  func.func @transform_0(%arg0: i32) -> (i32, i32, i32, i32) {
    %c0_i32 = arith.constant 0 : i32
    %c0_i32_0 = arith.constant 0 : i32
    %c0_i32_1 = arith.constant 0 : i32
    %c0_i32_2 = arith.constant 0 : i32
    return %arg0, %c0_i32, %c0_i32_0, %c0_i32_1 : i32, i32, i32, i32
  }
  func.func @transform_1(%arg0: i32) -> (i32, i32, i32, i32) {
    %c0_i32 = arith.constant 0 : i32
    %c0_i32_0 = arith.constant 0 : i32
    %c0_i32_1 = arith.constant 0 : i32
    %c0_i32_2 = arith.constant 0 : i32
    return %arg0, %c0_i32, %c0_i32_0, %c0_i32_1 : i32, i32, i32, i32
  }
  func.func @transform_2(%arg0: i32) -> (i32, i32, i32, i32) {
    %c0_i32 = arith.constant 0 : i32
    %c0_i32_0 = arith.constant 0 : i32
    %c0_i32_1 = arith.constant 0 : i32
    %c0_i32_2 = arith.constant 0 : i32
    return %arg0, %c0_i32, %c0_i32_0, %c0_i32_1 : i32, i32, i32, i32
  }
  func.func @transform_3(%arg0: i32) -> (i32, i32, i32, i32) {
    %c0_i32 = arith.constant 0 : i32
    %c0_i32_0 = arith.constant 0 : i32
    %c0_i32_1 = arith.constant 0 : i32
    %c0_i32_2 = arith.constant 0 : i32
    return %arg0, %c0_i32, %c0_i32_0, %c0_i32_1 : i32, i32, i32, i32
  }
  func.func @transform_4(%arg0: i32) -> (i32, i32, i32, i32) {
    %c0_i32 = arith.constant 0 : i32
    %c0_i32_0 = arith.constant 0 : i32
    %c0_i32_1 = arith.constant 0 : i32
    %c0_i32_2 = arith.constant 0 : i32
    %c0_i32_3 = arith.constant 0 : i32
    return %c0_i32, %c0_i32_0, %c0_i32_1, %c0_i32_2 : i32, i32, i32, i32
  }
  func.func @transform_5(%arg0: i32) -> (i32, i32) {
    %c0_i32 = arith.constant 0 : i32
    %c0_i32_0 = arith.constant 0 : i32
    %c0_i32_1 = arith.constant 0 : i32
    return %c0_i32, %c0_i32_0 : i32, i32
  }
  func.func @transform_6(%arg0: i32) -> (i32, i32, i32, i32) {
    %c0_i32 = arith.constant 0 : i32
    %c0_i32_0 = arith.constant 0 : i32
    %c0_i32_1 = arith.constant 0 : i32
    %c0_i32_2 = arith.constant 0 : i32
    %c0_i32_3 = arith.constant 0 : i32
    return %c0_i32, %c0_i32_0, %c0_i32_1, %c0_i32_2 : i32, i32, i32, i32
  }
  func.func @transform_7(%arg0: i32) -> (i32, i32) {
    %c0_i32 = arith.constant 0 : i32
    %c0_i32_0 = arith.constant 0 : i32
    %c0_i32_1 = arith.constant 0 : i32
    return %c0_i32, %c0_i32_0 : i32, i32
  }
  func.func @transform_8(%arg0: i32) -> (i32, i32, i32, i32) {
    %c0_i32 = arith.constant 0 : i32
    %c0_i32_0 = arith.constant 0 : i32
    %c0_i32_1 = arith.constant 0 : i32
    %c0_i32_2 = arith.constant 0 : i32
    %c0_i32_3 = arith.constant 0 : i32
    return %c0_i32, %c0_i32_0, %c0_i32_1, %c0_i32_2 : i32, i32, i32, i32
  }
  func.func @transform_9(%arg0: i32) -> (i32, i32) {
    %c0_i32 = arith.constant 0 : i32
    %c0_i32_0 = arith.constant 0 : i32
    %c0_i32_1 = arith.constant 0 : i32
    return %c0_i32, %c0_i32_0 : i32, i32
  }
  func.func @transform_10(%arg0: i32) -> (i32, i32, i32, i32) {
    %c0_i32 = arith.constant 0 : i32
    %c0_i32_0 = arith.constant 0 : i32
    %c0_i32_1 = arith.constant 0 : i32
    %c0_i32_2 = arith.constant 0 : i32
    return %arg0, %c0_i32, %c0_i32_0, %c0_i32_1 : i32, i32, i32, i32
  }
}

</mosaic_0001>

<llo_original>
// kernel: hgstem_forward.3
$region0: #{hgstem_forward.3}
  #allocation0 [shape = 'u32[]', space=smem, size = 0x4, offset = 0x4, fixed_abs, tag = 'smem constant byte address 0x4 - core index']
  #allocation1 [shape = 'u32[72,128]{1,0:T(1,128)}', space=vmem, size = 0x9000, scoped, tag = 'internal scratch']
  %s0 = inlined_call_operand.vmem [shape: f32[2,5,5,16], index: 0, kind: input, shape index: {}]
  %s1 = inlined_call_operand.vmem [shape: f32[2,5,5,16], index: 1, kind: input, shape index: {}]
  %s2 = inlined_call_operand.vmem [shape: f32[2,5,5,16], index: 2, kind: input, shape index: {}]
  %s3 = inlined_call_operand.vmem [shape: f32[2,5,5,16], index: 3, kind: input, shape index: {}]
  %s4 = inlined_call_operand.vmem [shape: f32[3,3,16,8], index: 4, kind: input, shape index: {}]
  %s5 = inlined_call_operand.vmem [shape: f32[1,8], index: 5, kind: input, shape index: {}]
  %s6 = inlined_call_operand.vmem [shape: f32[8,16], index: 6, kind: input, shape index: {}]
  %s7 = inlined_call_operand.vmem [shape: f32[1,16], index: 7, kind: input, shape index: {}]
  %s8 = inlined_call_operand.hbm [shape: f32[2,4,4,16], index: 8, kind: output, shape index: {}]
  %s9 = sld [smem:[#allocation0]]
  $region65: #{hgstem_forward.3} parent=0
    _
  %s11 = ssub.s32 1, %s9
  %s12 = scalar_select 0, %s11, %s9
  $region1: #{hgstem_forward.3} parent=0
    #allocation2 [shape = 'u8[16384]{0}', space=vmem, size = 0x4000, scoped, tag = 'output window, operand 0']
    #allocation3 [shape = 's32[2]{0}', space=sflag, size = 0x8, scoped, tag = 'scoped memory for hgstem_forward.3']
    %13 = vsyncpa [#allocation3], 0
    %s14 = scalar_lea.sflag [#allocation3], 1
    %15 = vsyncpa %s14, 0
    loop: start=0, step=1, limit=4
    $region2: #{hgstem_forward.3} parent=1 // loop_pre_header
      _
    $region3: #{hgstem_forward.3} parent=1 // loop_header
      %s17 = sphi 0, %s21
      %p18 = scmp.ge.s32.totalorder %s17, 4
      %s27 = sphi 0, %s29
      %s30 = sphi 0, %s27
      %s31 = sphi 0, %s30
      %s47 = sphi 0, %s31
      %s53 = sphi 0, %s55
      %s56 = sphi 0, %s53
      %s57 = sphi 0, %s56
      %s73 = sphi 0, %s57
      %s79 = sphi 0, %s81
      %s82 = sphi 0, %s79
      %s83 = sphi 0, %s82
      %s99 = sphi 0, %s83
      %s105 = sphi 0, %s107
      %s108 = sphi 0, %s105
      %s109 = sphi 0, %s108
      %s125 = sphi 0, %s109
      %s129 = sphi 0, %s129
      %s131 = sphi 0, %s129
      %s132 = sphi 0, %s131
      %s146 = sphi 0, %s132
      %s150 = sphi 0, %s150
      %s152 = sphi 0, %s150
      %s153 = sphi 0, %s152
      %s167 = sphi 0, %s153
      %s171 = sphi 0, %s171
      %s173 = sphi 0, %s171
      %s174 = sphi 0, %s173
      %s188 = sphi 0, %s174
      %s192 = sphi 0, %s192
      %s194 = sphi 0, %s192
      %s195 = sphi 0, %s194
      %s209 = sphi 0, %s195
      %s215 = sphi 0, %s217
      %s218 = sphi 0, %s215
      %s219 = sphi 0, %s218
      %s235 = sphi 0, %s219
    $region4: #{hgstem_forward.3} parent=1 // loop_header_branch
      %20 = sbr.rel (%p18) target = $region8
    $region5: #{hgstem_forward.3} parent=1 // loop_body
      %s22 = ssub.s32 %s17, 1
      %s23 = ssub.s32 %s17, 2
      %s24 = sadd.s32 %s17, 1
      %s25 = ssub.s32 %s17, %s24
      %p26 = scmp.eq.s32.totalorder %s25, 0
      %s28 = sadd.s32 %s27, 1
      %s29 = scalar_select %p26, %s27, %s28
      %p32 = pneg %p26
      %p33 = scmp.eq.s32.totalorder %s17, 1
      %p34 = por %p32, %p33
      %p35 = scmp.ne.s32.totalorder %s27, %s30
      %p36 = scmp.eq.s32.totalorder %s17, 0
      %p37 = por %p35, %p36
      %p38 = scmp.ne.s32.totalorder %s27, %s30
      %p39 = scmp.eq.s32.totalorder %s22, 1
      %p40 = por %p38, %p39
      %p41 = scmp.ne.s32.totalorder %s30, %s31
      %p42 = scmp.eq.s32.totalorder %s22, 0
      %p43 = por %p41, %p42
      %p44 = scmp.ne.s32.totalorder %s30, %s31
      %p45 = scmp.eq.s32.totalorder %s23, 1
      %p46 = por %p44, %p45
      %p48 = scmp.ne.s32.totalorder %s31, %s47
      %p49 = scmp.eq.s32.totalorder %s23, 0
      %p50 = por %p48, %p49
      %s51 = ssub.s32 %s17, %s24
      %p52 = scmp.eq.s32.totalorder %s51, 0
      %s54 = sadd.s32 %s53, 1
      %s55 = scalar_select %p52, %s53, %s54
      %p58 = pneg %p52
      %p59 = scmp.eq.s32.totalorder %s17, 1
      %p60 = por %p58, %p59
      %p61 = scmp.ne.s32.totalorder %s53, %s56
      %p62 = scmp.eq.s32.totalorder %s17, 0
      %p63 = por %p61, %p62
      %p64 = scmp.ne.s32.totalorder %s53, %s56
      %p65 = scmp.eq.s32.totalorder %s22, 1
      %p66 = por %p64, %p65
      %p67 = scmp.ne.s32.totalorder %s56, %s57
      %p68 = scmp.eq.s32.totalorder %s22, 0
      %p69 = por %p67, %p68
      %p70 = scmp.ne.s32.totalorder %s56, %s57
      %p71 = scmp.eq.s32.totalorder %s23, 1
      %p72 = por %p70, %p71
      %p74 = scmp.ne.s32.totalorder %s57, %s73
      %p75 = scmp.eq.s32.totalorder %s23, 0
      %p76 = por %p74, %p75
      %s77 = ssub.s32 %s17, %s24
      %p78 = scmp.eq.s32.totalorder %s77, 0
      %s80 = sadd.s32 %s79, 1
      %s81 = scalar_select %p78, %s79, %s80
      %p84 = pneg %p78
      %p85 = scmp.eq.s32.totalorder %s17, 1
      %p86 = por %p84, %p85
      %p87 = scmp.ne.s32.totalorder %s79, %s82
      %p88 = scmp.eq.s32.totalorder %s17, 0
      %p89 = por %p87, %p88
      %p90 = scmp.ne.s32.totalorder %s79, %s82
      %p91 = scmp.eq.s32.totalorder %s22, 1
      %p92 = por %p90, %p91
      %p93 = scmp.ne.s32.totalorder %s82, %s83
      %p94 = scmp.eq.s32.totalorder %s22, 0
      %p95 = por %p93, %p94
      %p96 = scmp.ne.s32.totalorder %s82, %s83
      %p97 = scmp.eq.s32.totalorder %s23, 1
      %p98 = por %p96, %p97
      %p100 = scmp.ne.s32.totalorder %s83, %s99
      %p101 = scmp.eq.s32.totalorder %s23, 0
      %p102 = por %p100, %p101
      %s103 = ssub.s32 %s17, %s24
      %p104 = scmp.eq.s32.totalorder %s103, 0
      %s106 = sadd.s32 %s105, 1
      %s107 = scalar_select %p104, %s105, %s106
      %p110 = pneg %p104
      %p111 = scmp.eq.s32.totalorder %s17, 1
      %p112 = por %p110, %p111
      %p113 = scmp.ne.s32.totalorder %s105, %s108
      %p114 = scmp.eq.s32.totalorder %s17, 0
      %p115 = por %p113, %p114
      %p116 = scmp.ne.s32.totalorder %s105, %s108
      %p117 = scmp.eq.s32.totalorder %s22, 1
      %p118 = por %p116, %p117
      %p119 = scmp.ne.s32.totalorder %s108, %s109
      %p120 = scmp.eq.s32.totalorder %s22, 0
      %p121 = por %p119, %p120
      %p122 = scmp.ne.s32.totalorder %s108, %s109
      %p123 = scmp.eq.s32.totalorder %s23, 1
      %p124 = por %p122, %p123
      %p126 = scmp.ne.s32.totalorder %s109, %s125
      %p127 = scmp.eq.s32.totalorder %s23, 0
      %p128 = por %p126, %p127
      %s130 = sadd.s32 %s129, 1
      %p133 = scmp.eq.s32.totalorder %s17, 1
      %p134 = scmp.ne.s32.totalorder %s129, %s131
      %p135 = scmp.eq.s32.totalorder %s17, 0
      %p136 = por %p134, %p135
      %p137 = scmp.ne.s32.totalorder %s129, %s131
      %p138 = scmp.eq.s32.totalorder %s22, 1
      %p139 = por %p137, %p138
      %p140 = scmp.ne.s32.totalorder %s131, %s132
      %p141 = scmp.eq.s32.totalorder %s22, 0
      %p142 = por %p140, %p141
      %p143 = scmp.ne.s32.totalorder %s131, %s132
      %p144 = scmp.eq.s32.totalorder %s23, 1
      %p145 = por %p143, %p144
      %p147 = scmp.ne.s32.totalorder %s132, %s146
      %p148 = scmp.eq.s32.totalorder %s23, 0
      %p149 = por %p147, %p148
      %s151 = sadd.s32 %s150, 1
      %p154 = scmp.eq.s32.totalorder %s17, 1
      %p155 = scmp.ne.s32.totalorder %s150, %s152
      %p156 = scmp.eq.s32.totalorder %s17, 0
      %p157 = por %p155, %p156
      %p158 = scmp.ne.s32.totalorder %s150, %s152
      %p159 = scmp.eq.s32.totalorder %s22, 1
      %p160 = por %p158, %p159
      %p161 = scmp.ne.s32.totalorder %s152, %s153
      %p162 = scmp.eq.s32.totalorder %s22, 0
      %p163 = por %p161, %p162
      %p164 = scmp.ne.s32.totalorder %s152, %s153
      %p165 = scmp.eq.s32.totalorder %s23, 1
      %p166 = por %p164, %p165
      %p168 = scmp.ne.s32.totalorder %s153, %s167
      %p169 = scmp.eq.s32.totalorder %s23, 0
      %p170 = por %p168, %p169
      %s172 = sadd.s32 %s171, 1
      %p175 = scmp.eq.s32.totalorder %s17, 1
      %p176 = scmp.ne.s32.totalorder %s171, %s173
      %p177 = scmp.eq.s32.totalorder %s17, 0
      %p178 = por %p176, %p177
      %p179 = scmp.ne.s32.totalorder %s171, %s173
      %p180 = scmp.eq.s32.totalorder %s22, 1
      %p181 = por %p179, %p180
      %p182 = scmp.ne.s32.totalorder %s173, %s174
      %p183 = scmp.eq.s32.totalorder %s22, 0
      %p184 = por %p182, %p183
      %p185 = scmp.ne.s32.totalorder %s173, %s174
      %p186 = scmp.eq.s32.totalorder %s23, 1
      %p187 = por %p185, %p186
      %p189 = scmp.ne.s32.totalorder %s174, %s188
      %p190 = scmp.eq.s32.totalorder %s23, 0
      %p191 = por %p189, %p190
      %s193 = sadd.s32 %s192, 1
      %p196 = scmp.eq.s32.totalorder %s17, 1
      %p197 = scmp.ne.s32.totalorder %s192, %s194
      %p198 = scmp.eq.s32.totalorder %s17, 0
      %p199 = por %p197, %p198
      %p200 = scmp.ne.s32.totalorder %s192, %s194
      %p201 = scmp.eq.s32.totalorder %s22, 1
      %p202 = por %p200, %p201
      %p203 = scmp.ne.s32.totalorder %s194, %s195
      %p204 = scmp.eq.s32.totalorder %s22, 0
      %p205 = por %p203, %p204
      %p206 = scmp.ne.s32.totalorder %s194, %s195
      %p207 = scmp.eq.s32.totalorder %s23, 1
      %p208 = por %p206, %p207
      %p210 = scmp.ne.s32.totalorder %s195, %s209
      %p211 = scmp.eq.s32.totalorder %s23, 0
      %p212 = por %p210, %p211
      %s213 = ssub.s32 %s17, %s24
      %p214 = scmp.eq.s32.totalorder %s213, 0
      %s216 = sadd.s32 %s215, 1
      %s217 = scalar_select %p214, %s215, %s216
      %p220 = pneg %p214
      %p221 = scmp.eq.s32.totalorder %s17, 1
      %p222 = por %p220, %p221
      %p223 = scmp.ne.s32.totalorder %s215, %s218
      %p224 = scmp.eq.s32.totalorder %s17, 0
      %p225 = por %p223, %p224
      %p226 = scmp.ne.s32.totalorder %s215, %s218
      %p227 = scmp.eq.s32.totalorder %s22, 1
      %p228 = por %p226, %p227
      %p229 = scmp.ne.s32.totalorder %s218, %s219
      %p230 = scmp.eq.s32.totalorder %s22, 0
      %p231 = por %p229, %p230
      %p232 = scmp.ne.s32.totalorder %s218, %s219
      %p233 = scmp.eq.s32.totalorder %s23, 1
      %p234 = por %p232, %p233
      %p236 = scmp.ne.s32.totalorder %s219, %s235
      %p237 = scmp.eq.s32.totalorder %s23, 0
      %p238 = por %p236, %p237
      %p239 = scmp.le.s32.totalorder 1, %s17
      %p240 = scmp.lt.s32.totalorder %s17, 3
      %p241 = pnand %p239, %p240
      %p242 = pneg %p241
      // Predicated region
      $region9: #{hgstem_forward.3} parent=5 // pred_check
        _
      $region10: #{hgstem_forward.3} parent=5 // pred_check_branch
        %244 = sbr.rel (%p241) target = $region12
      $region11: #{hgstem_forward.3} parent=5 // pred_region
        %s245 = ssub.s32 %s17, 1
        // Predicated region
        $region13: #{hgstem_forward.3} parent=11 // pred_check
          %p246 = pneg %p142
        $region14: #{hgstem_forward.3} parent=11 // pred_check_branch
          %248 = sbr.rel (%p246) target = $region16
        $region15: #{hgstem_forward.3} parent=11 // pred_region
          _
        $region16: #{hgstem_forward.3} parent=11 // pred_fallthru
          _
        // Predicated region
        $region17: #{hgstem_forward.3} parent=11 // pred_check
          %p249 = pneg %p163
        $region18: #{hgstem_forward.3} parent=11 // pred_check_branch
          %251 = sbr.rel (%p249) target = $region20
        $region19: #{hgstem_forward.3} parent=11 // pred_region
          _
        $region20: #{hgstem_forward.3} parent=11 // pred_fallthru
          _
        // Predicated region
        $region21: #{hgstem_forward.3} parent=11 // pred_check
          %p252 = pneg %p184
        $region22: #{hgstem_forward.3} parent=11 // pred_check_branch
          %254 = sbr.rel (%p252) target = $region24
        $region23: #{hgstem_forward.3} parent=11 // pred_region
          _
        $region24: #{hgstem_forward.3} parent=11 // pred_fallthru
          _
        // Predicated region
        $region25: #{hgstem_forward.3} parent=11 // pred_check
          %p255 = pneg %p205
        $region26: #{hgstem_forward.3} parent=11 // pred_check_branch
          %257 = sbr.rel (%p255) target = $region28
        $region27: #{hgstem_forward.3} parent=11 // pred_region
          _
        $region28: #{hgstem_forward.3} parent=11 // pred_fallthru
          _
      $region12: #{hgstem_forward.3} parent=5 // pred_fallthru
        _
      %p258 = scmp.lt.s32.totalorder %s17, 2
      // Predicated region
      $region29: #{hgstem_forward.3} parent=5 // pred_check
        %p259 = pneg %p258
      $region30: #{hgstem_forward.3} parent=5 // pred_check_branch
        %261 = sbr.rel (%p259) target = $region32
      $region31: #{hgstem_forward.3} parent=5 // pred_region
        // Predicated region
        $region33: #{hgstem_forward.3} parent=31 // pred_check
          %p262 = pneg %p37
        $region34: #{hgstem_forward.3} parent=31 // pred_check_branch
          %264 = sbr.rel (%p262) target = $region36
        $region35: #{hgstem_forward.3} parent=31 // pred_region
          %p265 = scmp.lt.s32.totalorder %s17, 1
          %s266 = scalar_select %p265, %s17, 1
          %s267 = smul.addr %s266, 5
          %s268 = smul.addr %s267, 8
          %s269 = scalar_lea.vmem %s0, %s268
        $region36: #{hgstem_forward.3} parent=31 // pred_fallthru
          _
        // Predicated region
        $region37: #{hgstem_forward.3} parent=31 // pred_check
          %p270 = pneg %p63
        $region38: #{hgstem_forward.3} parent=31 // pred_check_branch
          %272 = sbr.rel (%p270) target = $region40
        $region39: #{hgstem_forward.3} parent=31 // pred_region
          %p273 = scmp.lt.s32.totalorder %s17, 1
          %s274 = scalar_select %p273, %s17, 1
          %s275 = smul.addr %s274, 5
          %s276 = smul.addr %s275, 8
          %s277 = scalar_lea.vmem %s1, %s276
        $region40: #{hgstem_forward.3} parent=31 // pred_fallthru
          _
        // Predicated region
        $region41: #{hgstem_forward.3} parent=31 // pred_check
          %p278 = pneg %p89
        $region42: #{hgstem_forward.3} parent=31 // pred_check_branch
          %280 = sbr.rel (%p278) target = $region44
        $region43: #{hgstem_forward.3} parent=31 // pred_region
          %p281 = scmp.lt.s32.totalorder %s17, 1
          %s282 = scalar_select %p281, %s17, 1
          %s283 = smul.addr %s282, 5
          %s284 = smul.addr %s283, 8
          %s285 = scalar_lea.vmem %s2, %s284
        $region44: #{hgstem_forward.3} parent=31 // pred_fallthru
          _
        // Predicated region
        $region45: #{hgstem_forward.3} parent=31 // pred_check
          %p286 = pneg %p115
        $region46: #{hgstem_forward.3} parent=31 // pred_check_branch
          %288 = sbr.rel (%p286) target = $region48
        $region47: #{hgstem_forward.3} parent=31 // pred_region
          %p289 = scmp.lt.s32.totalorder %s17, 1
          %s290 = scalar_select %p289, %s17, 1
          %s291 = smul.addr %s290, 5
          %s292 = smul.addr %s291, 8
          %s293 = scalar_lea.vmem %s3, %s292
        $region48: #{hgstem_forward.3} parent=31 // pred_fallthru
          _
      $region32: #{hgstem_forward.3} parent=5 // pred_fallthru
        _
      %p294 = scmp.le.s32.totalorder 1, %s17
      %p295 = scmp.lt.s32.totalorder %s17, 3
      %p296 = pnand %p294, %p295
      %p297 = pneg %p296
      // Predicated region
      $region49: #{hgstem_forward.3} parent=5 // pred_check
        _
      $region50: #{hgstem_forward.3} parent=5 // pred_check_branch
        %299 = sbr.rel (%p296) target = $region52
      $region51: #{hgstem_forward.3} parent=5 // pred_region
        %s300 = ssub.s32 %s17, 1
        %p301 = scmp.lt.s32.totalorder %s22, 1
        %s302 = scalar_select %p301, %s22, 1
        %s303 = smul.addr %s302, 5
        %s304 = smul.addr %s303, 8
        %s305 = scalar_lea.vmem %s0, %s304
        %p306 = pneg %p43
        %p307 = pneg %p40
        %p308 = scmp.lt.s32.totalorder %s22, 1
        %s309 = scalar_select %p308, %s22, 1
        %s310 = smul.addr %s309, 5
        %s311 = smul.addr %s310, 8
        %s312 = scalar_lea.vmem %s1, %s311
        %p313 = pneg %p69
        %p314 = pneg %p66
        %p315 = scmp.lt.s32.totalorder %s22, 1
        %s316 = scalar_select %p315, %s22, 1
        %s317 = smul.addr %s316, 5
        %s318 = smul.addr %s317, 8
        %s319 = scalar_lea.vmem %s2, %s318
        %p320 = pneg %p95
        %p321 = pneg %p92
        %p322 = scmp.lt.s32.totalorder %s22, 1
        %s323 = scalar_select %p322, %s22, 1
        %s324 = smul.addr %s323, 5
        %s325 = smul.addr %s324, 8
        %s326 = scalar_lea.vmem %s3, %s325
        %p327 = pneg %p121
        %p328 = pneg %p118
        %p329 = pneg %p142
        %p330 = pneg %p139
        %p331 = pneg %p163
        %p332 = pneg %p160
        %p333 = pneg %p184
        %p334 = pneg %p181
        %p335 = pneg %p205
        %p336 = pneg %p202
        %p337 = pneg %p231
        %p338 = pneg %p228
        %s339 = sand.u32 %s218, 1
        %s340 = scalar_lea.sflag [#allocation3], %s339
        %s341 = sand.u32 %s218, 1
        %s342 = smul.addr %s341, 16
        %s343 = scalar_lea.vmem [#allocation2], %s342
        %p344 = scmp.lt.s32.totalorder %s22, 1
        %s345 = scalar_select %p344, %s22, 1
        %s346 = smul.addr %s345, 5
        %s347 = smul.addr %s346, 8
        %s348 = scalar_lea.vmem %s0, %s347
        %p349 = scmp.lt.s32.totalorder %s22, 1
        %s350 = scalar_select %p349, %s22, 1
        %s351 = smul.addr %s350, 5
        %s352 = smul.addr %s351, 8
        %s353 = scalar_lea.vmem %s1, %s352
        %p354 = scmp.lt.s32.totalorder %s22, 1
        %s355 = scalar_select %p354, %s22, 1
        %s356 = smul.addr %s355, 5
        %s357 = smul.addr %s356, 8
        %s358 = scalar_lea.vmem %s2, %s357
        %p359 = scmp.lt.s32.totalorder %s22, 1
        %s360 = scalar_select %p359, %s22, 1
        %s361 = smul.addr %s360, 5
        %s362 = smul.addr %s361, 8
        %s363 = scalar_lea.vmem %s3, %s362
        %v364 = vld [vmem:[%s348] sm:$0x1f]
        %v365 = vld [vmem:[%s348 + $0x8] sm:$0x1f]
        %v366 = vld [vmem:[%s348 + $0x10] sm:$0x1f]
        %v367 = vld [vmem:[%s348 + $0x18] sm:$0x1f]
        %v368 = vld [vmem:[%s348 + $0x20] sm:$0x1f]
        %v369 = vld [vmem:[%s353] sm:$0x1f]
        %v370 = vld [vmem:[%s353 + $0x8] sm:$0x1f]
        %v371 = vld [vmem:[%s353 + $0x10] sm:$0x1f]
        %v372 = vld [vmem:[%s353 + $0x18] sm:$0x1f]
        %v373 = vld [vmem:[%s353 + $0x20] sm:$0x1f]
        %v374 = vld [vmem:[%s358] sm:$0x1f]
        %v375 = vld [vmem:[%s358 + $0x8] sm:$0x1f]
        %v376 = vld [vmem:[%s358 + $0x10] sm:$0x1f]
        %v377 = vld [vmem:[%s358 + $0x18] sm:$0x1f]
        %v378 = vld [vmem:[%s363] sm:$0x1f]
        %v379 = vld [vmem:[%s363 + $0x8] sm:$0x1f]
        %v380 = vld [vmem:[%s363 + $0x10] sm:$0x1f]
        %v381 = vld [vmem:[%s363 + $0x18] sm:$0x1f]
        %v382 = vld [vmem:[%s4] sm:$0xff]
        %v383 = vld [vmem:[%s4 + $0x8] sm:$0xff]
        %v384 = vld [vmem:[%s4 + $0x10] sm:$0xff]
        %v385 = vld [vmem:[%s4 + $0x18] sm:$0xff]
        %v386 = vld [vmem:[%s4 + $0x20] sm:$0xff]
        %v387 = vld [vmem:[%s4 + $0x28] sm:$0xff]
        %v388 = vld [vmem:[%s4 + $0x30] sm:$0xff]
        %v389 = vld [vmem:[%s4 + $0x38] sm:$0xff]
        %v390 = vld [vmem:[%s4 + $0x40] sm:$0xff]
        %v391 = vld [vmem:[%s4 + $0x48] sm:$0xff]
        %v392 = vld [vmem:[%s4 + $0x50] sm:$0xff]
        %v393 = vld [vmem:[%s4 + $0x58] sm:$0xff]
        %v394 = vld [vmem:[%s4 + $0x60] sm:$0xff]
        %v395 = vld [vmem:[%s4 + $0x68] sm:$0xff]
        %v396 = vld [vmem:[%s4 + $0x70] sm:$0xff]
        %v397 = vld [vmem:[%s4 + $0x78] sm:$0xff]
        %v398 = vld [vmem:[%s4 + $0x80] sm:$0xff]
        %v399 = vld [vmem:[%s4 + $0x88] sm:$0xff]
        %404 = vst [vmem:[#allocation1] ss:$2 sm:$0xff] %v369
        %s405 = scalar_lea.vmem [#allocation1], 1
        %406 = vst [vmem:[%s405] ss:$2 sm:$0xff] %v370
        %s407 = scalar_lea.vmem [#allocation1], 16
        %408 = vst [vmem:[%s407] ss:$2 sm:$0xff] %v371
        %s409 = scalar_lea.vmem [#allocation1], 17
        %410 = vst [vmem:[%s409] ss:$2 sm:$0xff] %v372
        %v411 = vld.sshfl [vmem:[#allocation1] sm:$0xff pattern:$0x75316420]
        %v412 = vld.sshfl [vmem:[#allocation1 + $0x10] sm:$0xff pattern:$0x75316420]
        %vm413 = vcmask 130048
        %v414 = vsel %vm413, %v411, 0
        %v416 = vsel %vm413, %v412, 0
        %418 = vmatpush.msra.mxu0 0.0
        %419 = vmatpush.msra.mxu0 0.0
        %420 = vmatpush.msra.mxu0 0.0
        %421 = vmatpush.msra.mxu0 0.0
        %422 = vmatpush.msra.mxu0 0.0
        %423 = vmatpush.msra.mxu0 0.0
        %424 = vmatpush.msra.mxu0 0.0
        %425 = vmatpush.msra.mxu0 0.0
        %426 = vmatpush.msra.mxu0 0.0
        %427 = vmatpush.msra.mxu0 0.0
        %428 = vmatpush.msra.mxu0 0.0
        %429 = vmatpush.msra.mxu0 0.0
        %430 = vmatpush.msra.mxu0 0.0
        %431 = vmatpush.msra.mxu0 0.0
        %432 = vmatpush.msra.mxu0 %v385
        %433 = vmatpush.msra.mxu0 %v384
        %434 = vmatmul.f32.gmra.mxu0 %v414
        %v435 = vpop.f32.mrf.mxu0
        %v436 = vadd.f32 0.0, %v435
        %437 = vmatmul.f32.gmra.mxu0 %v416
        %v438 = vpop.f32.mrf.mxu0
        %v439 = vadd.f32 0.0, %v438
        %440 = vdwg.mxu0
        %445 = vst [vmem:[#allocation1] ss:$2 sm:$0xff] %v364
        %s446 = scalar_lea.vmem [#allocation1], 1
        %447 = vst [vmem:[%s446] ss:$2 sm:$0xff] %v365
        %s448 = scalar_lea.vmem [#allocation1], 16
        %449 = vst [vmem:[%s448] ss:$2 sm:$0xff] %v366
        %s450 = scalar_lea.vmem [#allocation1], 17
        %451 = vst [vmem:[%s450] ss:$2 sm:$0xff] %v367
        %v452 = vld.sshfl [vmem:[#allocation1] sm:$0xff pattern:$0x75316420]
        %v453 = vld.sshfl [vmem:[#allocation1 + $0x10] sm:$0xff pattern:$0x75316420]
        %v454 = vsel %vm413, %v452, 0
        %v456 = vsel %vm413, %v453, 0
        %458 = vmatpush.msra.mxu0 0.0
        %459 = vmatpush.msra.mxu0 0.0
        %460 = vmatpush.msra.mxu0 0.0
        %461 = vmatpush.msra.mxu0 0.0
        %462 = vmatpush.msra.mxu0 0.0
        %463 = vmatpush.msra.mxu0 0.0
        %464 = vmatpush.msra.mxu0 0.0
        %465 = vmatpush.msra.mxu0 0.0
        %466 = vmatpush.msra.mxu0 0.0
        %467 = vmatpush.msra.mxu0 0.0
        %468 = vmatpush.msra.mxu0 0.0
        %469 = vmatpush.msra.mxu0 0.0
        %470 = vmatpush.msra.mxu0 0.0
        %471 = vmatpush.msra.mxu0 0.0
        %472 = vmatpush.msra.mxu0 %v383
        %473 = vmatpush.msra.mxu0 %v382
        %474 = vmatmul.f32.gmra.mxu0 %v454
        %v475 = vpop.f32.mrf.mxu0
        %v476 = vadd.f32 %v436, %v475
        %477 = vmatmul.f32.gmra.mxu0 %v456
        %v478 = vpop.f32.mrf.mxu0
        %v479 = vadd.f32 %v439, %v478
        %480 = vdwg.mxu0
        %v481 = vrot.slane %v364, 4
        %v482 = vrot.slane %v365, 4
        %v483 = vrot.slane %v366, 4
        %v484 = vrot.slane %v367, 4
        %vm485 = vcmask 1042432
        %vm486 = vcmask 1046532
        %vm487 = vmor %vm485, %vm486
        %v488 = vrot.slane %v364, 5
        %v489 = vrot.slane %v488, 4
        %v490 = vrot.slane %v481, 5
        %v491 = vsel %vm487, %v489, %v490
        %v492 = vrot.slane %v365, 5
        %v493 = vrot.slane %v492, 4
        %v494 = vrot.slane %v482, 5
        %v495 = vsel %vm487, %v493, %v494
        %v496 = vrot.slane %v366, 5
        %v497 = vrot.slane %v496, 4
        %v498 = vrot.slane %v483, 5
        %v499 = vsel %vm487, %v497, %v498
        %v500 = vrot.slane %v367, 5
        %v501 = vrot.slane %v500, 4
        %v502 = vrot.slane %v484, 5
        %v503 = vsel %vm487, %v501, %v502
        %504 = vst [vmem:[#allocation1] ss:$2 sm:$0xff] %v491
        %s505 = scalar_lea.vmem [#allocation1], 1
        %506 = vst [vmem:[%s505] ss:$2 sm:$0xff] %v495
        %s507 = scalar_lea.vmem [#allocation1], 16
        %508 = vst [vmem:[%s507] ss:$2 sm:$0xff] %v499
        %s509 = scalar_lea.vmem [#allocation1], 17
        %510 = vst [vmem:[%s509] ss:$2 sm:$0xff] %v503
        %v511 = vld.sshfl [vmem:[#allocation1] sm:$0xff pattern:$0x75316420]
        %v512 = vld.sshfl [vmem:[#allocation1 + $0x10] sm:$0xff pattern:$0x75316420]
        %v513 = vsel %vm413, %v511, 0
        %v515 = vsel %vm413, %v512, 0
        %517 = vmatpush.msra.mxu0 0.0
        %518 = vmatpush.msra.mxu0 0.0
        %519 = vmatpush.msra.mxu0 0.0
        %520 = vmatpush.msra.mxu0 0.0
        %521 = vmatpush.msra.mxu0 0.0
        %522 = vmatpush.msra.mxu0 0.0
        %523 = vmatpush.msra.mxu0 0.0
        %524 = vmatpush.msra.mxu0 0.0
        %525 = vmatpush.msra.mxu0 0.0
        %526 = vmatpush.msra.mxu0 0.0
        %527 = vmatpush.msra.mxu0 0.0
        %528 = vmatpush.msra.mxu0 0.0
        %529 = vmatpush.msra.mxu0 0.0
        %530 = vmatpush.msra.mxu0 0.0
        %531 = vmatpush.msra.mxu0 %v387
        %532 = vmatpush.msra.mxu0 %v386
        %533 = vmatmul.f32.gmra.mxu0 %v513
        %v534 = vpop.f32.mrf.mxu0
        %v535 = vadd.f32 0.0, %v534
        %536 = vmatmul.f32.gmra.mxu0 %v515
        %v537 = vpop.f32.mrf.mxu0
        %v538 = vadd.f32 0.0, %v537
        %539 = vdwg.mxu0
        %v540 = vadd.f32 %v476, %v535
        %v541 = vadd.f32 %v479, %v538
        %546 = vst [vmem:[#allocation1] ss:$2 sm:$0xff] %v374
        %s547 = scalar_lea.vmem [#allocation1], 1
        %548 = vst [vmem:[%s547] ss:$2 sm:$0xff] %v375
        %s549 = scalar_lea.vmem [#allocation1], 16
        %550 = vst [vmem:[%s549] ss:$2 sm:$0xff] %v376
        %s551 = scalar_lea.vmem [#allocation1], 17
        %552 = vst [vmem:[%s551] ss:$2 sm:$0xff] %v377
        %v553 = vld.sshfl [vmem:[#allocation1] sm:$0xff pattern:$0x75316420]
        %v554 = vld.sshfl [vmem:[#allocation1 + $0x10] sm:$0xff pattern:$0x75316420]
        %v555 = vsel %vm413, %v553, 0
        %v557 = vsel %vm413, %v554, 0
        %559 = vmatpush.msra.mxu0 0.0
        %560 = vmatpush.msra.mxu0 0.0
        %561 = vmatpush.msra.mxu0 0.0
        %562 = vmatpush.msra.mxu0 0.0
        %563 = vmatpush.msra.mxu0 0.0
        %564 = vmatpush.msra.mxu0 0.0
        %565 = vmatpush.msra.mxu0 0.0
        %566 = vmatpush.msra.mxu0 0.0
        %567 = vmatpush.msra.mxu0 0.0
        %568 = vmatpush.msra.mxu0 0.0
        %569 = vmatpush.msra.mxu0 0.0
        %570 = vmatpush.msra.mxu0 0.0
        %571 = vmatpush.msra.mxu0 0.0
        %572 = vmatpush.msra.mxu0 0.0
        %573 = vmatpush.msra.mxu0 %v389
        %574 = vmatpush.msra.mxu0 %v388
        %575 = vmatmul.f32.gmra.mxu0 %v555
        %v576 = vpop.f32.mrf.mxu0
        %v577 = vadd.f32 0.0, %v576
        %578 = vmatmul.f32.gmra.mxu0 %v557
        %v579 = vpop.f32.mrf.mxu0
        %v580 = vadd.f32 0.0, %v579
        %581 = vdwg.mxu0
        %v582 = vadd.f32 %v540, %v577
        %v583 = vadd.f32 %v541, %v580
        %588 = vst [vmem:[#allocation1] ss:$2 sm:$0xff] %v378
        %s589 = scalar_lea.vmem [#allocation1], 1
        %590 = vst [vmem:[%s589] ss:$2 sm:$0xff] %v379
        %s591 = scalar_lea.vmem [#allocation1], 16
        %592 = vst [vmem:[%s591] ss:$2 sm:$0xff] %v380
        %s593 = scalar_lea.vmem [#allocation1], 17
        %594 = vst [vmem:[%s593] ss:$2 sm:$0xff] %v381
        %v595 = vld.sshfl [vmem:[#allocation1] sm:$0xff pattern:$0x75316420]
        %v596 = vld.sshfl [vmem:[#allocation1 + $0x10] sm:$0xff pattern:$0x75316420]
        %v597 = vsel %vm413, %v595, 0
        %v599 = vsel %vm413, %v596, 0
        %601 = vmatpush.msra.mxu0 0.0
        %602 = vmatpush.msra.mxu0 0.0
        %603 = vmatpush.msra.mxu0 0.0
        %604 = vmatpush.msra.mxu0 0.0
        %605 = vmatpush.msra.mxu0 0.0
        %606 = vmatpush.msra.mxu0 0.0
        %607 = vmatpush.msra.mxu0 0.0
        %608 = vmatpush.msra.mxu0 0.0
        %609 = vmatpush.msra.mxu0 0.0
        %610 = vmatpush.msra.mxu0 0.0
        %611 = vmatpush.msra.mxu0 0.0
        %612 = vmatpush.msra.mxu0 0.0
        %613 = vmatpush.msra.mxu0 0.0
        %614 = vmatpush.msra.mxu0 0.0
        %615 = vmatpush.msra.mxu0 %v391
        %616 = vmatpush.msra.mxu0 %v390
        %617 = vmatmul.f32.gmra.mxu0 %v597
        %v618 = vpop.f32.mrf.mxu0
        %v619 = vadd.f32 0.0, %v618
        %620 = vmatmul.f32.gmra.mxu0 %v599
        %v621 = vpop.f32.mrf.mxu0
        %v622 = vadd.f32 0.0, %v621
        %623 = vdwg.mxu0
        %v624 = vadd.f32 %v582, %v619
        %v625 = vadd.f32 %v583, %v622
        %v626 = vrot.slane %v374, 4
        %v627 = vrot.slane %v375, 4
        %v628 = vrot.slane %v376, 4
        %v629 = vrot.slane %v377, 4
        %v630 = vrot.slane %v374, 5
        %v631 = vrot.slane %v630, 4
        %v632 = vrot.slane %v626, 5
        %v633 = vsel %vm487, %v631, %v632
        %v634 = vrot.slane %v375, 5
        %v635 = vrot.slane %v634, 4
        %v636 = vrot.slane %v627, 5
        %v637 = vsel %vm487, %v635, %v636
        %v638 = vrot.slane %v376, 5
        %v639 = vrot.slane %v638, 4
        %v640 = vrot.slane %v628, 5
        %v641 = vsel %vm487, %v639, %v640
        %v642 = vrot.slane %v377, 5
        %v643 = vrot.slane %v642, 4
        %v644 = vrot.slane %v629, 5
        %v645 = vsel %vm487, %v643, %v644
        %646 = vst [vmem:[#allocation1] ss:$2 sm:$0xff] %v633
        %s647 = scalar_lea.vmem [#allocation1], 1
        %648 = vst [vmem:[%s647] ss:$2 sm:$0xff] %v637
        %s649 = scalar_lea.vmem [#allocation1], 16
        %650 = vst [vmem:[%s649] ss:$2 sm:$0xff] %v641
        %s651 = scalar_lea.vmem [#allocation1], 17
        %652 = vst [vmem:[%s651] ss:$2 sm:$0xff] %v645
        %v653 = vld.sshfl [vmem:[#allocation1] sm:$0xff pattern:$0x75316420]
        %v654 = vld.sshfl [vmem:[#allocation1 + $0x10] sm:$0xff pattern:$0x75316420]
        %v655 = vsel %vm413, %v653, 0
        %v657 = vsel %vm413, %v654, 0
        %659 = vmatpush.msra.mxu0 0.0
        %660 = vmatpush.msra.mxu0 0.0
        %661 = vmatpush.msra.mxu0 0.0
        %662 = vmatpush.msra.mxu0 0.0
        %663 = vmatpush.msra.mxu0 0.0
        %664 = vmatpush.msra.mxu0 0.0
        %665 = vmatpush.msra.mxu0 0.0
        %666 = vmatpush.msra.mxu0 0.0
        %667 = vmatpush.msra.mxu0 0.0
        %668 = vmatpush.msra.mxu0 0.0
        %669 = vmatpush.msra.mxu0 0.0
        %670 = vmatpush.msra.mxu0 0.0
        %671 = vmatpush.msra.mxu0 0.0
        %672 = vmatpush.msra.mxu0 0.0
        %673 = vmatpush.msra.mxu0 %v393
        %674 = vmatpush.msra.mxu0 %v392
        %675 = vmatmul.f32.gmra.mxu0 %v655
        %v676 = vpop.f32.mrf.mxu0
        %v677 = vadd.f32 0.0, %v676
        %678 = vmatmul.f32.gmra.mxu0 %v657
        %v679 = vpop.f32.mrf.mxu0
        %v680 = vadd.f32 0.0, %v679
        %681 = vdwg.mxu0
        %v682 = vadd.f32 %v624, %v677
        %v683 = vadd.f32 %v625, %v680
        %685 = vst [vmem:[#allocation1] ss:$2 sm:$0xff] %v365
        %s686 = scalar_lea.vmem [#allocation1], 1
        %687 = vst [vmem:[%s686] ss:$2 sm:$0xff] %v366
        %s688 = scalar_lea.vmem [#allocation1], 16
        %689 = vst [vmem:[%s688] ss:$2 sm:$0xff] %v367
        %s690 = scalar_lea.vmem [#allocation1], 17
        %691 = vst [vmem:[%s690] ss:$2 sm:$0xff] %v368
        %v692 = vld.sshfl [vmem:[#allocation1] sm:$0xff pattern:$0x75316420]
        %v693 = vld.sshfl [vmem:[#allocation1 + $0x10] sm:$0xff pattern:$0x75316420]
        %v694 = vsel %vm413, %v692, 0
        %v696 = vsel %vm413, %v693, 0
        %698 = vmatpush.msra.mxu0 0.0
        %699 = vmatpush.msra.mxu0 0.0
        %700 = vmatpush.msra.mxu0 0.0
        %701 = vmatpush.msra.mxu0 0.0
        %702 = vmatpush.msra.mxu0 0.0
        %703 = vmatpush.msra.mxu0 0.0
        %704 = vmatpush.msra.mxu0 0.0
        %705 = vmatpush.msra.mxu0 0.0
        %706 = vmatpush.msra.mxu0 0.0
        %707 = vmatpush.msra.mxu0 0.0
        %708 = vmatpush.msra.mxu0 0.0
        %709 = vmatpush.msra.mxu0 0.0
        %710 = vmatpush.msra.mxu0 0.0
        %711 = vmatpush.msra.mxu0 0.0
        %712 = vmatpush.msra.mxu0 %v395
        %713 = vmatpush.msra.mxu0 %v394
        %714 = vmatmul.f32.gmra.mxu0 %v694
        %v715 = vpop.f32.mrf.mxu0
        %v716 = vadd.f32 0.0, %v715
        %717 = vmatmul.f32.gmra.mxu0 %v696
        %v718 = vpop.f32.mrf.mxu0
        %v719 = vadd.f32 0.0, %v718
        %720 = vdwg.mxu0
        %v721 = vadd.f32 %v682, %v716
        %v722 = vadd.f32 %v683, %v719
        %724 = vst [vmem:[#allocation1] ss:$2 sm:$0xff] %v370
        %s725 = scalar_lea.vmem [#allocation1], 1
        %726 = vst [vmem:[%s725] ss:$2 sm:$0xff] %v371
        %s727 = scalar_lea.vmem [#allocation1], 16
        %728 = vst [vmem:[%s727] ss:$2 sm:$0xff] %v372
        %s729 = scalar_lea.vmem [#allocation1], 17
        %730 = vst [vmem:[%s729] ss:$2 sm:$0xff] %v373
        %v731 = vld.sshfl [vmem:[#allocation1] sm:$0xff pattern:$0x75316420]
        %v732 = vld.sshfl [vmem:[#allocation1 + $0x10] sm:$0xff pattern:$0x75316420]
        %v733 = vsel %vm413, %v731, 0
        %v735 = vsel %vm413, %v732, 0
        %737 = vmatpush.msra.mxu0 0.0
        %738 = vmatpush.msra.mxu0 0.0
        %739 = vmatpush.msra.mxu0 0.0
        %740 = vmatpush.msra.mxu0 0.0
        %741 = vmatpush.msra.mxu0 0.0
        %742 = vmatpush.msra.mxu0 0.0
        %743 = vmatpush.msra.mxu0 0.0
        %744 = vmatpush.msra.mxu0 0.0
        %745 = vmatpush.msra.mxu0 0.0
        %746 = vmatpush.msra.mxu0 0.0
        %747 = vmatpush.msra.mxu0 0.0
        %748 = vmatpush.msra.mxu0 0.0
        %749 = vmatpush.msra.mxu0 0.0
        %750 = vmatpush.msra.mxu0 0.0
        %751 = vmatpush.msra.mxu0 %v397
        %752 = vmatpush.msra.mxu0 %v396
        %753 = vmatmul.f32.gmra.mxu0 %v733
        %v754 = vpop.f32.mrf.mxu0
        %v755 = vadd.f32 0.0, %v754
        %756 = vmatmul.f32.gmra.mxu0 %v735
        %v757 = vpop.f32.mrf.mxu0
        %v758 = vadd.f32 0.0, %v757
        %759 = vdwg.mxu0
        %v760 = vadd.f32 %v721, %v755
        %v761 = vadd.f32 %v722, %v758
        %v762 = vrot.slane %v368, 4
        %v763 = vrot.slane %v368, 5
        %v764 = vrot.slane %v763, 4
        %v765 = vrot.slane %v762, 5
        %v766 = vsel %vm487, %v764, %v765
        %767 = vst [vmem:[#allocation1] ss:$2 sm:$0xff] %v495
        %s768 = scalar_lea.vmem [#allocation1], 1
        %769 = vst [vmem:[%s768] ss:$2 sm:$0xff] %v499
        %s770 = scalar_lea.vmem [#allocation1], 16
        %771 = vst [vmem:[%s770] ss:$2 sm:$0xff] %v503
        %s772 = scalar_lea.vmem [#allocation1], 17
        %773 = vst [vmem:[%s772] ss:$2 sm:$0xff] %v766
        %v774 = vld.sshfl [vmem:[#allocation1] sm:$0xff pattern:$0x75316420]
        %v775 = vld.sshfl [vmem:[#allocation1 + $0x10] sm:$0xff pattern:$0x75316420]
        %v776 = vsel %vm413, %v774, 0
        %v778 = vsel %vm413, %v775, 0
        %780 = vmatpush.msra.mxu0 0.0
        %781 = vmatpush.msra.mxu0 0.0
        %782 = vmatpush.msra.mxu0 0.0
        %783 = vmatpush.msra.mxu0 0.0
        %784 = vmatpush.msra.mxu0 0.0
        %785 = vmatpush.msra.mxu0 0.0
        %786 = vmatpush.msra.mxu0 0.0
        %787 = vmatpush.msra.mxu0 0.0
        %788 = vmatpush.msra.mxu0 0.0
        %789 = vmatpush.msra.mxu0 0.0
        %790 = vmatpush.msra.mxu0 0.0
        %791 = vmatpush.msra.mxu0 0.0
        %792 = vmatpush.msra.mxu0 0.0
        %793 = vmatpush.msra.mxu0 0.0
        %794 = vmatpush.msra.mxu0 %v399
        %795 = vmatpush.msra.mxu0 %v398
        %796 = vmatmul.f32.gmra.mxu0 %v776
        %v797 = vpop.f32.mrf.mxu0
        %v798 = vadd.f32 0.0, %v797
        %799 = vmatmul.f32.gmra.mxu0 %v778
        %v800 = vpop.f32.mrf.mxu0
        %v801 = vadd.f32 0.0, %v800
        %802 = vdwg.mxu0
        %v803 = vadd.f32 %v760, %v798
        %v804 = vadd.f32 %v761, %v801
        %v805 = vld [vmem:[%s5] sm:$0x1]
        %v807 = vperm.slane %v805, 0
        %v809 = vadd.f32 %v803, %v807
        %v810 = vadd.f32 %v804, %v807
        %v811 = vmax.f32 %v809, 0.0
        %v812 = vmax.f32 %v810, 0.0
        %v813 = vld [vmem:[%s6] sm:$0xff]
        %v814 = vld [vmem:[%s7] sm:$0x1]
        %v816 = vperm.slane %v814, 0
        %vm818 = vcmask 64512
        %v820 = vsel %vm818, %v811, 0
        %v823 = vsel %vm818, %v812, 0
        %825 = vmatpush.msra.mxu0 0.0
        %826 = vmatpush.msra.mxu0 0.0
        %827 = vmatpush.msra.mxu0 0.0
        %828 = vmatpush.msra.mxu0 0.0
        %829 = vmatpush.msra.mxu0 0.0
        %830 = vmatpush.msra.mxu0 0.0
        %831 = vmatpush.msra.mxu0 0.0
        %832 = vmatpush.msra.mxu0 0.0
        %833 = vmatpush.msra.mxu0 0.0
        %834 = vmatpush.msra.mxu0 0.0
        %835 = vmatpush.msra.mxu0 0.0
        %836 = vmatpush.msra.mxu0 0.0
        %837 = vmatpush.msra.mxu0 0.0
        %838 = vmatpush.msra.mxu0 0.0
        %839 = vmatpush.msra.mxu0 0.0
        %840 = vmatpush.msra.mxu0 %v813
        %841 = vmatmul.f32.gmra.mxu0 %v820
        %v842 = vpop.f32.mrf.mxu0
        %v843 = vadd.f32 %v816, %v842
        %844 = vmatmul.f32.gmra.mxu0 %v823
        %v845 = vpop.f32.mrf.mxu0
        %v846 = vadd.f32 %v816, %v845
        %847 = vdwg.mxu0
        %v848 = vmax.f32 %v843, 0.0
        %v849 = vmax.f32 %v846, 0.0
        %v852 = vrot.slane %v848, 4
        %v853 = vrot.slane %v849, 4
        %vm856 = vcmask 125952
        %857 = vst.msk [vmem:[%s343] sm:$0xf] %vm856, %v848
        %858 = vst.msk [vmem:[%s343 + $0x4] sm:$0xf] %vm856, %v852
        %859 = vst.msk [vmem:[%s343 + $0x8] sm:$0xf] %vm856, %v849
        %860 = vst.msk [vmem:[%s343 + $0xc] sm:$0xf] %vm856, %v853
        %s861 = sand.u32 %s218, 1
        %s862 = scalar_lea.sflag [#allocation3], %s861
        %s863 = sand.u32 %s218, 1
        %s864 = smul.addr %s863, 16
        %s865 = scalar_lea.vmem [#allocation2], %s864
        // Predicated region
        $region53: #{hgstem_forward.3} parent=51 // pred_check
          %p866 = pneg %p228
        $region54: #{hgstem_forward.3} parent=51 // pred_check_branch
          %868 = sbr.rel (%p866) target = $region56
        $region55: #{hgstem_forward.3} parent=51 // pred_region
          %870 = vsyncadd %s862, 0
          %s871 = smul.addr %s22, 4
          %s872 = smul.addr %s871, 4
          %s873 = scalar_lea.hbm %s8, %s872
          %s874 = sshll.u32 %s865, 4
          %s875 = int_to_ptr.vmem [resolvable:$true] %s874
          %s876 = sshll.u32 %s873, 4
          %s877 = int_to_ptr.hbm [resolvable:$true] %s876
          %882 = dma.vmem_to_hbm [thread:$0]  %s875, 256, %s877, %s862, 64, 64, 4
        $region56: #{hgstem_forward.3} parent=51 // pred_fallthru
          _
      $region52: #{hgstem_forward.3} parent=5 // pred_fallthru
        _
      %p883 = scmp.le.s32.totalorder 2, %s17
      // Predicated region
      $region57: #{hgstem_forward.3} parent=5 // pred_check
        %p884 = pneg %p883
      $region58: #{hgstem_forward.3} parent=5 // pred_check_branch
        %886 = sbr.rel (%p884) target = $region60
      $region59: #{hgstem_forward.3} parent=5 // pred_region
        %s887 = ssub.s32 %s17, 2
        // Predicated region
        $region61: #{hgstem_forward.3} parent=59 // pred_check
          %p888 = pneg %p234
        $region62: #{hgstem_forward.3} parent=59 // pred_check_branch
          %890 = sbr.rel (%p888) target = $region64
        $region63: #{hgstem_forward.3} parent=59 // pred_region
          %s891 = sand.u32 %s219, 1
          %s892 = scalar_lea.sflag [#allocation3], %s891
          %s893 = sand.u32 %s219, 1
          %s894 = smul.addr %s893, 16
          %s895 = scalar_lea.vmem [#allocation2], %s894
          %897 = dma.done %s892, 256
        $region64: #{hgstem_forward.3} parent=59 // pred_fallthru
          _
      $region60: #{hgstem_forward.3} parent=5 // pred_fallthru
        _
    $region6: #{hgstem_forward.3} parent=1 // loop_footer
      %s21 = sadd.s32 1, %s17
    $region7: #{hgstem_forward.3} parent=1 // loop_footer_branch
      %16 = sbr.rel target = $region3
    $region8: #{hgstem_forward.3} parent=1 // loop_exit
      _
    %898 = vsyncpa [#allocation3], 1
    %s899 = scalar_lea.sflag [#allocation3], 1
    %900 = vsyncpa %s899, 1

// kernel: hgstem_forward.2
$region0: #{hgstem_forward.2}
  #allocation0 [shape = 'u32[]', space=smem, size = 0x4, offset = 0x4, fixed_abs, tag = 'smem constant byte address 0x4 - core index']
  #allocation1 [shape = 'u32[72,128]{1,0:T(1,128)}', space=vmem, size = 0x9000, scoped, tag = 'internal scratch']
  #allocation2 [shape = 'f32[9,9,8]{2,1,0:T(8,128)}', space=vmem, size = 0x12000, scoped, tag = 'scratch operand']
  #allocation3 [shape = 'f32[9,9,4]{2,1,0:T(8,128)}', space=vmem, size = 0x12000, scoped, tag = 'scratch operand']
  %s0 = inlined_call_operand.vmem [shape: f32[2,9,9,3], index: 0, kind: input, shape index: {}]
  %s1 = inlined_call_operand.vmem [shape: f32[2,9,9,3], index: 1, kind: input, shape index: {}]
  %s2 = inlined_call_operand.vmem [shape: f32[2,9,9,3], index: 2, kind: input, shape index: {}]
  %s3 = inlined_call_operand.vmem [shape: f32[2,9,9,3], index: 3, kind: input, shape index: {}]
  %s4 = inlined_call_operand.vmem [shape: f32[3,3,3,8], index: 4, kind: input, shape index: {}]
  %s5 = inlined_call_operand.vmem [shape: f32[1,8], index: 5, kind: input, shape index: {}]
  %s6 = inlined_call_operand.vmem [shape: f32[2,2,8,4], index: 6, kind: input, shape index: {}]
  %s7 = inlined_call_operand.vmem [shape: f32[1,4], index: 7, kind: input, shape index: {}]
  %s8 = inlined_call_operand.vmem [shape: f32[2,2,4,8], index: 8, kind: input, shape index: {}]
  %s9 = inlined_call_operand.vmem [shape: f32[1,8], index: 9, kind: input, shape index: {}]
  %s10 = inlined_call_operand.vmem [shape: f32[2,10,10,16], index: 10, kind: output, shape index: {}]
  %s11 = sld [smem:[#allocation0]]
  $region73: #{hgstem_forward.2} parent=0
    _
  %s13 = ssub.s32 1, %s11
  %s14 = scalar_select 0, %s13, %s11
  loop: start=0, step=1, limit=4
  $region2: #{hgstem_forward.2} parent=0 // loop_pre_header
    _
  $region3: #{hgstem_forward.2} parent=0 // loop_header
    %s16 = sphi 0, %s20
    %p17 = scmp.ge.s32.totalorder %s16, 4
    %s26 = sphi 0, %s28
    %s29 = sphi 0, %s26
    %s30 = sphi 0, %s29
    %s46 = sphi 0, %s30
    %s52 = sphi 0, %s54
    %s55 = sphi 0, %s52
    %s56 = sphi 0, %s55
    %s72 = sphi 0, %s56
    %s78 = sphi 0, %s80
    %s81 = sphi 0, %s78
    %s82 = sphi 0, %s81
    %s98 = sphi 0, %s82
    %s104 = sphi 0, %s106
    %s107 = sphi 0, %s104
    %s108 = sphi 0, %s107
    %s124 = sphi 0, %s108
    %s128 = sphi 0, %s128
    %s130 = sphi 0, %s128
    %s131 = sphi 0, %s130
    %s145 = sphi 0, %s131
    %s149 = sphi 0, %s149
    %s151 = sphi 0, %s149
    %s152 = sphi 0, %s151
    %s166 = sphi 0, %s152
    %s170 = sphi 0, %s170
    %s172 = sphi 0, %s170
    %s173 = sphi 0, %s172
    %s187 = sphi 0, %s173
    %s191 = sphi 0, %s191
    %s193 = sphi 0, %s191
    %s194 = sphi 0, %s193
    %s208 = sphi 0, %s194
    %s212 = sphi 0, %s212
    %s214 = sphi 0, %s212
    %s215 = sphi 0, %s214
    %s229 = sphi 0, %s215
    %s233 = sphi 0, %s233
    %s235 = sphi 0, %s233
    %s236 = sphi 0, %s235
    %s250 = sphi 0, %s236
    %s256 = sphi 0, %s258
    %s259 = sphi 0, %s256
    %s260 = sphi 0, %s259
    %s276 = sphi 0, %s260
  $region4: #{hgstem_forward.2} parent=0 // loop_header_branch
    %19 = sbr.rel (%p17) target = $region8
  $region5: #{hgstem_forward.2} parent=0 // loop_body
    %s21 = ssub.s32 %s16, 1
    %s22 = ssub.s32 %s16, 2
    %s23 = sadd.s32 %s16, 1
    %s24 = ssub.s32 %s16, %s23
    %p25 = scmp.eq.s32.totalorder %s24, 0
    %s27 = sadd.s32 %s26, 1
    %s28 = scalar_select %p25, %s26, %s27
    %p31 = pneg %p25
    %p32 = scmp.eq.s32.totalorder %s16, 1
    %p33 = por %p31, %p32
    %p34 = scmp.ne.s32.totalorder %s26, %s29
    %p35 = scmp.eq.s32.totalorder %s16, 0
    %p36 = por %p34, %p35
    %p37 = scmp.ne.s32.totalorder %s26, %s29
    %p38 = scmp.eq.s32.totalorder %s21, 1
    %p39 = por %p37, %p38
    %p40 = scmp.ne.s32.totalorder %s29, %s30
    %p41 = scmp.eq.s32.totalorder %s21, 0
    %p42 = por %p40, %p41
    %p43 = scmp.ne.s32.totalorder %s29, %s30
    %p44 = scmp.eq.s32.totalorder %s22, 1
    %p45 = por %p43, %p44
    %p47 = scmp.ne.s32.totalorder %s30, %s46
    %p48 = scmp.eq.s32.totalorder %s22, 0
    %p49 = por %p47, %p48
    %s50 = ssub.s32 %s16, %s23
    %p51 = scmp.eq.s32.totalorder %s50, 0
    %s53 = sadd.s32 %s52, 1
    %s54 = scalar_select %p51, %s52, %s53
    %p57 = pneg %p51
    %p58 = scmp.eq.s32.totalorder %s16, 1
    %p59 = por %p57, %p58
    %p60 = scmp.ne.s32.totalorder %s52, %s55
    %p61 = scmp.eq.s32.totalorder %s16, 0
    %p62 = por %p60, %p61
    %p63 = scmp.ne.s32.totalorder %s52, %s55
    %p64 = scmp.eq.s32.totalorder %s21, 1
    %p65 = por %p63, %p64
    %p66 = scmp.ne.s32.totalorder %s55, %s56
    %p67 = scmp.eq.s32.totalorder %s21, 0
    %p68 = por %p66, %p67
    %p69 = scmp.ne.s32.totalorder %s55, %s56
    %p70 = scmp.eq.s32.totalorder %s22, 1
    %p71 = por %p69, %p70
    %p73 = scmp.ne.s32.totalorder %s56, %s72
    %p74 = scmp.eq.s32.totalorder %s22, 0
    %p75 = por %p73, %p74
    %s76 = ssub.s32 %s16, %s23
    %p77 = scmp.eq.s32.totalorder %s76, 0
    %s79 = sadd.s32 %s78, 1
    %s80 = scalar_select %p77, %s78, %s79
    %p83 = pneg %p77
    %p84 = scmp.eq.s32.totalorder %s16, 1
    %p85 = por %p83, %p84
    %p86 = scmp.ne.s32.totalorder %s78, %s81
    %p87 = scmp.eq.s32.totalorder %s16, 0
    %p88 = por %p86, %p87
    %p89 = scmp.ne.s32.totalorder %s78, %s81
    %p90 = scmp.eq.s32.totalorder %s21, 1
    %p91 = por %p89, %p90
    %p92 = scmp.ne.s32.totalorder %s81, %s82
    %p93 = scmp.eq.s32.totalorder %s21, 0
    %p94 = por %p92, %p93
    %p95 = scmp.ne.s32.totalorder %s81, %s82
    %p96 = scmp.eq.s32.totalorder %s22, 1
    %p97 = por %p95, %p96
    %p99 = scmp.ne.s32.totalorder %s82, %s98
    %p100 = scmp.eq.s32.totalorder %s22, 0
    %p101 = por %p99, %p100
    %s102 = ssub.s32 %s16, %s23
    %p103 = scmp.eq.s32.totalorder %s102, 0
    %s105 = sadd.s32 %s104, 1
    %s106 = scalar_select %p103, %s104, %s105
    %p109 = pneg %p103
    %p110 = scmp.eq.s32.totalorder %s16, 1
    %p111 = por %p109, %p110
    %p112 = scmp.ne.s32.totalorder %s104, %s107
    %p113 = scmp.eq.s32.totalorder %s16, 0
    %p114 = por %p112, %p113
    %p115 = scmp.ne.s32.totalorder %s104, %s107
    %p116 = scmp.eq.s32.totalorder %s21, 1
    %p117 = por %p115, %p116
    %p118 = scmp.ne.s32.totalorder %s107, %s108
    %p119 = scmp.eq.s32.totalorder %s21, 0
    %p120 = por %p118, %p119
    %p121 = scmp.ne.s32.totalorder %s107, %s108
    %p122 = scmp.eq.s32.totalorder %s22, 1
    %p123 = por %p121, %p122
    %p125 = scmp.ne.s32.totalorder %s108, %s124
    %p126 = scmp.eq.s32.totalorder %s22, 0
    %p127 = por %p125, %p126
    %s129 = sadd.s32 %s128, 1
    %p132 = scmp.eq.s32.totalorder %s16, 1
    %p133 = scmp.ne.s32.totalorder %s128, %s130
    %p134 = scmp.eq.s32.totalorder %s16, 0
    %p135 = por %p133, %p134
    %p136 = scmp.ne.s32.totalorder %s128, %s130
    %p137 = scmp.eq.s32.totalorder %s21, 1
    %p138 = por %p136, %p137
    %p139 = scmp.ne.s32.totalorder %s130, %s131
    %p140 = scmp.eq.s32.totalorder %s21, 0
    %p141 = por %p139, %p140
    %p142 = scmp.ne.s32.totalorder %s130, %s131
    %p143 = scmp.eq.s32.totalorder %s22, 1
    %p144 = por %p142, %p143
    %p146 = scmp.ne.s32.totalorder %s131, %s145
    %p147 = scmp.eq.s32.totalorder %s22, 0
    %p148 = por %p146, %p147
    %s150 = sadd.s32 %s149, 1
    %p153 = scmp.eq.s32.totalorder %s16, 1
    %p154 = scmp.ne.s32.totalorder %s149, %s151
    %p155 = scmp.eq.s32.totalorder %s16, 0
    %p156 = por %p154, %p155
    %p157 = scmp.ne.s32.totalorder %s149, %s151
    %p158 = scmp.eq.s32.totalorder %s21, 1
    %p159 = por %p157, %p158
    %p160 = scmp.ne.s32.totalorder %s151, %s152
    %p161 = scmp.eq.s32.totalorder %s21, 0
    %p162 = por %p160, %p161
    %p163 = scmp.ne.s32.totalorder %s151, %s152
    %p164 = scmp.eq.s32.totalorder %s22, 1
    %p165 = por %p163, %p164
    %p167 = scmp.ne.s32.totalorder %s152, %s166
    %p168 = scmp.eq.s32.totalorder %s22, 0
    %p169 = por %p167, %p168
    %s171 = sadd.s32 %s170, 1
    %p174 = scmp.eq.s32.totalorder %s16, 1
    %p175 = scmp.ne.s32.totalorder %s170, %s172
    %p176 = scmp.eq.s32.totalorder %s16, 0
    %p177 = por %p175, %p176
    %p178 = scmp.ne.s32.totalorder %s170, %s172
    %p179 = scmp.eq.s32.totalorder %s21, 1
    %p180 = por %p178, %p179
    %p181 = scmp.ne.s32.totalorder %s172, %s173
    %p182 = scmp.eq.s32.totalorder %s21, 0
    %p183 = por %p181, %p182
    %p184 = scmp.ne.s32.totalorder %s172, %s173
    %p185 = scmp.eq.s32.totalorder %s22, 1
    %p186 = por %p184, %p185
    %p188 = scmp.ne.s32.totalorder %s173, %s187
    %p189 = scmp.eq.s32.totalorder %s22, 0
    %p190 = por %p188, %p189
    %s192 = sadd.s32 %s191, 1
    %p195 = scmp.eq.s32.totalorder %s16, 1
    %p196 = scmp.ne.s32.totalorder %s191, %s193
    %p197 = scmp.eq.s32.totalorder %s16, 0
    %p198 = por %p196, %p197
    %p199 = scmp.ne.s32.totalorder %s191, %s193
    %p200 = scmp.eq.s32.totalorder %s21, 1
    %p201 = por %p199, %p200
    %p202 = scmp.ne.s32.totalorder %s193, %s194
    %p203 = scmp.eq.s32.totalorder %s21, 0
    %p204 = por %p202, %p203
    %p205 = scmp.ne.s32.totalorder %s193, %s194
    %p206 = scmp.eq.s32.totalorder %s22, 1
    %p207 = por %p205, %p206
    %p209 = scmp.ne.s32.totalorder %s194, %s208
    %p210 = scmp.eq.s32.totalorder %s22, 0
    %p211 = por %p209, %p210
    %s213 = sadd.s32 %s212, 1
    %p216 = scmp.eq.s32.totalorder %s16, 1
    %p217 = scmp.ne.s32.totalorder %s212, %s214
    %p218 = scmp.eq.s32.totalorder %s16, 0
    %p219 = por %p217, %p218
    %p220 = scmp.ne.s32.totalorder %s212, %s214
    %p221 = scmp.eq.s32.totalorder %s21, 1
    %p222 = por %p220, %p221
    %p223 = scmp.ne.s32.totalorder %s214, %s215
    %p224 = scmp.eq.s32.totalorder %s21, 0
    %p225 = por %p223, %p224
    %p226 = scmp.ne.s32.totalorder %s214, %s215
    %p227 = scmp.eq.s32.totalorder %s22, 1
    %p228 = por %p226, %p227
    %p230 = scmp.ne.s32.totalorder %s215, %s229
    %p231 = scmp.eq.s32.totalorder %s22, 0
    %p232 = por %p230, %p231
    %s234 = sadd.s32 %s233, 1
    %p237 = scmp.eq.s32.totalorder %s16, 1
    %p238 = scmp.ne.s32.totalorder %s233, %s235
    %p239 = scmp.eq.s32.totalorder %s16, 0
    %p240 = por %p238, %p239
    %p241 = scmp.ne.s32.totalorder %s233, %s235
    %p242 = scmp.eq.s32.totalorder %s21, 1
    %p243 = por %p241, %p242
    %p244 = scmp.ne.s32.totalorder %s235, %s236
    %p245 = scmp.eq.s32.totalorder %s21, 0
    %p246 = por %p244, %p245
    %p247 = scmp.ne.s32.totalorder %s235, %s236
    %p248 = scmp.eq.s32.totalorder %s22, 1
    %p249 = por %p247, %p248
    %p251 = scmp.ne.s32.totalorder %s236, %s250
    %p252 = scmp.eq.s32.totalorder %s22, 0
    %p253 = por %p251, %p252
    %s254 = ssub.s32 %s16, %s23
    %p255 = scmp.eq.s32.totalorder %s254, 0
    %s257 = sadd.s32 %s256, 1
    %s258 = scalar_select %p255, %s256, %s257
    %p261 = pneg %p255
    %p262 = scmp.eq.s32.totalorder %s16, 1
    %p263 = por %p261, %p262
    %p264 = scmp.ne.s32.totalorder %s256, %s259
    %p265 = scmp.eq.s32.totalorder %s16, 0
    %p266 = por %p264, %p265
    %p267 = scmp.ne.s32.totalorder %s256, %s259
    %p268 = scmp.eq.s32.totalorder %s21, 1
    %p269 = por %p267, %p268
    %p270 = scmp.ne.s32.totalorder %s259, %s260
    %p271 = scmp.eq.s32.totalorder %s21, 0
    %p272 = por %p270, %p271
    %p273 = scmp.ne.s32.totalorder %s259, %s260
    %p274 = scmp.eq.s32.totalorder %s22, 1
    %p275 = por %p273, %p274
    %p277 = scmp.ne.s32.totalorder %s260, %s276
    %p278 = scmp.eq.s32.totalorder %s22, 0
    %p279 = por %p277, %p278
    %p280 = scmp.le.s32.totalorder 1, %s16
    %p281 = scmp.lt.s32.totalorder %s16, 3
    %p282 = pnand %p280, %p281
    %p283 = pneg %p282
    // Predicated region
    $region9: #{hgstem_forward.2} parent=5 // pred_check
      _
    $region10: #{hgstem_forward.2} parent=5 // pred_check_branch
      %285 = sbr.rel (%p282) target = $region12
    $region11: #{hgstem_forward.2} parent=5 // pred_region
      %s286 = ssub.s32 %s16, 1
      // Predicated region
      $region13: #{hgstem_forward.2} parent=11 // pred_check
        %p287 = pneg %p141
      $region14: #{hgstem_forward.2} parent=11 // pred_check_branch
        %289 = sbr.rel (%p287) target = $region16
      $region15: #{hgstem_forward.2} parent=11 // pred_region
        _
      $region16: #{hgstem_forward.2} parent=11 // pred_fallthru
        _
      // Predicated region
      $region17: #{hgstem_forward.2} parent=11 // pred_check
        %p290 = pneg %p162
      $region18: #{hgstem_forward.2} parent=11 // pred_check_branch
        %292 = sbr.rel (%p290) target = $region20
      $region19: #{hgstem_forward.2} parent=11 // pred_region
        _
      $region20: #{hgstem_forward.2} parent=11 // pred_fallthru
        _
      // Predicated region
      $region21: #{hgstem_forward.2} parent=11 // pred_check
        %p293 = pneg %p183
      $region22: #{hgstem_forward.2} parent=11 // pred_check_branch
        %295 = sbr.rel (%p293) target = $region24
      $region23: #{hgstem_forward.2} parent=11 // pred_region
        _
      $region24: #{hgstem_forward.2} parent=11 // pred_fallthru
        _
      // Predicated region
      $region25: #{hgstem_forward.2} parent=11 // pred_check
        %p296 = pneg %p204
      $region26: #{hgstem_forward.2} parent=11 // pred_check_branch
        %298 = sbr.rel (%p296) target = $region28
      $region27: #{hgstem_forward.2} parent=11 // pred_region
        _
      $region28: #{hgstem_forward.2} parent=11 // pred_fallthru
        _
      // Predicated region
      $region29: #{hgstem_forward.2} parent=11 // pred_check
        %p299 = pneg %p225
      $region30: #{hgstem_forward.2} parent=11 // pred_check_branch
        %301 = sbr.rel (%p299) target = $region32
      $region31: #{hgstem_forward.2} parent=11 // pred_region
        _
      $region32: #{hgstem_forward.2} parent=11 // pred_fallthru
        _
      // Predicated region
      $region33: #{hgstem_forward.2} parent=11 // pred_check
        %p302 = pneg %p246
      $region34: #{hgstem_forward.2} parent=11 // pred_check_branch
        %304 = sbr.rel (%p302) target = $region36
      $region35: #{hgstem_forward.2} parent=11 // pred_region
        _
      $region36: #{hgstem_forward.2} parent=11 // pred_fallthru
        _
    $region12: #{hgstem_forward.2} parent=5 // pred_fallthru
      _
    %p305 = scmp.lt.s32.totalorder %s16, 2
    // Predicated region
    $region37: #{hgstem_forward.2} parent=5 // pred_check
      %p306 = pneg %p305
    $region38: #{hgstem_forward.2} parent=5 // pred_check_branch
      %308 = sbr.rel (%p306) target = $region40
    $region39: #{hgstem_forward.2} parent=5 // pred_region
      // Predicated region
      $region41: #{hgstem_forward.2} parent=39 // pred_check
        %p309 = pneg %p36
      $region42: #{hgstem_forward.2} parent=39 // pred_check_branch
        %311 = sbr.rel (%p309) target = $region44
      $region43: #{hgstem_forward.2} parent=39 // pred_region
        %p312 = scmp.lt.s32.totalorder %s16, 1
        %s313 = scalar_select %p312, %s16, 1
        %s314 = smul.addr %s313, 18
        %s315 = smul.addr %s314, 8
        %s316 = scalar_lea.vmem %s0, %s315
      $region44: #{hgstem_forward.2} parent=39 // pred_fallthru
        _
      // Predicated region
      $region45: #{hgstem_forward.2} parent=39 // pred_check
        %p317 = pneg %p62
      $region46: #{hgstem_forward.2} parent=39 // pred_check_branch
        %319 = sbr.rel (%p317) target = $region48
      $region47: #{hgstem_forward.2} parent=39 // pred_region
        %p320 = scmp.lt.s32.totalorder %s16, 1
        %s321 = scalar_select %p320, %s16, 1
        %s322 = smul.addr %s321, 18
        %s323 = smul.addr %s322, 8
        %s324 = scalar_lea.vmem %s1, %s323
      $region48: #{hgstem_forward.2} parent=39 // pred_fallthru
        _
      // Predicated region
      $region49: #{hgstem_forward.2} parent=39 // pred_check
        %p325 = pneg %p88
      $region50: #{hgstem_forward.2} parent=39 // pred_check_branch
        %327 = sbr.rel (%p325) target = $region52
      $region51: #{hgstem_forward.2} parent=39 // pred_region
        %p328 = scmp.lt.s32.totalorder %s16, 1
        %s329 = scalar_select %p328, %s16, 1
        %s330 = smul.addr %s329, 18
        %s331 = smul.addr %s330, 8
        %s332 = scalar_lea.vmem %s2, %s331
      $region52: #{hgstem_forward.2} parent=39 // pred_fallthru
        _
      // Predicated region
      $region53: #{hgstem_forward.2} parent=39 // pred_check
        %p333 = pneg %p114
      $region54: #{hgstem_forward.2} parent=39 // pred_check_branch
        %335 = sbr.rel (%p333) target = $region56
      $region55: #{hgstem_forward.2} parent=39 // pred_region
        %p336 = scmp.lt.s32.totalorder %s16, 1
        %s337 = scalar_select %p336, %s16, 1
        %s338 = smul.addr %s337, 18
        %s339 = smul.addr %s338, 8
        %s340 = scalar_lea.vmem %s3, %s339
      $region56: #{hgstem_forward.2} parent=39 // pred_fallthru
        _
    $region40: #{hgstem_forward.2} parent=5 // pred_fallthru
      _
    %p341 = scmp.le.s32.totalorder 1, %s16
    %p342 = scmp.lt.s32.totalorder %s16, 3
    %p343 = pnand %p341, %p342
    %p344 = pneg %p343
    // Predicated region
    $region57: #{hgstem_forward.2} parent=5 // pred_check
      _
    $region58: #{hgstem_forward.2} parent=5 // pred_check_branch
      %346 = sbr.rel (%p343) target = $region60
    $region59: #{hgstem_forward.2} parent=5 // pred_region
      %s347 = ssub.s32 %s16, 1
      %p348 = scmp.lt.s32.totalorder %s21, 1
      %s349 = scalar_select %p348, %s21, 1
      %s350 = smul.addr %s349, 18
      %s351 = smul.addr %s350, 8
      %s352 = scalar_lea.vmem %s0, %s351
      %p353 = pneg %p42
      %p354 = pneg %p39
      %p355 = scmp.lt.s32.totalorder %s21, 1
      %s356 = scalar_select %p355, %s21, 1
      %s357 = smul.addr %s356, 18
      %s358 = smul.addr %s357, 8
      %s359 = scalar_lea.vmem %s1, %s358
      %p360 = pneg %p68
      %p361 = pneg %p65
      %p362 = scmp.lt.s32.totalorder %s21, 1
      %s363 = scalar_select %p362, %s21, 1
      %s364 = smul.addr %s363, 18
      %s365 = smul.addr %s364, 8
      %s366 = scalar_lea.vmem %s2, %s365
      %p367 = pneg %p94
      %p368 = pneg %p91
      %p369 = scmp.lt.s32.totalorder %s21, 1
      %s370 = scalar_select %p369, %s21, 1
      %s371 = smul.addr %s370, 18
      %s372 = smul.addr %s371, 8
      %s373 = scalar_lea.vmem %s3, %s372
      %p374 = pneg %p120
      %p375 = pneg %p117
      %p376 = pneg %p141
      %p377 = pneg %p138
      %p378 = pneg %p162
      %p379 = pneg %p159
      %p380 = pneg %p183
      %p381 = pneg %p180
      %p382 = pneg %p204
      %p383 = pneg %p201
      %p384 = pneg %p225
      %p385 = pneg %p222
      %p386 = pneg %p246
      %p387 = pneg %p243
      %p388 = pneg %p272
      %p389 = pneg %p269
      %p390 = scmp.lt.s32.totalorder %s21, 1
      %s391 = scalar_select %p390, %s21, 1
      %s392 = smul.addr %s391, 20
      %s393 = smul.addr %s392, 8
      %s394 = scalar_lea.vmem %s10, %s393
      %p395 = scmp.lt.s32.totalorder %s21, 1
      %s396 = scalar_select %p395, %s21, 1
      %s397 = smul.addr %s396, 18
      %s398 = smul.addr %s397, 8
      %s399 = scalar_lea.vmem %s0, %s398
      %p400 = scmp.lt.s32.totalorder %s21, 1
      %s401 = scalar_select %p400, %s21, 1
      %s402 = smul.addr %s401, 18
      %s403 = smul.addr %s402, 8
      %s404 = scalar_lea.vmem %s1, %s403
      %p405 = scmp.lt.s32.totalorder %s21, 1
      %s406 = scalar_select %p405, %s21, 1
      %s407 = smul.addr %s406, 18
      %s408 = smul.addr %s407, 8
      %s409 = scalar_lea.vmem %s2, %s408
      %p410 = scmp.lt.s32.totalorder %s21, 1
      %s411 = scalar_select %p410, %s21, 1
      %s412 = smul.addr %s411, 18
      %s413 = smul.addr %s412, 8
      %s414 = scalar_lea.vmem %s3, %s413
      %p415 = scmp.lt.s32.totalorder %s21, 1
      %s416 = scalar_select %p415, %s21, 1
      %s417 = smul.addr %s416, 20
      %s418 = smul.addr %s417, 8
      %s419 = scalar_lea.vmem %s10, %s418
      %v420 = vld [vmem:[%s399] sm:$0xff]
      %v421 = vld [vmem:[%s399 + $0x8] sm:$0x1]
      %v422 = vld [vmem:[%s399 + $0x10] sm:$0xff]
      %v423 = vld [vmem:[%s399 + $0x18] sm:$0x1]
      %v424 = vld [vmem:[%s399 + $0x20] sm:$0xff]
      %v425 = vld [vmem:[%s399 + $0x28] sm:$0x1]
      %v426 = vld [vmem:[%s399 + $0x30] sm:$0xff]
      %v427 = vld [vmem:[%s399 + $0x38] sm:$0x1]
      %v428 = vld [vmem:[%s399 + $0x40] sm:$0xff]
      %v429 = vld [vmem:[%s399 + $0x48] sm:$0x1]
      %v430 = vld [vmem:[%s399 + $0x50] sm:$0xff]
      %v431 = vld [vmem:[%s399 + $0x58] sm:$0x1]
      %v432 = vld [vmem:[%s399 + $0x60] sm:$0xff]
      %v433 = vld [vmem:[%s399 + $0x68] sm:$0x1]
      %v434 = vld [vmem:[%s399 + $0x70] sm:$0xff]
      %v435 = vld [vmem:[%s399 + $0x78] sm:$0x1]
      %v436 = vld [vmem:[%s399 + $0x80] sm:$0xff]
      %v437 = vld [vmem:[%s399 + $0x88] sm:$0x1]
      %v438 = vld [vmem:[%s404] sm:$0xff]
      %v439 = vld [vmem:[%s404 + $0x10] sm:$0xff]
      %v440 = vld [vmem:[%s404 + $0x20] sm:$0xff]
      %v441 = vld [vmem:[%s404 + $0x30] sm:$0xff]
      %v442 = vld [vmem:[%s404 + $0x40] sm:$0xff]
      %v443 = vld [vmem:[%s404 + $0x50] sm:$0xff]
      %v444 = vld [vmem:[%s404 + $0x60] sm:$0xff]
      %v445 = vld [vmem:[%s404 + $0x70] sm:$0xff]
      %v446 = vld [vmem:[%s404 + $0x80] sm:$0xff]
      %v447 = vld [vmem:[%s409] sm:$0xff]
      %v448 = vld [vmem:[%s409 + $0x8] sm:$0x1]
      %v449 = vld [vmem:[%s409 + $0x10] sm:$0xff]
      %v450 = vld [vmem:[%s409 + $0x18] sm:$0x1]
      %v451 = vld [vmem:[%s409 + $0x20] sm:$0xff]
      %v452 = vld [vmem:[%s409 + $0x28] sm:$0x1]
      %v453 = vld [vmem:[%s409 + $0x30] sm:$0xff]
      %v454 = vld [vmem:[%s409 + $0x38] sm:$0x1]
      %v455 = vld [vmem:[%s409 + $0x40] sm:$0xff]
      %v456 = vld [vmem:[%s409 + $0x48] sm:$0x1]
      %v457 = vld [vmem:[%s409 + $0x50] sm:$0xff]
      %v458 = vld [vmem:[%s409 + $0x58] sm:$0x1]
      %v459 = vld [vmem:[%s409 + $0x60] sm:$0xff]
      %v460 = vld [vmem:[%s409 + $0x68] sm:$0x1]
      %v461 = vld [vmem:[%s409 + $0x70] sm:$0xff]
      %v462 = vld [vmem:[%s409 + $0x78] sm:$0x1]
      %v463 = vld [vmem:[%s414] sm:$0xff]
      %v464 = vld [vmem:[%s414 + $0x10] sm:$0xff]
      %v465 = vld [vmem:[%s414 + $0x20] sm:$0xff]
      %v466 = vld [vmem:[%s414 + $0x30] sm:$0xff]
      %v467 = vld [vmem:[%s414 + $0x40] sm:$0xff]
      %v468 = vld [vmem:[%s414 + $0x50] sm:$0xff]
      %v469 = vld [vmem:[%s414 + $0x60] sm:$0xff]
      %v470 = vld [vmem:[%s414 + $0x70] sm:$0xff]
      %v471 = vld [vmem:[%s4] sm:$0x7]
      %v472 = vld [vmem:[%s4 + $0x4] sm:$0x7]
      %v473 = vld [vmem:[%s4 + $0x8] sm:$0x7]
      %v474 = vld [vmem:[%s4 + $0xc] sm:$0x7]
      %v475 = vld [vmem:[%s4 + $0x10] sm:$0x7]
      %v476 = vld [vmem:[%s4 + $0x14] sm:$0x7]
      %v477 = vld [vmem:[%s4 + $0x18] sm:$0x7]
      %v478 = vld [vmem:[%s4 + $0x1c] sm:$0x7]
      %v479 = vld [vmem:[%s4 + $0x20] sm:$0x7]
      %vm480 = vcmask 23552
      %v482 = vsel %vm480, %v438, 0
      %v485 = vsel %vm480, %v439, 0
      %v488 = vsel %vm480, %v440, 0
      %v491 = vsel %vm480, %v441, 0
      %v494 = vsel %vm480, %v442, 0
      %v497 = vsel %vm480, %v443, 0
      %v500 = vsel %vm480, %v444, 0
      %v503 = vsel %vm480, %v445, 0
      %vm505 = vcmask 1042432
      %v507 = vsel %vm505, %v472, 0
      %509 = vmatpush.msra.mxu0 0.0
      %510 = vmatpush.msra.mxu0 0.0
      %511 = vmatpush.msra.mxu0 0.0
      %512 = vmatpush.msra.mxu0 0.0
      %513 = vmatpush.msra.mxu0 0.0
      %514 = vmatpush.msra.mxu0 0.0
      %515 = vmatpush.msra.mxu0 0.0
      %516 = vmatpush.msra.mxu0 0.0
      %517 = vmatpush.msra.mxu0 0.0
      %518 = vmatpush.msra.mxu0 0.0
      %519 = vmatpush.msra.mxu0 0.0
      %520 = vmatpush.msra.mxu0 0.0
      %521 = vmatpush.msra.mxu0 0.0
      %522 = vmatpush.msra.mxu0 0.0
      %523 = vmatpush.msra.mxu0 0.0
      %524 = vmatpush.msra.mxu0 %v507
      %525 = vmatmul.f32.gmra.mxu0 %v482
      %v526 = vpop.f32.mrf.mxu0
      %v527 = vadd.f32 0.0, %v526
      %528 = vmatmul.f32.gmra.mxu0 %v485
      %v529 = vpop.f32.mrf.mxu0
      %v530 = vadd.f32 0.0, %v529
      %531 = vmatmul.f32.gmra.mxu0 %v488
      %v532 = vpop.f32.mrf.mxu0
      %v533 = vadd.f32 0.0, %v532
      %534 = vmatmul.f32.gmra.mxu0 %v491
      %v535 = vpop.f32.mrf.mxu0
      %v536 = vadd.f32 0.0, %v535
      %537 = vmatmul.f32.gmra.mxu0 %v494
      %v538 = vpop.f32.mrf.mxu0
      %v539 = vadd.f32 0.0, %v538
      %540 = vmatmul.f32.gmra.mxu0 %v497
      %v541 = vpop.f32.mrf.mxu0
      %v542 = vadd.f32 0.0, %v541
      %543 = vmatmul.f32.gmra.mxu0 %v500
      %v544 = vpop.f32.mrf.mxu0
      %v545 = vadd.f32 0.0, %v544
      %546 = vmatmul.f32.gmra.mxu0 %v503
      %v547 = vpop.f32.mrf.mxu0
      %v548 = vadd.f32 0.0, %v547
      %549 = vdwg.mxu0
      %v551 = vsel %vm480, %v420, 0
      %v554 = vsel %vm480, %v422, 0
      %v557 = vsel %vm480, %v424, 0
      %v560 = vsel %vm480, %v426, 0
      %v563 = vsel %vm480, %v428, 0
      %v566 = vsel %vm480, %v430, 0
      %v569 = vsel %vm480, %v432, 0
      %v572 = vsel %vm480, %v434, 0
      %v575 = vsel %vm505, %v471, 0
      %577 = vmatpush.msra.mxu0 0.0
      %578 = vmatpush.msra.mxu0 0.0
      %579 = vmatpush.msra.mxu0 0.0
      %580 = vmatpush.msra.mxu0 0.0
      %581 = vmatpush.msra.mxu0 0.0
      %582 = vmatpush.msra.mxu0 0.0
      %583 = vmatpush.msra.mxu0 0.0
      %584 = vmatpush.msra.mxu0 0.0
      %585 = vmatpush.msra.mxu0 0.0
      %586 = vmatpush.msra.mxu0 0.0
      %587 = vmatpush.msra.mxu0 0.0
      %588 = vmatpush.msra.mxu0 0.0
      %589 = vmatpush.msra.mxu0 0.0
      %590 = vmatpush.msra.mxu0 0.0
      %591 = vmatpush.msra.mxu0 0.0
      %592 = vmatpush.msra.mxu0 %v575
      %593 = vmatmul.f32.gmra.mxu0 %v551
      %v594 = vpop.f32.mrf.mxu0
      %v595 = vadd.f32 %v527, %v594
      %596 = vmatmul.f32.gmra.mxu0 %v554
      %v597 = vpop.f32.mrf.mxu0
      %v598 = vadd.f32 %v530, %v597
      %599 = vmatmul.f32.gmra.mxu0 %v557
      %v600 = vpop.f32.mrf.mxu0
      %v601 = vadd.f32 %v533, %v600
      %602 = vmatmul.f32.gmra.mxu0 %v560
      %v603 = vpop.f32.mrf.mxu0
      %v604 = vadd.f32 %v536, %v603
      %605 = vmatmul.f32.gmra.mxu0 %v563
      %v606 = vpop.f32.mrf.mxu0
      %v607 = vadd.f32 %v539, %v606
      %608 = vmatmul.f32.gmra.mxu0 %v566
      %v609 = vpop.f32.mrf.mxu0
      %v610 = vadd.f32 %v542, %v609
      %611 = vmatmul.f32.gmra.mxu0 %v569
      %v612 = vpop.f32.mrf.mxu0
      %v613 = vadd.f32 %v545, %v612
      %614 = vmatmul.f32.gmra.mxu0 %v572
      %v615 = vpop.f32.mrf.mxu0
      %v616 = vadd.f32 %v548, %v615
      %617 = vdwg.mxu0
      %vm626 = vcmask 1046528
      %v627 = vrot.slane %v420, 1
      %v628 = vrot.slane %v421, 1
      %v629 = vsel %vm626, %v627, %v628
      %v630 = vrot.slane %v422, 1
      %v631 = vrot.slane %v423, 1
      %v632 = vsel %vm626, %v630, %v631
      %v633 = vrot.slane %v424, 1
      %v634 = vrot.slane %v425, 1
      %v635 = vsel %vm626, %v633, %v634
      %v636 = vrot.slane %v426, 1
      %v637 = vrot.slane %v427, 1
      %v638 = vsel %vm626, %v636, %v637
      %v639 = vrot.slane %v428, 1
      %v640 = vrot.slane %v429, 1
      %v641 = vsel %vm626, %v639, %v640
      %v642 = vrot.slane %v430, 1
      %v643 = vrot.slane %v431, 1
      %v644 = vsel %vm626, %v642, %v643
      %v645 = vrot.slane %v432, 1
      %v646 = vrot.slane %v433, 1
      %v647 = vsel %vm626, %v645, %v646
      %v648 = vrot.slane %v434, 1
      %v649 = vrot.slane %v435, 1
      %v650 = vsel %vm626, %v648, %v649
      %v651 = vsel %vm480, %v629, 0
      %v653 = vsel %vm480, %v632, 0
      %v655 = vsel %vm480, %v635, 0
      %v657 = vsel %vm480, %v638, 0
      %v659 = vsel %vm480, %v641, 0
      %v661 = vsel %vm480, %v644, 0
      %v663 = vsel %vm480, %v647, 0
      %v665 = vsel %vm480, %v650, 0
      %v668 = vsel %vm505, %v473, 0
      %670 = vmatpush.msra.mxu0 0.0
      %671 = vmatpush.msra.mxu0 0.0
      %672 = vmatpush.msra.mxu0 0.0
      %673 = vmatpush.msra.mxu0 0.0
      %674 = vmatpush.msra.mxu0 0.0
      %675 = vmatpush.msra.mxu0 0.0
      %676 = vmatpush.msra.mxu0 0.0
      %677 = vmatpush.msra.mxu0 0.0
      %678 = vmatpush.msra.mxu0 0.0
      %679 = vmatpush.msra.mxu0 0.0
      %680 = vmatpush.msra.mxu0 0.0
      %681 = vmatpush.msra.mxu0 0.0
      %682 = vmatpush.msra.mxu0 0.0
      %683 = vmatpush.msra.mxu0 0.0
      %684 = vmatpush.msra.mxu0 0.0
      %685 = vmatpush.msra.mxu0 %v668
      %686 = vmatmul.f32.gmra.mxu0 %v651
      %v687 = vpop.f32.mrf.mxu0
      %v688 = vadd.f32 0.0, %v687
      %689 = vmatmul.f32.gmra.mxu0 %v653
      %v690 = vpop.f32.mrf.mxu0
      %v691 = vadd.f32 0.0, %v690
      %692 = vmatmul.f32.gmra.mxu0 %v655
      %v693 = vpop.f32.mrf.mxu0
      %v694 = vadd.f32 0.0, %v693
      %695 = vmatmul.f32.gmra.mxu0 %v657
      %v696 = vpop.f32.mrf.mxu0
      %v697 = vadd.f32 0.0, %v696
      %698 = vmatmul.f32.gmra.mxu0 %v659
      %v699 = vpop.f32.mrf.mxu0
      %v700 = vadd.f32 0.0, %v699
      %701 = vmatmul.f32.gmra.mxu0 %v661
      %v702 = vpop.f32.mrf.mxu0
      %v703 = vadd.f32 0.0, %v702
      %704 = vmatmul.f32.gmra.mxu0 %v663
      %v705 = vpop.f32.mrf.mxu0
      %v706 = vadd.f32 0.0, %v705
      %707 = vmatmul.f32.gmra.mxu0 %v665
      %v708 = vpop.f32.mrf.mxu0
      %v709 = vadd.f32 0.0, %v708
      %710 = vdwg.mxu0
      %v711 = vadd.f32 %v595, %v688
      %v712 = vadd.f32 %v598, %v691
      %v713 = vadd.f32 %v601, %v694
      %v714 = vadd.f32 %v604, %v697
      %v715 = vadd.f32 %v607, %v700
      %v716 = vadd.f32 %v610, %v703
      %v717 = vadd.f32 %v613, %v706
      %v718 = vadd.f32 %v616, %v709
      %v720 = vsel %vm480, %v447, 0
      %v723 = vsel %vm480, %v449, 0
      %v726 = vsel %vm480, %v451, 0
      %v729 = vsel %vm480, %v453, 0
      %v732 = vsel %vm480, %v455, 0
      %v735 = vsel %vm480, %v457, 0
      %v738 = vsel %vm480, %v459, 0
      %v741 = vsel %vm480, %v461, 0
      %v744 = vsel %vm505, %v474, 0
      %746 = vmatpush.msra.mxu0 0.0
      %747 = vmatpush.msra.mxu0 0.0
      %748 = vmatpush.msra.mxu0 0.0
      %749 = vmatpush.msra.mxu0 0.0
      %750 = vmatpush.msra.mxu0 0.0
      %751 = vmatpush.msra.mxu0 0.0
      %752 = vmatpush.msra.mxu0 0.0
      %753 = vmatpush.msra.mxu0 0.0
      %754 = vmatpush.msra.mxu0 0.0
      %755 = vmatpush.msra.mxu0 0.0
      %756 = vmatpush.msra.mxu0 0.0
      %757 = vmatpush.msra.mxu0 0.0
      %758 = vmatpush.msra.mxu0 0.0
      %759 = vmatpush.msra.mxu0 0.0
      %760 = vmatpush.msra.mxu0 0.0
      %761 = vmatpush.msra.mxu0 %v744
      %762 = vmatmul.f32.gmra.mxu0 %v720
      %v763 = vpop.f32.mrf.mxu0
      %v764 = vadd.f32 0.0, %v763
      %765 = vmatmul.f32.gmra.mxu0 %v723
      %v766 = vpop.f32.mrf.mxu0
      %v767 = vadd.f32 0.0, %v766
      %768 = vmatmul.f32.gmra.mxu0 %v726
      %v769 = vpop.f32.mrf.mxu0
      %v770 = vadd.f32 0.0, %v769
      %771 = vmatmul.f32.gmra.mxu0 %v729
      %v772 = vpop.f32.mrf.mxu0
      %v773 = vadd.f32 0.0, %v772
      %774 = vmatmul.f32.gmra.mxu0 %v732
      %v775 = vpop.f32.mrf.mxu0
      %v776 = vadd.f32 0.0, %v775
      %777 = vmatmul.f32.gmra.mxu0 %v735
      %v778 = vpop.f32.mrf.mxu0
      %v779 = vadd.f32 0.0, %v778
      %780 = vmatmul.f32.gmra.mxu0 %v738
      %v781 = vpop.f32.mrf.mxu0
      %v782 = vadd.f32 0.0, %v781
      %783 = vmatmul.f32.gmra.mxu0 %v741
      %v784 = vpop.f32.mrf.mxu0
      %v785 = vadd.f32 0.0, %v784
      %786 = vdwg.mxu0
      %v787 = vadd.f32 %v711, %v764
      %v788 = vadd.f32 %v712, %v767
      %v789 = vadd.f32 %v713, %v770
      %v790 = vadd.f32 %v714, %v773
      %v791 = vadd.f32 %v715, %v776
      %v792 = vadd.f32 %v716, %v779
      %v793 = vadd.f32 %v717, %v782
      %v794 = vadd.f32 %v718, %v785
      %v796 = vsel %vm480, %v463, 0
      %v799 = vsel %vm480, %v464, 0
      %v802 = vsel %vm480, %v465, 0
      %v805 = vsel %vm480, %v466, 0
      %v808 = vsel %vm480, %v467, 0
      %v811 = vsel %vm480, %v468, 0
      %v814 = vsel %vm480, %v469, 0
      %v817 = vsel %vm480, %v470, 0
      %v820 = vsel %vm505, %v475, 0
      %822 = vmatpush.msra.mxu0 0.0
      %823 = vmatpush.msra.mxu0 0.0
      %824 = vmatpush.msra.mxu0 0.0
      %825 = vmatpush.msra.mxu0 0.0
      %826 = vmatpush.msra.mxu0 0.0
      %827 = vmatpush.msra.mxu0 0.0
      %828 = vmatpush.msra.mxu0 0.0
      %829 = vmatpush.msra.mxu0 0.0
      %830 = vmatpush.msra.mxu0 0.0
      %831 = vmatpush.msra.mxu0 0.0
      %832 = vmatpush.msra.mxu0 0.0
      %833 = vmatpush.msra.mxu0 0.0
      %834 = vmatpush.msra.mxu0 0.0
      %835 = vmatpush.msra.mxu0 0.0
      %836 = vmatpush.msra.mxu0 0.0
      %837 = vmatpush.msra.mxu0 %v820
      %838 = vmatmul.f32.gmra.mxu0 %v796
      %v839 = vpop.f32.mrf.mxu0
      %v840 = vadd.f32 0.0, %v839
      %841 = vmatmul.f32.gmra.mxu0 %v799
      %v842 = vpop.f32.mrf.mxu0
      %v843 = vadd.f32 0.0, %v842
      %844 = vmatmul.f32.gmra.mxu0 %v802
      %v845 = vpop.f32.mrf.mxu0
      %v846 = vadd.f32 0.0, %v845
      %847 = vmatmul.f32.gmra.mxu0 %v805
      %v848 = vpop.f32.mrf.mxu0
      %v849 = vadd.f32 0.0, %v848
      %850 = vmatmul.f32.gmra.mxu0 %v808
      %v851 = vpop.f32.mrf.mxu0
      %v852 = vadd.f32 0.0, %v851
      %853 = vmatmul.f32.gmra.mxu0 %v811
      %v854 = vpop.f32.mrf.mxu0
      %v855 = vadd.f32 0.0, %v854
      %856 = vmatmul.f32.gmra.mxu0 %v814
      %v857 = vpop.f32.mrf.mxu0
      %v858 = vadd.f32 0.0, %v857
      %859 = vmatmul.f32.gmra.mxu0 %v817
      %v860 = vpop.f32.mrf.mxu0
      %v861 = vadd.f32 0.0, %v860
      %862 = vdwg.mxu0
      %v863 = vadd.f32 %v787, %v840
      %v864 = vadd.f32 %v788, %v843
      %v865 = vadd.f32 %v789, %v846
      %v866 = vadd.f32 %v790, %v849
      %v867 = vadd.f32 %v791, %v852
      %v868 = vadd.f32 %v792, %v855
      %v869 = vadd.f32 %v793, %v858
      %v870 = vadd.f32 %v794, %v861
      %v879 = vrot.slane %v447, 1
      %v880 = vrot.slane %v448, 1
      %v881 = vsel %vm626, %v879, %v880
      %v882 = vrot.slane %v449, 1
      %v883 = vrot.slane %v450, 1
      %v884 = vsel %vm626, %v882, %v883
      %v885 = vrot.slane %v451, 1
      %v886 = vrot.slane %v452, 1
      %v887 = vsel %vm626, %v885, %v886
      %v888 = vrot.slane %v453, 1
      %v889 = vrot.slane %v454, 1
      %v890 = vsel %vm626, %v888, %v889
      %v891 = vrot.slane %v455, 1
      %v892 = vrot.slane %v456, 1
      %v893 = vsel %vm626, %v891, %v892
      %v894 = vrot.slane %v457, 1
      %v895 = vrot.slane %v458, 1
      %v896 = vsel %vm626, %v894, %v895
      %v897 = vrot.slane %v459, 1
      %v898 = vrot.slane %v460, 1
      %v899 = vsel %vm626, %v897, %v898
      %v900 = vrot.slane %v461, 1
      %v901 = vrot.slane %v462, 1
      %v902 = vsel %vm626, %v900, %v901
      %v903 = vsel %vm480, %v881, 0
      %v905 = vsel %vm480, %v884, 0
      %v907 = vsel %vm480, %v887, 0
      %v909 = vsel %vm480, %v890, 0
      %v911 = vsel %vm480, %v893, 0
      %v913 = vsel %vm480, %v896, 0
      %v915 = vsel %vm480, %v899, 0
      %v917 = vsel %vm480, %v902, 0
      %v920 = vsel %vm505, %v476, 0
      %922 = vmatpush.msra.mxu0 0.0
      %923 = vmatpush.msra.mxu0 0.0
      %924 = vmatpush.msra.mxu0 0.0
      %925 = vmatpush.msra.mxu0 0.0
      %926 = vmatpush.msra.mxu0 0.0
      %927 = vmatpush.msra.mxu0 0.0
      %928 = vmatpush.msra.mxu0 0.0
      %929 = vmatpush.msra.mxu0 0.0
      %930 = vmatpush.msra.mxu0 0.0
      %931 = vmatpush.msra.mxu0 0.0
      %932 = vmatpush.msra.mxu0 0.0
      %933 = vmatpush.msra.mxu0 0.0
      %934 = vmatpush.msra.mxu0 0.0
      %935 = vmatpush.msra.mxu0 0.0
      %936 = vmatpush.msra.mxu0 0.0
      %937 = vmatpush.msra.mxu0 %v920
      %938 = vmatmul.f32.gmra.mxu0 %v903
      %v939 = vpop.f32.mrf.mxu0
      %v940 = vadd.f32 0.0, %v939
      %941 = vmatmul.f32.gmra.mxu0 %v905
      %v942 = vpop.f32.mrf.mxu0
      %v943 = vadd.f32 0.0, %v942
      %944 = vmatmul.f32.gmra.mxu0 %v907
      %v945 = vpop.f32.mrf.mxu0
      %v946 = vadd.f32 0.0, %v945
      %947 = vmatmul.f32.gmra.mxu0 %v909
      %v948 = vpop.f32.mrf.mxu0
      %v949 = vadd.f32 0.0, %v948
      %950 = vmatmul.f32.gmra.mxu0 %v911
      %v951 = vpop.f32.mrf.mxu0
      %v952 = vadd.f32 0.0, %v951
      %953 = vmatmul.f32.gmra.mxu0 %v913
      %v954 = vpop.f32.mrf.mxu0
      %v955 = vadd.f32 0.0, %v954
      %956 = vmatmul.f32.gmra.mxu0 %v915
      %v957 = vpop.f32.mrf.mxu0
      %v958 = vadd.f32 0.0, %v957
      %959 = vmatmul.f32.gmra.mxu0 %v917
      %v960 = vpop.f32.mrf.mxu0
      %v961 = vadd.f32 0.0, %v960
      %962 = vdwg.mxu0
      %v963 = vadd.f32 %v863, %v940
      %v964 = vadd.f32 %v864, %v943
      %v965 = vadd.f32 %v865, %v946
      %v966 = vadd.f32 %v866, %v949
      %v967 = vadd.f32 %v867, %v952
      %v968 = vadd.f32 %v868, %v955
      %v969 = vadd.f32 %v869, %v958
      %v970 = vadd.f32 %v870, %v961
      %v972 = vsel %vm480, %v436, 0
      %v975 = vsel %vm505, %v477, 0
      %977 = vmatpush.msra.mxu0 0.0
      %978 = vmatpush.msra.mxu0 0.0
      %979 = vmatpush.msra.mxu0 0.0
      %980 = vmatpush.msra.mxu0 0.0
      %981 = vmatpush.msra.mxu0 0.0
      %982 = vmatpush.msra.mxu0 0.0
      %983 = vmatpush.msra.mxu0 0.0
      %984 = vmatpush.msra.mxu0 0.0
      %985 = vmatpush.msra.mxu0 0.0
      %986 = vmatpush.msra.mxu0 0.0
      %987 = vmatpush.msra.mxu0 0.0
      %988 = vmatpush.msra.mxu0 0.0
      %989 = vmatpush.msra.mxu0 0.0
      %990 = vmatpush.msra.mxu0 0.0
      %991 = vmatpush.msra.mxu0 0.0
      %992 = vmatpush.msra.mxu0 %v975
      %993 = vmatmul.f32.gmra.mxu0 %v554
      %v994 = vpop.f32.mrf.mxu0
      %v995 = vadd.f32 0.0, %v994
      %996 = vmatmul.f32.gmra.mxu0 %v557
      %v997 = vpop.f32.mrf.mxu0
      %v998 = vadd.f32 0.0, %v997
      %999 = vmatmul.f32.gmra.mxu0 %v560
      %v1000 = vpop.f32.mrf.mxu0
      %v1001 = vadd.f32 0.0, %v1000
      %1002 = vmatmul.f32.gmra.mxu0 %v563
      %v1003 = vpop.f32.mrf.mxu0
      %v1004 = vadd.f32 0.0, %v1003
      %1005 = vmatmul.f32.gmra.mxu0 %v566
      %v1006 = vpop.f32.mrf.mxu0
      %v1007 = vadd.f32 0.0, %v1006
      %1008 = vmatmul.f32.gmra.mxu0 %v569
      %v1009 = vpop.f32.mrf.mxu0
      %v1010 = vadd.f32 0.0, %v1009
      %1011 = vmatmul.f32.gmra.mxu0 %v572
      %v1012 = vpop.f32.mrf.mxu0
      %v1013 = vadd.f32 0.0, %v1012
      %1014 = vmatmul.f32.gmra.mxu0 %v972
      %v1015 = vpop.f32.mrf.mxu0
      %v1016 = vadd.f32 0.0, %v1015
      %1017 = vdwg.mxu0
      %v1018 = vadd.f32 %v963, %v995
      %v1019 = vadd.f32 %v964, %v998
      %v1020 = vadd.f32 %v965, %v1001
      %v1021 = vadd.f32 %v966, %v1004
      %v1022 = vadd.f32 %v967, %v1007
      %v1023 = vadd.f32 %v968, %v1010
      %v1024 = vadd.f32 %v969, %v1013
      %v1025 = vadd.f32 %v970, %v1016
      %v1027 = vsel %vm480, %v446, 0
      %v1030 = vsel %vm505, %v478, 0
      %1032 = vmatpush.msra.mxu0 0.0
      %1033 = vmatpush.msra.mxu0 0.0
      %1034 = vmatpush.msra.mxu0 0.0
      %1035 = vmatpush.msra.mxu0 0.0
      %1036 = vmatpush.msra.mxu0 0.0
      %1037 = vmatpush.msra.mxu0 0.0
      %1038 = vmatpush.msra.mxu0 0.0
      %1039 = vmatpush.msra.mxu0 0.0
      %1040 = vmatpush.msra.mxu0 0.0
      %1041 = vmatpush.msra.mxu0 0.0
      %1042 = vmatpush.msra.mxu0 0.0
      %1043 = vmatpush.msra.mxu0 0.0
      %1044 = vmatpush.msra.mxu0 0.0
      %1045 = vmatpush.msra.mxu0 0.0
      %1046 = vmatpush.msra.mxu0 0.0
      %1047 = vmatpush.msra.mxu0 %v1030
      %1048 = vmatmul.f32.gmra.mxu0 %v485
      %v1049 = vpop.f32.mrf.mxu0
      %v1050 = vadd.f32 0.0, %v1049
      %1051 = vmatmul.f32.gmra.mxu0 %v488
      %v1052 = vpop.f32.mrf.mxu0
      %v1053 = vadd.f32 0.0, %v1052
      %1054 = vmatmul.f32.gmra.mxu0 %v491
      %v1055 = vpop.f32.mrf.mxu0
      %v1056 = vadd.f32 0.0, %v1055
      %1057 = vmatmul.f32.gmra.mxu0 %v494
      %v1058 = vpop.f32.mrf.mxu0
      %v1059 = vadd.f32 0.0, %v1058
      %1060 = vmatmul.f32.gmra.mxu0 %v497
      %v1061 = vpop.f32.mrf.mxu0
      %v1062 = vadd.f32 0.0, %v1061
      %1063 = vmatmul.f32.gmra.mxu0 %v500
      %v1064 = vpop.f32.mrf.mxu0
      %v1065 = vadd.f32 0.0, %v1064
      %1066 = vmatmul.f32.gmra.mxu0 %v503
      %v1067 = vpop.f32.mrf.mxu0
      %v1068 = vadd.f32 0.0, %v1067
      %1069 = vmatmul.f32.gmra.mxu0 %v1027
      %v1070 = vpop.f32.mrf.mxu0
      %v1071 = vadd.f32 0.0, %v1070
      %1072 = vdwg.mxu0
      %v1073 = vadd.f32 %v1018, %v1050
      %v1074 = vadd.f32 %v1019, %v1053
      %v1075 = vadd.f32 %v1020, %v1056
      %v1076 = vadd.f32 %v1021, %v1059
      %v1077 = vadd.f32 %v1022, %v1062
      %v1078 = vadd.f32 %v1023, %v1065
      %v1079 = vadd.f32 %v1024, %v1068
      %v1080 = vadd.f32 %v1025, %v1071
      %v1082 = vrot.slane %v436, 1
      %v1083 = vrot.slane %v437, 1
      %v1084 = vsel %vm626, %v1082, %v1083
      %v1085 = vsel %vm480, %v1084, 0
      %v1088 = vsel %vm505, %v479, 0
      %1090 = vmatpush.msra.mxu0 0.0
      %1091 = vmatpush.msra.mxu0 0.0
      %1092 = vmatpush.msra.mxu0 0.0
      %1093 = vmatpush.msra.mxu0 0.0
      %1094 = vmatpush.msra.mxu0 0.0
      %1095 = vmatpush.msra.mxu0 0.0
      %1096 = vmatpush.msra.mxu0 0.0
      %1097 = vmatpush.msra.mxu0 0.0
      %1098 = vmatpush.msra.mxu0 0.0
      %1099 = vmatpush.msra.mxu0 0.0
      %1100 = vmatpush.msra.mxu0 0.0
      %1101 = vmatpush.msra.mxu0 0.0
      %1102 = vmatpush.msra.mxu0 0.0
      %1103 = vmatpush.msra.mxu0 0.0
      %1104 = vmatpush.msra.mxu0 0.0
      %1105 = vmatpush.msra.mxu0 %v1088
      %1106 = vmatmul.f32.gmra.mxu0 %v653
      %v1107 = vpop.f32.mrf.mxu0
      %v1108 = vadd.f32 0.0, %v1107
      %1109 = vmatmul.f32.gmra.mxu0 %v655
      %v1110 = vpop.f32.mrf.mxu0
      %v1111 = vadd.f32 0.0, %v1110
      %1112 = vmatmul.f32.gmra.mxu0 %v657
      %v1113 = vpop.f32.mrf.mxu0
      %v1114 = vadd.f32 0.0, %v1113
      %1115 = vmatmul.f32.gmra.mxu0 %v659
      %v1116 = vpop.f32.mrf.mxu0
      %v1117 = vadd.f32 0.0, %v1116
      %1118 = vmatmul.f32.gmra.mxu0 %v661
      %v1119 = vpop.f32.mrf.mxu0
      %v1120 = vadd.f32 0.0, %v1119
      %1121 = vmatmul.f32.gmra.mxu0 %v663
      %v1122 = vpop.f32.mrf.mxu0
      %v1123 = vadd.f32 0.0, %v1122
      %1124 = vmatmul.f32.gmra.mxu0 %v665
      %v1125 = vpop.f32.mrf.mxu0
      %v1126 = vadd.f32 0.0, %v1125
      %1127 = vmatmul.f32.gmra.mxu0 %v1085
      %v1128 = vpop.f32.mrf.mxu0
      %v1129 = vadd.f32 0.0, %v1128
      %1130 = vdwg.mxu0
      %v1131 = vadd.f32 %v1073, %v1108
      %v1132 = vadd.f32 %v1074, %v1111
      %v1133 = vadd.f32 %v1075, %v1114
      %v1134 = vadd.f32 %v1076, %v1117
      %v1135 = vadd.f32 %v1077, %v1120
      %v1136 = vadd.f32 %v1078, %v1123
      %v1137 = vadd.f32 %v1079, %v1126
      %v1138 = vadd.f32 %v1080, %v1129
      %v1139 = vld [vmem:[%s5] sm:$0x1]
      %v1141 = vperm.slane %v1139, 0
      %v1143 = vadd.f32 %v1131, %v1141
      %v1144 = vadd.f32 %v1132, %v1141
      %v1145 = vadd.f32 %v1133, %v1141
      %v1146 = vadd.f32 %v1134, %v1141
      %v1147 = vadd.f32 %v1135, %v1141
      %v1148 = vadd.f32 %v1136, %v1141
      %v1149 = vadd.f32 %v1137, %v1141
      %v1150 = vadd.f32 %v1138, %v1141
      %v1151 = vmax.f32 %v1143, 0.0
      %v1152 = vmax.f32 %v1144, 0.0
      %v1153 = vmax.f32 %v1145, 0.0
      %v1154 = vmax.f32 %v1146, 0.0
      %v1155 = vmax.f32 %v1147, 0.0
      %v1156 = vmax.f32 %v1148, 0.0
      %v1157 = vmax.f32 %v1149, 0.0
      %v1158 = vmax.f32 %v1150, 0.0
      %vm1159 = vcmask 64512
      %1160 = vst.msk [vmem:[#allocation2] sm:$0xff] %vm1159, 0.0
      %vm1161 = vcmask 57344
      %1162 = vst.msk [vmem:[#allocation2 + $0x8] sm:$0x1] %vm1161, 0.0
      %1163 = vst.msk [vmem:[#allocation2 + $0x10] sm:$0xff] %vm1159, 0.0
      %1164 = vst.msk [vmem:[#allocation2 + $0x18] sm:$0x1] %vm1161, 0.0
      %1165 = vst.msk [vmem:[#allocation2 + $0x20] sm:$0xff] %vm1159, 0.0
      %1166 = vst.msk [vmem:[#allocation2 + $0x28] sm:$0x1] %vm1161, 0.0
      %1167 = vst.msk [vmem:[#allocation2 + $0x30] sm:$0xff] %vm1159, 0.0
      %1168 = vst.msk [vmem:[#allocation2 + $0x38] sm:$0x1] %vm1161, 0.0
      %1169 = vst.msk [vmem:[#allocation2 + $0x40] sm:$0xff] %vm1159, 0.0
      %1170 = vst.msk [vmem:[#allocation2 + $0x48] sm:$0x1] %vm1161, 0.0
      %1171 = vst.msk [vmem:[#allocation2 + $0x50] sm:$0xff] %vm1159, 0.0
      %1172 = vst.msk [vmem:[#allocation2 + $0x58] sm:$0x1] %vm1161, 0.0
      %1173 = vst.msk [vmem:[#allocation2 + $0x60] sm:$0xff] %vm1159, 0.0
      %1174 = vst.msk [vmem:[#allocation2 + $0x68] sm:$0x1] %vm1161, 0.0
      %1175 = vst.msk [vmem:[#allocation2 + $0x70] sm:$0xff] %vm1159, 0.0
      %1176 = vst.msk [vmem:[#allocation2 + $0x78] sm:$0x1] %vm1161, 0.0
      %1177 = vst.msk [vmem:[#allocation2 + $0x80] sm:$0xff] %vm1159, 0.0
      %1178 = vst.msk [vmem:[#allocation2 + $0x88] sm:$0x1] %vm1161, 0.0
      %1179 = vst.msk [vmem:[#allocation2] sm:$0xff] %vm1159, %v1151
      %1180 = vst.msk [vmem:[#allocation2 + $0x10] sm:$0xff] %vm1159, %v1152
      %1181 = vst.msk [vmem:[#allocation2 + $0x20] sm:$0xff] %vm1159, %v1153
      %1182 = vst.msk [vmem:[#allocation2 + $0x30] sm:$0xff] %vm1159, %v1154
      %1183 = vst.msk [vmem:[#allocation2 + $0x40] sm:$0xff] %vm1159, %v1155
      %1184 = vst.msk [vmem:[#allocation2 + $0x50] sm:$0xff] %vm1159, %v1156
      %1185 = vst.msk [vmem:[#allocation2 + $0x60] sm:$0xff] %vm1159, %v1157
      %1186 = vst.msk [vmem:[#allocation2 + $0x70] sm:$0xff] %vm1159, %v1158
      %v1187 = vld [vmem:[#allocation2] sm:$0xff]
      %v1188 = vld [vmem:[#allocation2 + $0x8] sm:$0x1]
      %v1189 = vld [vmem:[#allocation2 + $0x10] sm:$0xff]
      %v1190 = vld [vmem:[#allocation2 + $0x18] sm:$0x1]
      %v1191 = vld [vmem:[#allocation2 + $0x20] sm:$0xff]
      %v1192 = vld [vmem:[#allocation2 + $0x28] sm:$0x1]
      %v1193 = vld [vmem:[#allocation2 + $0x30] sm:$0xff]
      %v1194 = vld [vmem:[#allocation2 + $0x38] sm:$0x1]
      %v1195 = vld [vmem:[#allocation2 + $0x40] sm:$0xff]
      %v1196 = vld [vmem:[#allocation2 + $0x48] sm:$0x1]
      %v1197 = vld [vmem:[#allocation2 + $0x50] sm:$0xff]
      %v1198 = vld [vmem:[#allocation2 + $0x58] sm:$0x1]
      %v1199 = vld [vmem:[#allocation2 + $0x60] sm:$0xff]
      %v1200 = vld [vmem:[#allocation2 + $0x68] sm:$0x1]
      %v1201 = vld [vmem:[#allocation2 + $0x70] sm:$0xff]
      %v1202 = vld [vmem:[#allocation2 + $0x78] sm:$0x1]
      %v1203 = vld [vmem:[#allocation2 + $0x80] sm:$0xff]
      %v1204 = vld [vmem:[#allocation2 + $0x88] sm:$0x1]
      %v1205 = vld [vmem:[%s6] sm:$0xff]
      %v1206 = vld [vmem:[%s6 + $0x8] sm:$0xff]
      %v1207 = vld [vmem:[%s6 + $0x10] sm:$0xff]
      %v1208 = vld [vmem:[%s6 + $0x18] sm:$0xff]
      %v1225 = vrot.slane %v1187, 1
      %v1226 = vrot.slane %v1188, 1
      %v1227 = vsel %vm626, %v1225, %v1226
      %v1228 = vrot.slane %v1189, 1
      %v1229 = vrot.slane %v1190, 1
      %v1230 = vsel %vm626, %v1228, %v1229
      %v1231 = vrot.slane %v1191, 1
      %v1232 = vrot.slane %v1192, 1
      %v1233 = vsel %vm626, %v1231, %v1232
      %v1234 = vrot.slane %v1193, 1
      %v1235 = vrot.slane %v1194, 1
      %v1236 = vsel %vm626, %v1234, %v1235
      %v1237 = vrot.slane %v1195, 1
      %v1238 = vrot.slane %v1196, 1
      %v1239 = vsel %vm626, %v1237, %v1238
      %v1240 = vrot.slane %v1197, 1
      %v1241 = vrot.slane %v1198, 1
      %v1242 = vsel %vm626, %v1240, %v1241
      %v1243 = vrot.slane %v1199, 1
      %v1244 = vrot.slane %v1200, 1
      %v1245 = vsel %vm626, %v1243, %v1244
      %v1246 = vrot.slane %v1201, 1
      %v1247 = vrot.slane %v1202, 1
      %v1248 = vsel %vm626, %v1246, %v1247
      %v1249 = vsel %vm1159, %v1227, 0
      %v1251 = vsel %vm1159, %v1230, 0
      %v1253 = vsel %vm1159, %v1233, 0
      %v1255 = vsel %vm1159, %v1236, 0
      %v1257 = vsel %vm1159, %v1239, 0
      %v1259 = vsel %vm1159, %v1242, 0
      %v1261 = vsel %vm1159, %v1245, 0
      %v1263 = vsel %vm1159, %v1248, 0
      %1265 = vmatpush.msra.mxu0 0.0
      %1266 = vmatpush.msra.mxu0 0.0
      %1267 = vmatpush.msra.mxu0 0.0
      %1268 = vmatpush.msra.mxu0 0.0
      %1269 = vmatpush.msra.mxu0 0.0
      %1270 = vmatpush.msra.mxu0 0.0
      %1271 = vmatpush.msra.mxu0 0.0
      %1272 = vmatpush.msra.mxu0 0.0
      %1273 = vmatpush.msra.mxu0 0.0
      %1274 = vmatpush.msra.mxu0 0.0
      %1275 = vmatpush.msra.mxu0 0.0
      %1276 = vmatpush.msra.mxu0 0.0
      %1277 = vmatpush.msra.mxu0 0.0
      %1278 = vmatpush.msra.mxu0 0.0
      %1279 = vmatpush.msra.mxu0 0.0
      %1280 = vmatpush.msra.mxu0 %v1206
      %1281 = vmatmul.f32.gmra.mxu0 %v1249
      %v1282 = vpop.f32.mrf.mxu0
      %v1283 = vadd.f32 0.0, %v1282
      %1284 = vmatmul.f32.gmra.mxu0 %v1251
      %v1285 = vpop.f32.mrf.mxu0
      %v1286 = vadd.f32 0.0, %v1285
      %1287 = vmatmul.f32.gmra.mxu0 %v1253
      %v1288 = vpop.f32.mrf.mxu0
      %v1289 = vadd.f32 0.0, %v1288
      %1290 = vmatmul.f32.gmra.mxu0 %v1255
      %v1291 = vpop.f32.mrf.mxu0
      %v1292 = vadd.f32 0.0, %v1291
      %1293 = vmatmul.f32.gmra.mxu0 %v1257
      %v1294 = vpop.f32.mrf.mxu0
      %v1295 = vadd.f32 0.0, %v1294
      %1296 = vmatmul.f32.gmra.mxu0 %v1259
      %v1297 = vpop.f32.mrf.mxu0
      %v1298 = vadd.f32 0.0, %v1297
      %1299 = vmatmul.f32.gmra.mxu0 %v1261
      %v1300 = vpop.f32.mrf.mxu0
      %v1301 = vadd.f32 0.0, %v1300
      %1302 = vmatmul.f32.gmra.mxu0 %v1263
      %v1303 = vpop.f32.mrf.mxu0
      %v1304 = vadd.f32 0.0, %v1303
      %1305 = vdwg.mxu0
      %v1306 = vsel %vm1159, %v1187, 0
      %v1308 = vsel %vm1159, %v1189, 0
      %v1310 = vsel %vm1159, %v1191, 0
      %v1312 = vsel %vm1159, %v1193, 0
      %v1314 = vsel %vm1159, %v1195, 0
      %v1316 = vsel %vm1159, %v1197, 0
      %v1318 = vsel %vm1159, %v1199, 0
      %v1320 = vsel %vm1159, %v1201, 0
      %1322 = vmatpush.msra.mxu0 0.0
      %1323 = vmatpush.msra.mxu0 0.0
      %1324 = vmatpush.msra.mxu0 0.0
      %1325 = vmatpush.msra.mxu0 0.0
      %1326 = vmatpush.msra.mxu0 0.0
      %1327 = vmatpush.msra.mxu0 0.0
      %1328 = vmatpush.msra.mxu0 0.0
      %1329 = vmatpush.msra.mxu0 0.0
      %1330 = vmatpush.msra.mxu0 0.0
      %1331 = vmatpush.msra.mxu0 0.0
      %1332 = vmatpush.msra.mxu0 0.0
      %1333 = vmatpush.msra.mxu0 0.0
      %1334 = vmatpush.msra.mxu0 0.0
      %1335 = vmatpush.msra.mxu0 0.0
      %1336 = vmatpush.msra.mxu0 0.0
      %1337 = vmatpush.msra.mxu0 %v1205
      %1338 = vmatmul.f32.gmra.mxu0 %v1306
      %v1339 = vpop.f32.mrf.mxu0
      %v1340 = vadd.f32 %v1283, %v1339
      %1341 = vmatmul.f32.gmra.mxu0 %v1308
      %v1342 = vpop.f32.mrf.mxu0
      %v1343 = vadd.f32 %v1286, %v1342
      %1344 = vmatmul.f32.gmra.mxu0 %v1310
      %v1345 = vpop.f32.mrf.mxu0
      %v1346 = vadd.f32 %v1289, %v1345
      %1347 = vmatmul.f32.gmra.mxu0 %v1312
      %v1348 = vpop.f32.mrf.mxu0
      %v1349 = vadd.f32 %v1292, %v1348
      %1350 = vmatmul.f32.gmra.mxu0 %v1314
      %v1351 = vpop.f32.mrf.mxu0
      %v1352 = vadd.f32 %v1295, %v1351
      %1353 = vmatmul.f32.gmra.mxu0 %v1316
      %v1354 = vpop.f32.mrf.mxu0
      %v1355 = vadd.f32 %v1298, %v1354
      %1356 = vmatmul.f32.gmra.mxu0 %v1318
      %v1357 = vpop.f32.mrf.mxu0
      %v1358 = vadd.f32 %v1301, %v1357
      %1359 = vmatmul.f32.gmra.mxu0 %v1320
      %v1360 = vpop.f32.mrf.mxu0
      %v1361 = vadd.f32 %v1304, %v1360
      %1362 = vdwg.mxu0
      %v1364 = vsel %vm1159, %v1203, 0
      %1366 = vmatpush.msra.mxu0 0.0
      %1367 = vmatpush.msra.mxu0 0.0
      %1368 = vmatpush.msra.mxu0 0.0
      %1369 = vmatpush.msra.mxu0 0.0
      %1370 = vmatpush.msra.mxu0 0.0
      %1371 = vmatpush.msra.mxu0 0.0
      %1372 = vmatpush.msra.mxu0 0.0
      %1373 = vmatpush.msra.mxu0 0.0
      %1374 = vmatpush.msra.mxu0 0.0
      %1375 = vmatpush.msra.mxu0 0.0
      %1376 = vmatpush.msra.mxu0 0.0
      %1377 = vmatpush.msra.mxu0 0.0
      %1378 = vmatpush.msra.mxu0 0.0
      %1379 = vmatpush.msra.mxu0 0.0
      %1380 = vmatpush.msra.mxu0 0.0
      %1381 = vmatpush.msra.mxu0 %v1207
      %1382 = vmatmul.f32.gmra.mxu0 %v1308
      %v1383 = vpop.f32.mrf.mxu0
      %v1384 = vadd.f32 0.0, %v1383
      %1385 = vmatmul.f32.gmra.mxu0 %v1310
      %v1386 = vpop.f32.mrf.mxu0
      %v1387 = vadd.f32 0.0, %v1386
      %1388 = vmatmul.f32.gmra.mxu0 %v1312
      %v1389 = vpop.f32.mrf.mxu0
      %v1390 = vadd.f32 0.0, %v1389
      %1391 = vmatmul.f32.gmra.mxu0 %v1314
      %v1392 = vpop.f32.mrf.mxu0
      %v1393 = vadd.f32 0.0, %v1392
      %1394 = vmatmul.f32.gmra.mxu0 %v1316
      %v1395 = vpop.f32.mrf.mxu0
      %v1396 = vadd.f32 0.0, %v1395
      %1397 = vmatmul.f32.gmra.mxu0 %v1318
      %v1398 = vpop.f32.mrf.mxu0
      %v1399 = vadd.f32 0.0, %v1398
      %1400 = vmatmul.f32.gmra.mxu0 %v1320
      %v1401 = vpop.f32.mrf.mxu0
      %v1402 = vadd.f32 0.0, %v1401
      %1403 = vmatmul.f32.gmra.mxu0 %v1364
      %v1404 = vpop.f32.mrf.mxu0
      %v1405 = vadd.f32 0.0, %v1404
      %1406 = vdwg.mxu0
      %v1407 = vadd.f32 %v1340, %v1384
      %v1408 = vadd.f32 %v1343, %v1387
      %v1409 = vadd.f32 %v1346, %v1390
      %v1410 = vadd.f32 %v1349, %v1393
      %v1411 = vadd.f32 %v1352, %v1396
      %v1412 = vadd.f32 %v1355, %v1399
      %v1413 = vadd.f32 %v1358, %v1402
      %v1414 = vadd.f32 %v1361, %v1405
      %v1416 = vrot.slane %v1203, 1
      %v1417 = vrot.slane %v1204, 1
      %v1418 = vsel %vm626, %v1416, %v1417
      %v1419 = vsel %vm1159, %v1418, 0
      %1421 = vmatpush.msra.mxu0 0.0
      %1422 = vmatpush.msra.mxu0 0.0
      %1423 = vmatpush.msra.mxu0 0.0
      %1424 = vmatpush.msra.mxu0 0.0
      %1425 = vmatpush.msra.mxu0 0.0
      %1426 = vmatpush.msra.mxu0 0.0
      %1427 = vmatpush.msra.mxu0 0.0
      %1428 = vmatpush.msra.mxu0 0.0
      %1429 = vmatpush.msra.mxu0 0.0
      %1430 = vmatpush.msra.mxu0 0.0
      %1431 = vmatpush.msra.mxu0 0.0
      %1432 = vmatpush.msra.mxu0 0.0
      %1433 = vmatpush.msra.mxu0 0.0
      %1434 = vmatpush.msra.mxu0 0.0
      %1435 = vmatpush.msra.mxu0 0.0
      %1436 = vmatpush.msra.mxu0 %v1208
      %1437 = vmatmul.f32.gmra.mxu0 %v1251
      %v1438 = vpop.f32.mrf.mxu0
      %v1439 = vadd.f32 0.0, %v1438
      %1440 = vmatmul.f32.gmra.mxu0 %v1253
      %v1441 = vpop.f32.mrf.mxu0
      %v1442 = vadd.f32 0.0, %v1441
      %1443 = vmatmul.f32.gmra.mxu0 %v1255
      %v1444 = vpop.f32.mrf.mxu0
      %v1445 = vadd.f32 0.0, %v1444
      %1446 = vmatmul.f32.gmra.mxu0 %v1257
      %v1447 = vpop.f32.mrf.mxu0
      %v1448 = vadd.f32 0.0, %v1447
      %1449 = vmatmul.f32.gmra.mxu0 %v1259
      %v1450 = vpop.f32.mrf.mxu0
      %v1451 = vadd.f32 0.0, %v1450
      %1452 = vmatmul.f32.gmra.mxu0 %v1261
      %v1453 = vpop.f32.mrf.mxu0
      %v1454 = vadd.f32 0.0, %v1453
      %1455 = vmatmul.f32.gmra.mxu0 %v1263
      %v1456 = vpop.f32.mrf.mxu0
      %v1457 = vadd.f32 0.0, %v1456
      %1458 = vmatmul.f32.gmra.mxu0 %v1419
      %v1459 = vpop.f32.mrf.mxu0
      %v1460 = vadd.f32 0.0, %v1459
      %1461 = vdwg.mxu0
      %v1462 = vadd.f32 %v1407, %v1439
      %v1463 = vadd.f32 %v1408, %v1442
      %v1464 = vadd.f32 %v1409, %v1445
      %v1465 = vadd.f32 %v1410, %v1448
      %v1466 = vadd.f32 %v1411, %v1451
      %v1467 = vadd.f32 %v1412, %v1454
      %v1468 = vadd.f32 %v1413, %v1457
      %v1469 = vadd.f32 %v1414, %v1460
      %v1470 = vld [vmem:[%s7] sm:$0x1]
      %v1472 = vperm.slane %v1470, 0
      %v1474 = vadd.f32 %v1462, %v1472
      %v1475 = vadd.f32 %v1463, %v1472
      %v1476 = vadd.f32 %v1464, %v1472
      %v1477 = vadd.f32 %v1465, %v1472
      %v1478 = vadd.f32 %v1466, %v1472
      %v1479 = vadd.f32 %v1467, %v1472
      %v1480 = vadd.f32 %v1468, %v1472
      %v1481 = vadd.f32 %v1469, %v1472
      %v1482 = vmax.f32 %v1474, 0.0
      %v1483 = vmax.f32 %v1475, 0.0
      %v1484 = vmax.f32 %v1476, 0.0
      %v1485 = vmax.f32 %v1477, 0.0
      %v1486 = vmax.f32 %v1478, 0.0
      %v1487 = vmax.f32 %v1479, 0.0
      %v1488 = vmax.f32 %v1480, 0.0
      %v1489 = vmax.f32 %v1481, 0.0
      %vm1490 = vcmask 31744
      %1491 = vst.msk [vmem:[#allocation3] sm:$0xff] %vm1490, 0.0
      %vm1492 = vcmask 24576
      %1493 = vst.msk [vmem:[#allocation3 + $0x8] sm:$0x1] %vm1492, 0.0
      %1494 = vst.msk [vmem:[#allocation3 + $0x10] sm:$0xff] %vm1490, 0.0
      %1495 = vst.msk [vmem:[#allocation3 + $0x18] sm:$0x1] %vm1492, 0.0
      %1496 = vst.msk [vmem:[#allocation3 + $0x20] sm:$0xff] %vm1490, 0.0
      %1497 = vst.msk [vmem:[#allocation3 + $0x28] sm:$0x1] %vm1492, 0.0
      %1498 = vst.msk [vmem:[#allocation3 + $0x30] sm:$0xff] %vm1490, 0.0
      %1499 = vst.msk [vmem:[#allocation3 + $0x38] sm:$0x1] %vm1492, 0.0
      %1500 = vst.msk [vmem:[#allocation3 + $0x40] sm:$0xff] %vm1490, 0.0
      %1501 = vst.msk [vmem:[#allocation3 + $0x48] sm:$0x1] %vm1492, 0.0
      %1502 = vst.msk [vmem:[#allocation3 + $0x50] sm:$0xff] %vm1490, 0.0
      %1503 = vst.msk [vmem:[#allocation3 + $0x58] sm:$0x1] %vm1492, 0.0
      %1504 = vst.msk [vmem:[#allocation3 + $0x60] sm:$0xff] %vm1490, 0.0
      %1505 = vst.msk [vmem:[#allocation3 + $0x68] sm:$0x1] %vm1492, 0.0
      %1506 = vst.msk [vmem:[#allocation3 + $0x70] sm:$0xff] %vm1490, 0.0
      %1507 = vst.msk [vmem:[#allocation3 + $0x78] sm:$0x1] %vm1492, 0.0
      %1508 = vst.msk [vmem:[#allocation3 + $0x80] sm:$0xff] %vm1490, 0.0
      %1509 = vst.msk [vmem:[#allocation3 + $0x88] sm:$0x1] %vm1492, 0.0
      %1510 = vst.msk [vmem:[#allocation3] sm:$0xff] %vm1490, %v1482
      %1511 = vst.msk [vmem:[#allocation3 + $0x10] sm:$0xff] %vm1490, %v1483
      %1512 = vst.msk [vmem:[#allocation3 + $0x20] sm:$0xff] %vm1490, %v1484
      %1513 = vst.msk [vmem:[#allocation3 + $0x30] sm:$0xff] %vm1490, %v1485
      %1514 = vst.msk [vmem:[#allocation3 + $0x40] sm:$0xff] %vm1490, %v1486
      %1515 = vst.msk [vmem:[#allocation3 + $0x50] sm:$0xff] %vm1490, %v1487
      %1516 = vst.msk [vmem:[#allocation3 + $0x60] sm:$0xff] %vm1490, %v1488
      %1517 = vst.msk [vmem:[#allocation3 + $0x70] sm:$0xff] %vm1490, %v1489
      %v1518 = vld [vmem:[#allocation3] sm:$0xff]
      %v1519 = vld [vmem:[#allocation3 + $0x8] sm:$0x1]
      %v1520 = vld [vmem:[#allocation3 + $0x10] sm:$0xff]
      %v1521 = vld [vmem:[#allocation3 + $0x18] sm:$0x1]
      %v1522 = vld [vmem:[#allocation3 + $0x20] sm:$0xff]
      %v1523 = vld [vmem:[#allocation3 + $0x28] sm:$0x1]
      %v1524 = vld [vmem:[#allocation3 + $0x30] sm:$0xff]
      %v1525 = vld [vmem:[#allocation3 + $0x38] sm:$0x1]
      %v1526 = vld [vmem:[#allocation3 + $0x40] sm:$0xff]
      %v1527 = vld [vmem:[#allocation3 + $0x48] sm:$0x1]
      %v1528 = vld [vmem:[#allocation3 + $0x50] sm:$0xff]
      %v1529 = vld [vmem:[#allocation3 + $0x58] sm:$0x1]
      %v1530 = vld [vmem:[#allocation3 + $0x60] sm:$0xff]
      %v1531 = vld [vmem:[#allocation3 + $0x68] sm:$0x1]
      %v1532 = vld [vmem:[#allocation3 + $0x70] sm:$0xff]
      %v1533 = vld [vmem:[#allocation3 + $0x78] sm:$0x1]
      %v1534 = vld [vmem:[#allocation3 + $0x80] sm:$0xff]
      %v1535 = vld [vmem:[#allocation3 + $0x88] sm:$0x1]
      %v1536 = vld [vmem:[%s8] sm:$0xf]
      %v1537 = vld [vmem:[%s8 + $0x4] sm:$0xf]
      %v1538 = vld [vmem:[%s8 + $0x8] sm:$0xf]
      %v1539 = vld [vmem:[%s8 + $0xc] sm:$0xf]
      %v1556 = vrot.slane %v1518, 1
      %v1557 = vrot.slane %v1519, 1
      %v1558 = vsel %vm626, %v1556, %v1557
      %v1559 = vrot.slane %v1520, 1
      %v1560 = vrot.slane %v1521, 1
      %v1561 = vsel %vm626, %v1559, %v1560
      %v1562 = vrot.slane %v1522, 1
      %v1563 = vrot.slane %v1523, 1
      %v1564 = vsel %vm626, %v1562, %v1563
      %v1565 = vrot.slane %v1524, 1
      %v1566 = vrot.slane %v1525, 1
      %v1567 = vsel %vm626, %v1565, %v1566
      %v1568 = vrot.slane %v1526, 1
      %v1569 = vrot.slane %v1527, 1
      %v1570 = vsel %vm626, %v1568, %v1569
      %v1571 = vrot.slane %v1528, 1
      %v1572 = vrot.slane %v1529, 1
      %v1573 = vsel %vm626, %v1571, %v1572
      %v1574 = vrot.slane %v1530, 1
      %v1575 = vrot.slane %v1531, 1
      %v1576 = vsel %vm626, %v1574, %v1575
      %v1577 = vrot.slane %v1532, 1
      %v1578 = vrot.slane %v1533, 1
      %v1579 = vsel %vm626, %v1577, %v1578
      %v1580 = vsel %vm1490, %v1558, 0
      %v1582 = vsel %vm1490, %v1561, 0
      %v1584 = vsel %vm1490, %v1564, 0
      %v1586 = vsel %vm1490, %v1567, 0
      %v1588 = vsel %vm1490, %v1570, 0
      %v1590 = vsel %vm1490, %v1573, 0
      %v1592 = vsel %vm1490, %v1576, 0
      %v1594 = vsel %vm1490, %v1579, 0
      %vm1596 = vcmask 1043456
      %v1598 = vsel %vm1596, %v1537, 0
      %1600 = vmatpush.msra.mxu0 0.0
      %1601 = vmatpush.msra.mxu0 0.0
      %1602 = vmatpush.msra.mxu0 0.0
      %1603 = vmatpush.msra.mxu0 0.0
      %1604 = vmatpush.msra.mxu0 0.0
      %1605 = vmatpush.msra.mxu0 0.0
      %1606 = vmatpush.msra.mxu0 0.0
      %1607 = vmatpush.msra.mxu0 0.0
      %1608 = vmatpush.msra.mxu0 0.0
      %1609 = vmatpush.msra.mxu0 0.0
      %1610 = vmatpush.msra.mxu0 0.0
      %1611 = vmatpush.msra.mxu0 0.0
      %1612 = vmatpush.msra.mxu0 0.0
      %1613 = vmatpush.msra.mxu0 0.0
      %1614 = vmatpush.msra.mxu0 0.0
      %1615 = vmatpush.msra.mxu0 %v1598
      %1616 = vmatmul.f32.gmra.mxu0 %v1580
      %v1617 = vpop.f32.mrf.mxu0
      %v1618 = vadd.f32 0.0, %v1617
      %1619 = vmatmul.f32.gmra.mxu0 %v1582
      %v1620 = vpop.f32.mrf.mxu0
      %v1621 = vadd.f32 0.0, %v1620
      %1622 = vmatmul.f32.gmra.mxu0 %v1584
      %v1623 = vpop.f32.mrf.mxu0
      %v1624 = vadd.f32 0.0, %v1623
      %1625 = vmatmul.f32.gmra.mxu0 %v1586
      %v1626 = vpop.f32.mrf.mxu0
      %v1627 = vadd.f32 0.0, %v1626
      %1628 = vmatmul.f32.gmra.mxu0 %v1588
      %v1629 = vpop.f32.mrf.mxu0
      %v1630 = vadd.f32 0.0, %v1629
      %1631 = vmatmul.f32.gmra.mxu0 %v1590
      %v1632 = vpop.f32.mrf.mxu0
      %v1633 = vadd.f32 0.0, %v1632
      %1634 = vmatmul.f32.gmra.mxu0 %v1592
      %v1635 = vpop.f32.mrf.mxu0
      %v1636 = vadd.f32 0.0, %v1635
      %1637 = vmatmul.f32.gmra.mxu0 %v1594
      %v1638 = vpop.f32.mrf.mxu0
      %v1639 = vadd.f32 0.0, %v1638
      %1640 = vdwg.mxu0
      %v1641 = vsel %vm1490, %v1518, 0
      %v1643 = vsel %vm1490, %v1520, 0
      %v1645 = vsel %vm1490, %v1522, 0
      %v1647 = vsel %vm1490, %v1524, 0
      %v1649 = vsel %vm1490, %v1526, 0
      %v1651 = vsel %vm1490, %v1528, 0
      %v1653 = vsel %vm1490, %v1530, 0
      %v1655 = vsel %vm1490, %v1532, 0
      %v1658 = vsel %vm1596, %v1536, 0
      %1660 = vmatpush.msra.mxu0 0.0
      %1661 = vmatpush.msra.mxu0 0.0
      %1662 = vmatpush.msra.mxu0 0.0
      %1663 = vmatpush.msra.mxu0 0.0
      %1664 = vmatpush.msra.mxu0 0.0
      %1665 = vmatpush.msra.mxu0 0.0
      %1666 = vmatpush.msra.mxu0 0.0
      %1667 = vmatpush.msra.mxu0 0.0
      %1668 = vmatpush.msra.mxu0 0.0
      %1669 = vmatpush.msra.mxu0 0.0
      %1670 = vmatpush.msra.mxu0 0.0
      %1671 = vmatpush.msra.mxu0 0.0
      %1672 = vmatpush.msra.mxu0 0.0
      %1673 = vmatpush.msra.mxu0 0.0
      %1674 = vmatpush.msra.mxu0 0.0
      %1675 = vmatpush.msra.mxu0 %v1658
      %1676 = vmatmul.f32.gmra.mxu0 %v1641
      %v1677 = vpop.f32.mrf.mxu0
      %v1678 = vadd.f32 %v1618, %v1677
      %1679 = vmatmul.f32.gmra.mxu0 %v1643
      %v1680 = vpop.f32.mrf.mxu0
      %v1681 = vadd.f32 %v1621, %v1680
      %1682 = vmatmul.f32.gmra.mxu0 %v1645
      %v1683 = vpop.f32.mrf.mxu0
      %v1684 = vadd.f32 %v1624, %v1683
      %1685 = vmatmul.f32.gmra.mxu0 %v1647
      %v1686 = vpop.f32.mrf.mxu0
      %v1687 = vadd.f32 %v1627, %v1686
      %1688 = vmatmul.f32.gmra.mxu0 %v1649
      %v1689 = vpop.f32.mrf.mxu0
      %v1690 = vadd.f32 %v1630, %v1689
      %1691 = vmatmul.f32.gmra.mxu0 %v1651
      %v1692 = vpop.f32.mrf.mxu0
      %v1693 = vadd.f32 %v1633, %v1692
      %1694 = vmatmul.f32.gmra.mxu0 %v1653
      %v1695 = vpop.f32.mrf.mxu0
      %v1696 = vadd.f32 %v1636, %v1695
      %1697 = vmatmul.f32.gmra.mxu0 %v1655
      %v1698 = vpop.f32.mrf.mxu0
      %v1699 = vadd.f32 %v1639, %v1698
      %1700 = vdwg.mxu0
      %v1702 = vsel %vm1490, %v1534, 0
      %v1705 = vsel %vm1596, %v1538, 0
      %1707 = vmatpush.msra.mxu0 0.0
      %1708 = vmatpush.msra.mxu0 0.0
      %1709 = vmatpush.msra.mxu0 0.0
      %1710 = vmatpush.msra.mxu0 0.0
      %1711 = vmatpush.msra.mxu0 0.0
      %1712 = vmatpush.msra.mxu0 0.0
      %1713 = vmatpush.msra.mxu0 0.0
      %1714 = vmatpush.msra.mxu0 0.0
      %1715 = vmatpush.msra.mxu0 0.0
      %1716 = vmatpush.msra.mxu0 0.0
      %1717 = vmatpush.msra.mxu0 0.0
      %1718 = vmatpush.msra.mxu0 0.0
      %1719 = vmatpush.msra.mxu0 0.0
      %1720 = vmatpush.msra.mxu0 0.0
      %1721 = vmatpush.msra.mxu0 0.0
      %1722 = vmatpush.msra.mxu0 %v1705
      %1723 = vmatmul.f32.gmra.mxu0 %v1643
      %v1724 = vpop.f32.mrf.mxu0
      %v1725 = vadd.f32 0.0, %v1724
      %1726 = vmatmul.f32.gmra.mxu0 %v1645
      %v1727 = vpop.f32.mrf.mxu0
      %v1728 = vadd.f32 0.0, %v1727
      %1729 = vmatmul.f32.gmra.mxu0 %v1647
      %v1730 = vpop.f32.mrf.mxu0
      %v1731 = vadd.f32 0.0, %v1730
      %1732 = vmatmul.f32.gmra.mxu0 %v1649
      %v1733 = vpop.f32.mrf.mxu0
      %v1734 = vadd.f32 0.0, %v1733
      %1735 = vmatmul.f32.gmra.mxu0 %v1651
      %v1736 = vpop.f32.mrf.mxu0
      %v1737 = vadd.f32 0.0, %v1736
      %1738 = vmatmul.f32.gmra.mxu0 %v1653
      %v1739 = vpop.f32.mrf.mxu0
      %v1740 = vadd.f32 0.0, %v1739
      %1741 = vmatmul.f32.gmra.mxu0 %v1655
      %v1742 = vpop.f32.mrf.mxu0
      %v1743 = vadd.f32 0.0, %v1742
      %1744 = vmatmul.f32.gmra.mxu0 %v1702
      %v1745 = vpop.f32.mrf.mxu0
      %v1746 = vadd.f32 0.0, %v1745
      %1747 = vdwg.mxu0
      %v1748 = vadd.f32 %v1678, %v1725
      %v1749 = vadd.f32 %v1681, %v1728
      %v1750 = vadd.f32 %v1684, %v1731
      %v1751 = vadd.f32 %v1687, %v1734
      %v1752 = vadd.f32 %v1690, %v1737
      %v1753 = vadd.f32 %v1693, %v1740
      %v1754 = vadd.f32 %v1696, %v1743
      %v1755 = vadd.f32 %v1699, %v1746
      %v1757 = vrot.slane %v1534, 1
      %v1758 = vrot.slane %v1535, 1
      %v1759 = vsel %vm626, %v1757, %v1758
      %v1760 = vsel %vm1490, %v1759, 0
      %v1763 = vsel %vm1596, %v1539, 0
      %1765 = vmatpush.msra.mxu0 0.0
      %1766 = vmatpush.msra.mxu0 0.0
      %1767 = vmatpush.msra.mxu0 0.0
      %1768 = vmatpush.msra.mxu0 0.0
      %1769 = vmatpush.msra.mxu0 0.0
      %1770 = vmatpush.msra.mxu0 0.0
      %1771 = vmatpush.msra.mxu0 0.0
      %1772 = vmatpush.msra.mxu0 0.0
      %1773 = vmatpush.msra.mxu0 0.0
      %1774 = vmatpush.msra.mxu0 0.0
      %1775 = vmatpush.msra.mxu0 0.0
      %1776 = vmatpush.msra.mxu0 0.0
      %1777 = vmatpush.msra.mxu0 0.0
      %1778 = vmatpush.msra.mxu0 0.0
      %1779 = vmatpush.msra.mxu0 0.0
      %1780 = vmatpush.msra.mxu0 %v1763
      %1781 = vmatmul.f32.gmra.mxu0 %v1582
      %v1782 = vpop.f32.mrf.mxu0
      %v1783 = vadd.f32 0.0, %v1782
      %1784 = vmatmul.f32.gmra.mxu0 %v1584
      %v1785 = vpop.f32.mrf.mxu0
      %v1786 = vadd.f32 0.0, %v1785
      %1787 = vmatmul.f32.gmra.mxu0 %v1586
      %v1788 = vpop.f32.mrf.mxu0
      %v1789 = vadd.f32 0.0, %v1788
      %1790 = vmatmul.f32.gmra.mxu0 %v1588
      %v1791 = vpop.f32.mrf.mxu0
      %v1792 = vadd.f32 0.0, %v1791
      %1793 = vmatmul.f32.gmra.mxu0 %v1590
      %v1794 = vpop.f32.mrf.mxu0
      %v1795 = vadd.f32 0.0, %v1794
      %1796 = vmatmul.f32.gmra.mxu0 %v1592
      %v1797 = vpop.f32.mrf.mxu0
      %v1798 = vadd.f32 0.0, %v1797
      %1799 = vmatmul.f32.gmra.mxu0 %v1594
      %v1800 = vpop.f32.mrf.mxu0
      %v1801 = vadd.f32 0.0, %v1800
      %1802 = vmatmul.f32.gmra.mxu0 %v1760
      %v1803 = vpop.f32.mrf.mxu0
      %v1804 = vadd.f32 0.0, %v1803
      %1805 = vdwg.mxu0
      %v1806 = vadd.f32 %v1748, %v1783
      %v1807 = vadd.f32 %v1749, %v1786
      %v1808 = vadd.f32 %v1750, %v1789
      %v1809 = vadd.f32 %v1751, %v1792
      %v1810 = vadd.f32 %v1752, %v1795
      %v1811 = vadd.f32 %v1753, %v1798
      %v1812 = vadd.f32 %v1754, %v1801
      %v1813 = vadd.f32 %v1755, %v1804
      %v1814 = vld [vmem:[%s9] sm:$0x1]
      %v1816 = vperm.slane %v1814, 0
      %v1818 = vadd.f32 %v1806, %v1816
      %v1819 = vadd.f32 %v1807, %v1816
      %v1820 = vadd.f32 %v1808, %v1816
      %v1821 = vadd.f32 %v1809, %v1816
      %v1822 = vadd.f32 %v1810, %v1816
      %v1823 = vadd.f32 %v1811, %v1816
      %v1824 = vadd.f32 %v1812, %v1816
      %v1825 = vadd.f32 %v1813, %v1816
      %v1826 = vmax.f32 %v1818, 0.0
      %v1827 = vmax.f32 %v1819, 0.0
      %v1828 = vmax.f32 %v1820, 0.0
      %v1829 = vmax.f32 %v1821, 0.0
      %v1830 = vmax.f32 %v1822, 0.0
      %v1831 = vmax.f32 %v1823, 0.0
      %v1832 = vmax.f32 %v1824, 0.0
      %v1833 = vmax.f32 %v1825, 0.0
      %v1842 = vmax.f32 %v1187, %v1227
      %v1843 = vmax.f32 %v1189, %v1230
      %v1844 = vmax.f32 %v1191, %v1233
      %v1845 = vmax.f32 %v1193, %v1236
      %v1846 = vmax.f32 %v1195, %v1239
      %v1847 = vmax.f32 %v1197, %v1242
      %v1848 = vmax.f32 %v1199, %v1245
      %v1849 = vmax.f32 %v1201, %v1248
      %v1851 = vmax.f32 %v1203, %v1418
      %v1852 = vmax.f32 %v1842, %v1843
      %v1853 = vmax.f32 %v1843, %v1844
      %v1854 = vmax.f32 %v1844, %v1845
      %v1855 = vmax.f32 %v1845, %v1846
      %v1856 = vmax.f32 %v1846, %v1847
      %v1857 = vmax.f32 %v1847, %v1848
      %v1858 = vmax.f32 %v1848, %v1849
      %v1859 = vmax.f32 %v1849, %v1851
      %vm1860 = vcmask 130048
      %1861 = vst.msk [vmem:[%s419] sm:$0xff] %vm1860, 0.0
      %vm1862 = vcmask 123904
      %1863 = vst.msk [vmem:[%s419 + $0x8] sm:$0x3] %vm1862, 0.0
      %1864 = vst.msk [vmem:[%s419 + $0x10] sm:$0xff] %vm1860, 0.0
      %1865 = vst.msk [vmem:[%s419 + $0x18] sm:$0x3] %vm1862, 0.0
      %1866 = vst.msk [vmem:[%s419 + $0x20] sm:$0xff] %vm1860, 0.0
      %1867 = vst.msk [vmem:[%s419 + $0x28] sm:$0x3] %vm1862, 0.0
      %1868 = vst.msk [vmem:[%s419 + $0x30] sm:$0xff] %vm1860, 0.0
      %1869 = vst.msk [vmem:[%s419 + $0x38] sm:$0x3] %vm1862, 0.0
      %1870 = vst.msk [vmem:[%s419 + $0x40] sm:$0xff] %vm1860, 0.0
      %1871 = vst.msk [vmem:[%s419 + $0x48] sm:$0x3] %vm1862, 0.0
      %1872 = vst.msk [vmem:[%s419 + $0x50] sm:$0xff] %vm1860, 0.0
      %1873 = vst.msk [vmem:[%s419 + $0x58] sm:$0x3] %vm1862, 0.0
      %1874 = vst.msk [vmem:[%s419 + $0x60] sm:$0xff] %vm1860, 0.0
      %1875 = vst.msk [vmem:[%s419 + $0x68] sm:$0x3] %vm1862, 0.0
      %1876 = vst.msk [vmem:[%s419 + $0x70] sm:$0xff] %vm1860, 0.0
      %1877 = vst.msk [vmem:[%s419 + $0x78] sm:$0x3] %vm1862, 0.0
      %1878 = vst.msk [vmem:[%s419 + $0x80] sm:$0xff] %vm1860, 0.0
      %1879 = vst.msk [vmem:[%s419 + $0x88] sm:$0x3] %vm1862, 0.0
      %1880 = vst.msk [vmem:[%s419 + $0x90] sm:$0xff] %vm1860, 0.0
      %1881 = vst.msk [vmem:[%s419 + $0x98] sm:$0x3] %vm1862, 0.0
      %s1882 = scalar_lea.vmem %s419, 16
      %1883 = vst.msk [vmem:[%s1882 + $0x1] sm:$0xff] %vm1159, %v1852
      %1884 = vst.msk [vmem:[%s1882 + $0x11] sm:$0xff] %vm1159, %v1853
      %1885 = vst.msk [vmem:[%s1882 + $0x21] sm:$0xff] %vm1159, %v1854
      %1886 = vst.msk [vmem:[%s1882 + $0x31] sm:$0xff] %vm1159, %v1855
      %1887 = vst.msk [vmem:[%s1882 + $0x41] sm:$0xff] %vm1159, %v1856
      %1888 = vst.msk [vmem:[%s1882 + $0x51] sm:$0xff] %vm1159, %v1857
      %1889 = vst.msk [vmem:[%s1882 + $0x61] sm:$0xff] %vm1159, %v1858
      %1890 = vst.msk [vmem:[%s1882 + $0x71] sm:$0xff] %vm1159, %v1859
      %1899 = vrot.lane.b32.xlu0 %v1826, 8
      %v1900 = vpop.permute.xlu0 %1899
      %1901 = vrot.lane.b32.xlu0 %v1827, 8
      %v1902 = vpop.permute.xlu0 %1901
      %1903 = vrot.lane.b32.xlu0 %v1828, 8
      %v1904 = vpop.permute.xlu0 %1903
      %1905 = vrot.lane.b32.xlu0 %v1829, 8
      %v1906 = vpop.permute.xlu0 %1905
      %1907 = vrot.lane.b32.xlu0 %v1830, 8
      %v1908 = vpop.permute.xlu0 %1907
      %1909 = vrot.lane.b32.xlu0 %v1831, 8
      %v1910 = vpop.permute.xlu0 %1909
      %1911 = vrot.lane.b32.xlu0 %v1832, 8
      %v1912 = vpop.permute.xlu0 %1911
      %1913 = vrot.lane.b32.xlu0 %v1833, 8
      %v1914 = vpop.permute.xlu0 %1913
      %vm1923 = vcmask 130112
      %1924 = vst.msk [vmem:[%s1882 + $0x1] sm:$0xff] %vm1923, %v1900
      %1925 = vst.msk [vmem:[%s1882 + $0x11] sm:$0xff] %vm1923, %v1902
      %1926 = vst.msk [vmem:[%s1882 + $0x21] sm:$0xff] %vm1923, %v1904
      %1927 = vst.msk [vmem:[%s1882 + $0x31] sm:$0xff] %vm1923, %v1906
      %1928 = vst.msk [vmem:[%s1882 + $0x41] sm:$0xff] %vm1923, %v1908
      %1929 = vst.msk [vmem:[%s1882 + $0x51] sm:$0xff] %vm1923, %v1910
      %1930 = vst.msk [vmem:[%s1882 + $0x61] sm:$0xff] %vm1923, %v1912
      %1931 = vst.msk [vmem:[%s1882 + $0x71] sm:$0xff] %vm1923, %v1914
      %p1932 = scmp.lt.s32.totalorder %s21, 1
      %s1933 = scalar_select %p1932, %s21, 1
      %s1934 = smul.addr %s1933, 20
      %s1935 = smul.addr %s1934, 8
      %s1936 = scalar_lea.vmem %s10, %s1935
      // Predicated region
      $region61: #{hgstem_forward.2} parent=59 // pred_check
        %p1937 = pneg %p269
      $region62: #{hgstem_forward.2} parent=59 // pred_check_branch
        %1939 = sbr.rel (%p1937) target = $region64
      $region63: #{hgstem_forward.2} parent=59 // pred_region
        _
      $region64: #{hgstem_forward.2} parent=59 // pred_fallthru
        _
    $region60: #{hgstem_forward.2} parent=5 // pred_fallthru
      _
    %p1940 = scmp.le.s32.totalorder 2, %s16
    // Predicated region
    $region65: #{hgstem_forward.2} parent=5 // pred_check
      %p1941 = pneg %p1940
    $region66: #{hgstem_forward.2} parent=5 // pred_check_branch
      %1943 = sbr.rel (%p1941) target = $region68
    $region67: #{hgstem_forward.2} parent=5 // pred_region
      %s1944 = ssub.s32 %s16, 2
      // Predicated region
      $region69: #{hgstem_forward.2} parent=67 // pred_check
        %p1945 = pneg %p275
      $region70: #{hgstem_forward.2} parent=67 // pred_check_branch
        %1947 = sbr.rel (%p1945) target = $region72
      $region71: #{hgstem_forward.2} parent=67 // pred_region
        %p1948 = scmp.lt.s32.totalorder %s22, 1
        %s1949 = scalar_select %p1948, %s22, 1
        %s1950 = smul.addr %s1949, 20
        %s1951 = smul.addr %s1950, 8
        %s1952 = scalar_lea.vmem %s10, %s1951
      $region72: #{hgstem_forward.2} parent=67 // pred_fallthru
        _
    $region68: #{hgstem_forward.2} parent=5 // pred_fallthru
      _
  $region6: #{hgstem_forward.2} parent=0 // loop_footer
    %s20 = sadd.s32 1, %s16
  $region7: #{hgstem_forward.2} parent=0 // loop_footer_branch
    %15 = sbr.rel target = $region3
  $region8: #{hgstem_forward.2} parent=0 // loop_exit
    _

</llo_original>
